<compile_context>
chip_gen: v6e
topology: v6e:2x2x1
jax: 0.10.0
libtpu: 0.0.40
codegen_flags: <defaults>
</compile_context>

<pallas_src>
import functools
import math

import jax
import jax.numpy as jnp
from jax import lax
from jax.experimental import pallas as pl
from jax.experimental.pallas import tpu as pltpu  # noqa: F401  (kept for TPU-specific extensions)


def _apply_act(y, activation):
    if activation == "relu":
        return jnp.maximum(y, 0.0)
    elif activation == "sigmoid":
        return jax.nn.sigmoid(y)
    raise ValueError(activation)


# ---------------------------------------------------------------------------
# Single fused kernel: conv layers (3x3, pad=1) + act + 2x2 maxpool, then the
# full FC stack.  Whole batch, whole network, one pallas_call, no scratch.
# ---------------------------------------------------------------------------
def _fused_cnn_kernel(*refs, N, H, W, conv_channels, fc_dims, bias_offsets,
                      activation):
    # refs layout: x, conv weight mats..., fc weight mats..., bias vector, out
    n_conv = len(conv_channels) - 1
    n_fc = len(fc_dims) - 1
    x_ref = refs[0]
    conv_w = refs[1:1 + n_conv]                      # (9*c_in, c_out) bf16 each
    fc_w = refs[1 + n_conv:1 + n_conv + n_fc]        # (d_in, d_out) bf16 each
    b_ref = refs[1 + n_conv + n_fc]                  # (1, total_bias) f32
    o_ref = refs[2 + n_conv + n_fc]                  # (N, out_dim) f32

    def bias(i, width):
        off = bias_offsets[i]
        return b_ref[:, off:off + width]             # (1, width) f32

    li = 0
    h, w = H, W
    y = x_ref[...]                                   # (N, H, W, C0) f32
    for ci in range(n_conv):
        c_in, c_out = conv_channels[ci], conv_channels[ci + 1]

        # 1-px zero halo, built in registers (no wrapper pad, no scratch).
        zr = jnp.zeros((N, 1, w, c_in), y.dtype)
        xp = jnp.concatenate([zr, y, zr], axis=1)
        zc = jnp.zeros((N, h + 2, 1, c_in), y.dtype)
        xp = jnp.concatenate([zc, xp, zc], axis=2)   # (N, h+2, w+2, c_in)

        # im2col operand in registers: 9 shifted taps concatenated on lanes.
        taps = [xp[:, dh:dh + h, dw:dw + w, :]
                for dh in range(3) for dw in range(3)]
        col = jnp.concatenate(taps, axis=-1)         # (N, h, w, 9*c_in) f32
        col = col.reshape(N * h * w, 9 * c_in).astype(jnp.bfloat16)

        # One K = 9*c_in matmul on the MXU (bf16 operands, f32 accumulate).
        z = jnp.dot(col, conv_w[ci][...], preferred_element_type=jnp.float32)
        z = _apply_act(z + bias(li, c_out), activation)
        li += 1

        # 2x2 max-pool, stride 2, in registers.
        # H step: split a major dim only (layout-preserving) + VPU max.
        z = z.reshape(N, h // 2, 2, w, c_out)
        z = jnp.maximum(z[:, :, 0], z[:, :, 1])       # (N, h/2, w, c_out)
        # W step: split the sublane dim (tiny relayout) + VPU max.
        z = z.reshape(N, h // 2, w // 2, 2, c_out)
        z = jnp.maximum(z[:, :, :, 0], z[:, :, :, 1])  # (N, h/2, w/2, c_out)
        y = z
        h //= 2
        w //= 2

    # Flatten in HWC order via lane-dim concatenation of per-pixel slices
    # (torch's CHW flatten ordering is folded into fc_w[0] at init time).
    parts = [y[:, i, j] for i in range(h) for j in range(w)]   # (N, c_last) each
    a = jnp.concatenate(parts, axis=-1)                         # (N, h*w*c_last) f32

    for fi in range(n_fc):
        a = jnp.dot(a.astype(jnp.bfloat16), fc_w[fi][...],
                    preferred_element_type=jnp.float32)
        a = a + bias(li, fc_dims[fi + 1])
        li += 1
        if fi < n_fc - 1:
            a = _apply_act(a, activation)
            # TODO(synk): torch.nn.Dropout is identity in eval mode; train-mode
            # random masking is not implemented.
    o_ref[...] = a


# ---------------------------------------------------------------------------
# Parameters (torch-semantics f32) + one-time kernel-side preparation.
# ---------------------------------------------------------------------------
def init_params(key, input_shape, output_shape, conv_filters, fc_nodes):
    C, H, W = input_shape
    params = {"conv": [], "fc": []}
    in_c = C
    for out_c in conv_filters:
        key, k1, k2 = jax.random.split(key, 3)
        bound = 1.0 / math.sqrt(in_c * 9)
        w = jax.random.uniform(k1, (3, 3, in_c, out_c), jnp.float32, -bound, bound)
        b = jax.random.uniform(k2, (out_c,), jnp.float32, -bound, bound)
        params["conv"].append((w, b))
        in_c = out_c
    flat = conv_filters[-1] * (H // 2 ** len(conv_filters)) * (W // 2 ** len(conv_filters))
    in_n = flat
    for out_n in tuple(fc_nodes) + (output_shape,):
        key, k1, k2 = jax.random.split(key, 3)
        bound = 1.0 / math.sqrt(in_n)
        w = jax.random.uniform(k1, (in_n, out_n), jnp.float32, -bound, bound)
        b = jax.random.uniform(k2, (out_n,), jnp.float32, -bound, bound)
        params["fc"].append((w, b))
        in_n = out_n
    return params


def prepare_kernel_params(params, input_shape):
    """One-time prep: flatten conv weights, fold CHW->HWC into fc_w[0],
    cast matmul weights to bf16, concatenate all biases into one vector."""
    _, H, W = input_shape
    n_conv = len(params["conv"])
    conv_w = [w.reshape(9 * w.shape[2], w.shape[3]).astype(jnp.bfloat16)
              for (w, _) in params["conv"]]
    ho, wo = H // 2 ** n_conv, W // 2 ** n_conv
    c_last = params["conv"][-1][0].shape[3]
    fc_w = []
    for i, (w, _) in enumerate(params["fc"]):
        if i == 0:
            # Fold torch's CHW flatten ordering into the weight (rows -> HWC).
            w = (w.reshape(c_last, ho, wo, w.shape[1])
                   .transpose(1, 2, 0, 3)
                   .reshape(ho * wo * c_last, w.shape[1]))
        fc_w.append(w.astype(jnp.bfloat16))
    biases = [b for (_, b) in params["conv"]] + [b for (_, b) in params["fc"]]
    b_all = jnp.concatenate(biases).reshape(1, -1).astype(jnp.float32)
    return {"conv_w": conv_w, "fc_w": fc_w, "bias": b_all}


# ---------------------------------------------------------------------------
# Forward
# ---------------------------------------------------------------------------
def flexible_cnn2d_forward(x_nchw, kparams, activation="relu"):
    conv_w = kparams["conv_w"]
    fc_w = kparams["fc_w"]
    b_all = kparams["bias"]

    # NCHW (PyTorch) -> NHWC for the TPU kernel (channels on lanes).
    x = jnp.transpose(x_nchw, (0, 2, 3, 1)).astype(jnp.float32)
    N, H, W, _ = x.shape

    conv_channels = (conv_w[0].shape[0] // 9,) + tuple(wm.shape[1] for wm in conv_w)
    fc_dims = (fc_w[0].shape[0],) + tuple(wm.shape[1] for wm in fc_w)
    widths = list(conv_channels[1:]) + list(fc_dims[1:])
    bias_offsets, off = [], 0
    for wd in widths:
        bias_offsets.append(off)
        off += wd

    kernel = functools.partial(
        _fused_cnn_kernel, N=N, H=H, W=W,
        conv_channels=conv_channels, fc_dims=fc_dims,
        bias_offsets=tuple(bias_offsets), activation=activation)

    return pl.pallas_call(
        kernel,
        out_shape=jax.ShapeDtypeStruct((N, fc_dims[-1]), jnp.float32),
    )(x, *conv_w, *fc_w, b_all)


# ---------------------------------------------------------------------------
# Pure-JAX reference (torch semantics, f32 weights) for the correctness check.
# ---------------------------------------------------------------------------
def reference_forward(x_nchw, params, activation="relu"):
    x = jnp.transpose(x_nchw, (0, 2, 3, 1))
    for (w, b) in params["conv"]:
        y = lax.conv_general_dilated(
            x, w, (1, 1), "SAME",
            dimension_numbers=("NHWC", "HWIO", "NHWC")) + b
        y = _apply_act(y, activation)
        x = lax.reduce_window(y, -jnp.inf, lax.max,
                              (1, 2, 2, 1), (1, 2, 2, 1), "VALID")
    n = x.shape[0]
    x = jnp.transpose(x, (0, 3, 1, 2)).reshape(n, -1)   # torch CHW flatten
    num_fc = len(params["fc"])
    for i, (w, b) in enumerate(params["fc"]):
        x = jnp.dot(x, w) + b
        if i < num_fc - 1:
            x = _apply_act(x, activation)
    return x


if __name__ == "__main__":
    key = jax.random.PRNGKey(0)
    input_shape = (4, 16, 16)      # (C, H, W), as in the torch module
    output_shape = 10
    conv_filters = (8, 16)
    fc_nodes = (32, 16)
    batch = 2

    pkey, xkey = jax.random.split(key)
    params = init_params(pkey, input_shape, output_shape, conv_filters, fc_nodes)
    kparams = prepare_kernel_params(params, input_shape)   # one-time weight prep
    x = jax.random.normal(xkey, (batch,) + input_shape, jnp.float32)

    fwd = jax.jit(functools.partial(flexible_cnn2d_forward, activation="relu"))
    out = jax.block_until_ready(fwd(x, kparams))

    ref = reference_forward(x, params, activation="relu")
    assert out.shape == (batch, output_shape), out.shape
    max_diff = float(jnp.max(jnp.abs(out - ref)))
    # bf16 MXU operands (same rounding as DEFAULT-precision matmul) -> loose tol.
    assert jnp.allclose(out, ref, rtol=2e-2, atol=2e-2), f"max abs diff {max_diff}"

    print("KERNEL_OK")
</pallas_src>

<mosaic_0001>
module attributes {stable_mosaic.version = 11 : i64} {
  func.func @_fused_cnn_kernel(%arg0: memref<2x16x16x4xf32, #tpu.memory_space<vmem>>, %arg1: memref<36x8xbf16, #tpu.memory_space<vmem>>, %arg2: memref<72x16xbf16, #tpu.memory_space<vmem>>, %arg3: memref<256x32xbf16, #tpu.memory_space<vmem>>, %arg4: memref<32x16xbf16, #tpu.memory_space<vmem>>, %arg5: memref<16x10xbf16, #tpu.memory_space<vmem>>, %arg6: memref<1x82xf32, #tpu.memory_space<vmem>>, %arg7: memref<2x10xf32, #tpu.memory_space<vmem>>) attributes {dimension_semantics = [], scalar_prefetch = 0 : i64, scratch_operands = 0 : i64, tpu.core_type = #tpu.core_type<tc>} {
    %c0 = arith.constant 0 : index
    %c0_0 = arith.constant 0 : index
    %c0_1 = arith.constant 0 : index
    %c0_2 = arith.constant 0 : index
    %0 = vector.load %arg0[%c0, %c0_0, %c0_1, %c0_2] : memref<2x16x16x4xf32, #tpu.memory_space<vmem>>, vector<2x16x16x4xf32>
    %cst = arith.constant 0.000000e+00 : f32
    %1 = vector.broadcast %cst : f32 to vector<2x1x16x4xf32>
    %2 = tpu.concatenate %1, %0, %1 in 1 : vector<2x1x16x4xf32>, vector<2x16x16x4xf32>, vector<2x1x16x4xf32> -> vector<2x18x16x4xf32>
    %cst_3 = arith.constant 0.000000e+00 : f32
    %3 = vector.broadcast %cst_3 : f32 to vector<2x18x1x4xf32>
    %4 = tpu.concatenate %3, %2, %3 in 2 : vector<2x18x1x4xf32>, vector<2x18x16x4xf32>, vector<2x18x1x4xf32> -> vector<2x18x18x4xf32>
    %5 = vector.extract_strided_slice %4 {offsets = [0, 0, 0, 0], sizes = [2, 16, 16, 4], strides = [1, 1, 1, 1]} : vector<2x18x18x4xf32> to vector<2x16x16x4xf32>
    %6 = vector.extract_strided_slice %4 {offsets = [0, 0, 1, 0], sizes = [2, 16, 16, 4], strides = [1, 1, 1, 1]} : vector<2x18x18x4xf32> to vector<2x16x16x4xf32>
    %7 = vector.extract_strided_slice %4 {offsets = [0, 0, 2, 0], sizes = [2, 16, 16, 4], strides = [1, 1, 1, 1]} : vector<2x18x18x4xf32> to vector<2x16x16x4xf32>
    %8 = vector.extract_strided_slice %4 {offsets = [0, 1, 0, 0], sizes = [2, 16, 16, 4], strides = [1, 1, 1, 1]} : vector<2x18x18x4xf32> to vector<2x16x16x4xf32>
    %9 = vector.extract_strided_slice %4 {offsets = [0, 1, 1, 0], sizes = [2, 16, 16, 4], strides = [1, 1, 1, 1]} : vector<2x18x18x4xf32> to vector<2x16x16x4xf32>
    %10 = vector.extract_strided_slice %4 {offsets = [0, 1, 2, 0], sizes = [2, 16, 16, 4], strides = [1, 1, 1, 1]} : vector<2x18x18x4xf32> to vector<2x16x16x4xf32>
    %11 = vector.extract_strided_slice %4 {offsets = [0, 2, 0, 0], sizes = [2, 16, 16, 4], strides = [1, 1, 1, 1]} : vector<2x18x18x4xf32> to vector<2x16x16x4xf32>
    %12 = vector.extract_strided_slice %4 {offsets = [0, 2, 1, 0], sizes = [2, 16, 16, 4], strides = [1, 1, 1, 1]} : vector<2x18x18x4xf32> to vector<2x16x16x4xf32>
    %13 = vector.extract_strided_slice %4 {offsets = [0, 2, 2, 0], sizes = [2, 16, 16, 4], strides = [1, 1, 1, 1]} : vector<2x18x18x4xf32> to vector<2x16x16x4xf32>
    %14 = tpu.concatenate %5, %6, %7, %8, %9, %10, %11, %12, %13 in 3 : vector<2x16x16x4xf32>, vector<2x16x16x4xf32>, vector<2x16x16x4xf32>, vector<2x16x16x4xf32>, vector<2x16x16x4xf32>, vector<2x16x16x4xf32>, vector<2x16x16x4xf32>, vector<2x16x16x4xf32>, vector<2x16x16x4xf32> -> vector<2x16x16x36xf32>
    %15 = vector.shape_cast %14 : vector<2x16x16x36xf32> to vector<512x36xf32>
    %16 = arith.truncf %15 : vector<512x36xf32> to vector<512x36xbf16>
    %c0_4 = arith.constant 0 : index
    %c0_5 = arith.constant 0 : index
    %17 = vector.load %arg1[%c0_4, %c0_5] : memref<36x8xbf16, #tpu.memory_space<vmem>>, vector<36x8xbf16>
    %cst_6 = arith.constant dense<0.000000e+00> : vector<512x8xf32>
    %18 = tpu.matmul %16, %17, %cst_6 {dimension_numbers = #tpu.dot_dimension_numbers<[1], [0], [0], [1], [0, 0, 1, 1], [], []>} : vector<512x36xbf16>, vector<36x8xbf16>, vector<512x8xf32> -> vector<512x8xf32>
    %c0_7 = arith.constant 0 : index
    %c0_8 = arith.constant 0 : index
    %19 = vector.load %arg6[%c0_7, %c0_8] : memref<1x82xf32, #tpu.memory_space<vmem>>, vector<1x8xf32>
    %20 = vector.broadcast %19 : vector<1x8xf32> to vector<512x8xf32>
    %21 = arith.addf %18, %20 : vector<512x8xf32>
    %cst_9 = arith.constant 0.000000e+00 : f32
    %22 = vector.broadcast %cst_9 : f32 to vector<512x8xf32>
    %23 = arith.maximumf %21, %22 : vector<512x8xf32>
    %24 = vector.shape_cast %23 : vector<512x8xf32> to vector<2x8x2x16x8xf32>
    %25 = vector.extract_strided_slice %24 {offsets = [0, 0, 0, 0, 0], sizes = [2, 8, 1, 16, 8], strides = [1, 1, 1, 1, 1]} : vector<2x8x2x16x8xf32> to vector<2x8x1x16x8xf32>
    %26 = vector.shape_cast %25 : vector<2x8x1x16x8xf32> to vector<2x8x16x8xf32>
    %27 = vector.extract_strided_slice %24 {offsets = [0, 0, 1, 0, 0], sizes = [2, 8, 1, 16, 8], strides = [1, 1, 1, 1, 1]} : vector<2x8x2x16x8xf32> to vector<2x8x1x16x8xf32>
    %28 = vector.shape_cast %27 : vector<2x8x1x16x8xf32> to vector<2x8x16x8xf32>
    %29 = arith.maximumf %26, %28 : vector<2x8x16x8xf32>
    %30 = vector.shape_cast %29 : vector<2x8x16x8xf32> to vector<2x8x8x2x8xf32>
    %31 = vector.extract_strided_slice %30 {offsets = [0, 0, 0, 0, 0], sizes = [2, 8, 8, 1, 8], strides = [1, 1, 1, 1, 1]} : vector<2x8x8x2x8xf32> to vector<2x8x8x1x8xf32>
    %32 = vector.shape_cast %31 : vector<2x8x8x1x8xf32> to vector<2x8x8x8xf32>
    %33 = vector.extract_strided_slice %30 {offsets = [0, 0, 0, 1, 0], sizes = [2, 8, 8, 1, 8], strides = [1, 1, 1, 1, 1]} : vector<2x8x8x2x8xf32> to vector<2x8x8x1x8xf32>
    %34 = vector.shape_cast %33 : vector<2x8x8x1x8xf32> to vector<2x8x8x8xf32>
    %35 = arith.maximumf %32, %34 : vector<2x8x8x8xf32>
    %cst_10 = arith.constant 0.000000e+00 : f32
    %36 = vector.broadcast %cst_10 : f32 to vector<2x1x8x8xf32>
    %37 = tpu.concatenate %36, %35, %36 in 1 : vector<2x1x8x8xf32>, vector<2x8x8x8xf32>, vector<2x1x8x8xf32> -> vector<2x10x8x8xf32>
    %cst_11 = arith.constant 0.000000e+00 : f32
    %38 = vector.broadcast %cst_11 : f32 to vector<2x10x1x8xf32>
    %39 = tpu.concatenate %38, %37, %38 in 2 : vector<2x10x1x8xf32>, vector<2x10x8x8xf32>, vector<2x10x1x8xf32> -> vector<2x10x10x8xf32>
    %40 = vector.extract_strided_slice %39 {offsets = [0, 0, 0, 0], sizes = [2, 8, 8, 8], strides = [1, 1, 1, 1]} : vector<2x10x10x8xf32> to vector<2x8x8x8xf32>
    %41 = vector.extract_strided_slice %39 {offsets = [0, 0, 1, 0], sizes = [2, 8, 8, 8], strides = [1, 1, 1, 1]} : vector<2x10x10x8xf32> to vector<2x8x8x8xf32>
    %42 = vector.extract_strided_slice %39 {offsets = [0, 0, 2, 0], sizes = [2, 8, 8, 8], strides = [1, 1, 1, 1]} : vector<2x10x10x8xf32> to vector<2x8x8x8xf32>
    %43 = vector.extract_strided_slice %39 {offsets = [0, 1, 0, 0], sizes = [2, 8, 8, 8], strides = [1, 1, 1, 1]} : vector<2x10x10x8xf32> to vector<2x8x8x8xf32>
    %44 = vector.extract_strided_slice %39 {offsets = [0, 1, 1, 0], sizes = [2, 8, 8, 8], strides = [1, 1, 1, 1]} : vector<2x10x10x8xf32> to vector<2x8x8x8xf32>
    %45 = vector.extract_strided_slice %39 {offsets = [0, 1, 2, 0], sizes = [2, 8, 8, 8], strides = [1, 1, 1, 1]} : vector<2x10x10x8xf32> to vector<2x8x8x8xf32>
    %46 = vector.extract_strided_slice %39 {offsets = [0, 2, 0, 0], sizes = [2, 8, 8, 8], strides = [1, 1, 1, 1]} : vector<2x10x10x8xf32> to vector<2x8x8x8xf32>
    %47 = vector.extract_strided_slice %39 {offsets = [0, 2, 1, 0], sizes = [2, 8, 8, 8], strides = [1, 1, 1, 1]} : vector<2x10x10x8xf32> to vector<2x8x8x8xf32>
    %48 = vector.extract_strided_slice %39 {offsets = [0, 2, 2, 0], sizes = [2, 8, 8, 8], strides = [1, 1, 1, 1]} : vector<2x10x10x8xf32> to vector<2x8x8x8xf32>
    %49 = tpu.concatenate %40, %41, %42, %43, %44, %45, %46, %47, %48 in 3 : vector<2x8x8x8xf32>, vector<2x8x8x8xf32>, vector<2x8x8x8xf32>, vector<2x8x8x8xf32>, vector<2x8x8x8xf32>, vector<2x8x8x8xf32>, vector<2x8x8x8xf32>, vector<2x8x8x8xf32>, vector<2x8x8x8xf32> -> vector<2x8x8x72xf32>
    %50 = vector.shape_cast %49 : vector<2x8x8x72xf32> to vector<128x72xf32>
    %51 = arith.truncf %50 : vector<128x72xf32> to vector<128x72xbf16>
    %c0_12 = arith.constant 0 : index
    %c0_13 = arith.constant 0 : index
    %52 = vector.load %arg2[%c0_12, %c0_13] : memref<72x16xbf16, #tpu.memory_space<vmem>>, vector<72x16xbf16>
    %cst_14 = arith.constant dense<0.000000e+00> : vector<128x16xf32>
    %53 = tpu.matmul %51, %52, %cst_14 {dimension_numbers = #tpu.dot_dimension_numbers<[1], [0], [0], [1], [0, 0, 1, 1], [], []>} : vector<128x72xbf16>, vector<72x16xbf16>, vector<128x16xf32> -> vector<128x16xf32>
    %c0_15 = arith.constant 0 : index
    %c8 = arith.constant 8 : index
    %54 = vector.load %arg6[%c0_15, %c8] : memref<1x82xf32, #tpu.memory_space<vmem>>, vector<1x16xf32>
    %55 = vector.broadcast %54 : vector<1x16xf32> to vector<128x16xf32>
    %56 = arith.addf %53, %55 : vector<128x16xf32>
    %cst_16 = arith.constant 0.000000e+00 : f32
    %57 = vector.broadcast %cst_16 : f32 to vector<128x16xf32>
    %58 = arith.maximumf %56, %57 : vector<128x16xf32>
    %59 = vector.shape_cast %58 : vector<128x16xf32> to vector<2x4x2x8x16xf32>
    %60 = vector.extract_strided_slice %59 {offsets = [0, 0, 0, 0, 0], sizes = [2, 4, 1, 8, 16], strides = [1, 1, 1, 1, 1]} : vector<2x4x2x8x16xf32> to vector<2x4x1x8x16xf32>
    %61 = vector.shape_cast %60 : vector<2x4x1x8x16xf32> to vector<2x4x8x16xf32>
    %62 = vector.extract_strided_slice %59 {offsets = [0, 0, 1, 0, 0], sizes = [2, 4, 1, 8, 16], strides = [1, 1, 1, 1, 1]} : vector<2x4x2x8x16xf32> to vector<2x4x1x8x16xf32>
    %63 = vector.shape_cast %62 : vector<2x4x1x8x16xf32> to vector<2x4x8x16xf32>
    %64 = arith.maximumf %61, %63 : vector<2x4x8x16xf32>
    %65 = vector.shape_cast %64 : vector<2x4x8x16xf32> to vector<2x4x4x2x16xf32>
    %66 = vector.extract_strided_slice %65 {offsets = [0, 0, 0, 0, 0], sizes = [2, 4, 4, 1, 16], strides = [1, 1, 1, 1, 1]} : vector<2x4x4x2x16xf32> to vector<2x4x4x1x16xf32>
    %67 = vector.shape_cast %66 : vector<2x4x4x1x16xf32> to vector<2x4x4x16xf32>
    %68 = vector.extract_strided_slice %65 {offsets = [0, 0, 0, 1, 0], sizes = [2, 4, 4, 1, 16], strides = [1, 1, 1, 1, 1]} : vector<2x4x4x2x16xf32> to vector<2x4x4x1x16xf32>
    %69 = vector.shape_cast %68 : vector<2x4x4x1x16xf32> to vector<2x4x4x16xf32>
    %70 = arith.maximumf %67, %69 : vector<2x4x4x16xf32>
    %71 = vector.extract_strided_slice %70 {offsets = [0, 0, 0, 0], sizes = [2, 1, 1, 16], strides = [1, 1, 1, 1]} : vector<2x4x4x16xf32> to vector<2x1x1x16xf32>
    %72 = vector.shape_cast %71 : vector<2x1x1x16xf32> to vector<2x16xf32>
    %73 = vector.extract_strided_slice %70 {offsets = [0, 0, 1, 0], sizes = [2, 1, 1, 16], strides = [1, 1, 1, 1]} : vector<2x4x4x16xf32> to vector<2x1x1x16xf32>
    %74 = vector.shape_cast %73 : vector<2x1x1x16xf32> to vector<2x16xf32>
    %75 = vector.extract_strided_slice %70 {offsets = [0, 0, 2, 0], sizes = [2, 1, 1, 16], strides = [1, 1, 1, 1]} : vector<2x4x4x16xf32> to vector<2x1x1x16xf32>
    %76 = vector.shape_cast %75 : vector<2x1x1x16xf32> to vector<2x16xf32>
    %77 = vector.extract_strided_slice %70 {offsets = [0, 0, 3, 0], sizes = [2, 1, 1, 16], strides = [1, 1, 1, 1]} : vector<2x4x4x16xf32> to vector<2x1x1x16xf32>
    %78 = vector.shape_cast %77 : vector<2x1x1x16xf32> to vector<2x16xf32>
    %79 = vector.extract_strided_slice %70 {offsets = [0, 1, 0, 0], sizes = [2, 1, 1, 16], strides = [1, 1, 1, 1]} : vector<2x4x4x16xf32> to vector<2x1x1x16xf32>
    %80 = vector.shape_cast %79 : vector<2x1x1x16xf32> to vector<2x16xf32>
    %81 = vector.extract_strided_slice %70 {offsets = [0, 1, 1, 0], sizes = [2, 1, 1, 16], strides = [1, 1, 1, 1]} : vector<2x4x4x16xf32> to vector<2x1x1x16xf32>
    %82 = vector.shape_cast %81 : vector<2x1x1x16xf32> to vector<2x16xf32>
    %83 = vector.extract_strided_slice %70 {offsets = [0, 1, 2, 0], sizes = [2, 1, 1, 16], strides = [1, 1, 1, 1]} : vector<2x4x4x16xf32> to vector<2x1x1x16xf32>
    %84 = vector.shape_cast %83 : vector<2x1x1x16xf32> to vector<2x16xf32>
    %85 = vector.extract_strided_slice %70 {offsets = [0, 1, 3, 0], sizes = [2, 1, 1, 16], strides = [1, 1, 1, 1]} : vector<2x4x4x16xf32> to vector<2x1x1x16xf32>
    %86 = vector.shape_cast %85 : vector<2x1x1x16xf32> to vector<2x16xf32>
    %87 = vector.extract_strided_slice %70 {offsets = [0, 2, 0, 0], sizes = [2, 1, 1, 16], strides = [1, 1, 1, 1]} : vector<2x4x4x16xf32> to vector<2x1x1x16xf32>
    %88 = vector.shape_cast %87 : vector<2x1x1x16xf32> to vector<2x16xf32>
    %89 = vector.extract_strided_slice %70 {offsets = [0, 2, 1, 0], sizes = [2, 1, 1, 16], strides = [1, 1, 1, 1]} : vector<2x4x4x16xf32> to vector<2x1x1x16xf32>
    %90 = vector.shape_cast %89 : vector<2x1x1x16xf32> to vector<2x16xf32>
    %91 = vector.extract_strided_slice %70 {offsets = [0, 2, 2, 0], sizes = [2, 1, 1, 16], strides = [1, 1, 1, 1]} : vector<2x4x4x16xf32> to vector<2x1x1x16xf32>
    %92 = vector.shape_cast %91 : vector<2x1x1x16xf32> to vector<2x16xf32>
    %93 = vector.extract_strided_slice %70 {offsets = [0, 2, 3, 0], sizes = [2, 1, 1, 16], strides = [1, 1, 1, 1]} : vector<2x4x4x16xf32> to vector<2x1x1x16xf32>
    %94 = vector.shape_cast %93 : vector<2x1x1x16xf32> to vector<2x16xf32>
    %95 = vector.extract_strided_slice %70 {offsets = [0, 3, 0, 0], sizes = [2, 1, 1, 16], strides = [1, 1, 1, 1]} : vector<2x4x4x16xf32> to vector<2x1x1x16xf32>
    %96 = vector.shape_cast %95 : vector<2x1x1x16xf32> to vector<2x16xf32>
    %97 = vector.extract_strided_slice %70 {offsets = [0, 3, 1, 0], sizes = [2, 1, 1, 16], strides = [1, 1, 1, 1]} : vector<2x4x4x16xf32> to vector<2x1x1x16xf32>
    %98 = vector.shape_cast %97 : vector<2x1x1x16xf32> to vector<2x16xf32>
    %99 = vector.extract_strided_slice %70 {offsets = [0, 3, 2, 0], sizes = [2, 1, 1, 16], strides = [1, 1, 1, 1]} : vector<2x4x4x16xf32> to vector<2x1x1x16xf32>
    %100 = vector.shape_cast %99 : vector<2x1x1x16xf32> to vector<2x16xf32>
    %101 = vector.extract_strided_slice %70 {offsets = [0, 3, 3, 0], sizes = [2, 1, 1, 16], strides = [1, 1, 1, 1]} : vector<2x4x4x16xf32> to vector<2x1x1x16xf32>
    %102 = vector.shape_cast %101 : vector<2x1x1x16xf32> to vector<2x16xf32>
    %103 = tpu.concatenate %72, %74, %76, %78, %80, %82, %84, %86, %88, %90, %92, %94, %96, %98, %100, %102 in 1 : vector<2x16xf32>, vector<2x16xf32>, vector<2x16xf32>, vector<2x16xf32>, vector<2x16xf32>, vector<2x16xf32>, vector<2x16xf32>, vector<2x16xf32>, vector<2x16xf32>, vector<2x16xf32>, vector<2x16xf32>, vector<2x16xf32>, vector<2x16xf32>, vector<2x16xf32>, vector<2x16xf32>, vector<2x16xf32> -> vector<2x256xf32>
    %104 = arith.truncf %103 : vector<2x256xf32> to vector<2x256xbf16>
    %c0_17 = arith.constant 0 : index
    %c0_18 = arith.constant 0 : index
    %105 = vector.load %arg3[%c0_17, %c0_18] : memref<256x32xbf16, #tpu.memory_space<vmem>>, vector<256x32xbf16>
    %cst_19 = arith.constant dense<0.000000e+00> : vector<2x32xf32>
    %106 = tpu.matmul %104, %105, %cst_19 {dimension_numbers = #tpu.dot_dimension_numbers<[1], [0], [0], [1], [0, 0, 1, 1], [], []>} : vector<2x256xbf16>, vector<256x32xbf16>, vector<2x32xf32> -> vector<2x32xf32>
    %c0_20 = arith.constant 0 : index
    %c24 = arith.constant 24 : index
    %107 = vector.load %arg6[%c0_20, %c24] : memref<1x82xf32, #tpu.memory_space<vmem>>, vector<1x32xf32>
    %108 = vector.broadcast %107 : vector<1x32xf32> to vector<2x32xf32>
    %109 = arith.addf %106, %108 : vector<2x32xf32>
    %cst_21 = arith.constant 0.000000e+00 : f32
    %110 = vector.broadcast %cst_21 : f32 to vector<2x32xf32>
    %111 = arith.maximumf %109, %110 : vector<2x32xf32>
    %112 = arith.truncf %111 : vector<2x32xf32> to vector<2x32xbf16>
    %c0_22 = arith.constant 0 : index
    %c0_23 = arith.constant 0 : index
    %113 = vector.load %arg4[%c0_22, %c0_23] : memref<32x16xbf16, #tpu.memory_space<vmem>>, vector<32x16xbf16>
    %cst_24 = arith.constant dense<0.000000e+00> : vector<2x16xf32>
    %114 = tpu.matmul %112, %113, %cst_24 {dimension_numbers = #tpu.dot_dimension_numbers<[1], [0], [0], [1], [0, 0, 1, 1], [], []>} : vector<2x32xbf16>, vector<32x16xbf16>, vector<2x16xf32> -> vector<2x16xf32>
    %c0_25 = arith.constant 0 : index
    %c56 = arith.constant 56 : index
    %115 = vector.load %arg6[%c0_25, %c56] : memref<1x82xf32, #tpu.memory_space<vmem>>, vector<1x16xf32>
    %116 = vector.broadcast %115 : vector<1x16xf32> to vector<2x16xf32>
    %117 = arith.addf %114, %116 : vector<2x16xf32>
    %cst_26 = arith.constant 0.000000e+00 : f32
    %118 = vector.broadcast %cst_26 : f32 to vector<2x16xf32>
    %119 = arith.maximumf %117, %118 : vector<2x16xf32>
    %120 = arith.truncf %119 : vector<2x16xf32> to vector<2x16xbf16>
    %c0_27 = arith.constant 0 : index
    %c0_28 = arith.constant 0 : index
    %121 = vector.load %arg5[%c0_27, %c0_28] : memref<16x10xbf16, #tpu.memory_space<vmem>>, vector<16x10xbf16>
    %cst_29 = arith.constant dense<0.000000e+00> : vector<2x10xf32>
    %122 = tpu.matmul %120, %121, %cst_29 {dimension_numbers = #tpu.dot_dimension_numbers<[1], [0], [0], [1], [0, 0, 1, 1], [], []>} : vector<2x16xbf16>, vector<16x10xbf16>, vector<2x10xf32> -> vector<2x10xf32>
    %c0_30 = arith.constant 0 : index
    %c72 = arith.constant 72 : index
    %123 = vector.load %arg6[%c0_30, %c72] : memref<1x82xf32, #tpu.memory_space<vmem>>, vector<1x10xf32>
    %124 = vector.broadcast %123 : vector<1x10xf32> to vector<2x10xf32>
    %125 = arith.addf %122, %124 : vector<2x10xf32>
    %c0_31 = arith.constant 0 : index
    %c0_32 = arith.constant 0 : index
    %126 = vector.load %arg7[%c0_31, %c0_32] : memref<2x10xf32, #tpu.memory_space<vmem>>, vector<2x10xf32>
    tpu.vector_store %arg7[%c0_31, %c0_32], %125 {strides = array<i32>} : memref<2x10xf32, #tpu.memory_space<vmem>>, vector<2x10xf32>,
    return
  }
}

</mosaic_0001>

<llo_original>
// kernel: flexible_cnn2d_forward.1
$region0: #{flexible_cnn2d_forward.1}
  #allocation0 [shape = 'u32[]', space=smem, size = 0x4, offset = 0x4, fixed_abs, tag = 'smem constant byte address 0x4 - core index']
  #allocation1 [shape = 'u32[144,128]{1,0:T(1,128)}', space=vmem, size = 0x12000, scoped, tag = 'internal scratch']
  %s0 = inlined_call_operand.vmem [shape: f32[2,16,16,4], index: 0, kind: input, shape index: {}]
  %s1 = inlined_call_operand.vmem [shape: bf16[36,8], index: 1, kind: input, shape index: {}]
  %s2 = inlined_call_operand.vmem [shape: bf16[72,16], index: 2, kind: input, shape index: {}]
  %s3 = inlined_call_operand.vmem [shape: bf16[256,32], index: 3, kind: input, shape index: {}]
  %s4 = inlined_call_operand.vmem [shape: bf16[32,16], index: 4, kind: input, shape index: {}]
  %s5 = inlined_call_operand.vmem [shape: bf16[16,10], index: 5, kind: input, shape index: {}]
  %s6 = inlined_call_operand.vmem [shape: f32[1,82], index: 6, kind: input, shape index: {}]
  %s7 = inlined_call_operand.hbm [shape: f32[2,10], index: 7, kind: output, shape index: {}]
  %s8 = sld [smem:[#allocation0]]
  $region38: #{flexible_cnn2d_forward.1} parent=0
    _
  %s10 = ssub.s32 1, %s8
  %s11 = scalar_select 0, %s10, %s8
  $region1: #{flexible_cnn2d_forward.1} parent=0
    #allocation2 [shape = 'u8[1024]{0}', space=vmem, size = 0x400, scoped, tag = 'output window, operand 0, single buffered']
    #allocation3 [shape = 's32[1]{0}', space=sflag, size = 0x4, scoped, tag = 'scoped memory for flexible_cnn2d_forward.1']
    %12 = vsyncpa [#allocation3], 0
    // Predicated region
    $region2: #{flexible_cnn2d_forward.1} parent=1 // pred_check
      _
    $region3: #{flexible_cnn2d_forward.1} parent=1 // pred_check_branch
      %14 = sbr.rel (0) target = $region5
    $region4: #{flexible_cnn2d_forward.1} parent=1 // pred_region
      _
    $region5: #{flexible_cnn2d_forward.1} parent=1 // pred_fallthru
      _
    // Predicated region
    $region6: #{flexible_cnn2d_forward.1} parent=1 // pred_check
      _
    $region7: #{flexible_cnn2d_forward.1} parent=1 // pred_check_branch
      %16 = sbr.rel (0) target = $region9
    $region8: #{flexible_cnn2d_forward.1} parent=1 // pred_region
      _
    $region9: #{flexible_cnn2d_forward.1} parent=1 // pred_fallthru
      _
    // Predicated region
    $region10: #{flexible_cnn2d_forward.1} parent=1 // pred_check
      _
    $region11: #{flexible_cnn2d_forward.1} parent=1 // pred_check_branch
      %18 = sbr.rel (0) target = $region13
    $region12: #{flexible_cnn2d_forward.1} parent=1 // pred_region
      _
    $region13: #{flexible_cnn2d_forward.1} parent=1 // pred_fallthru
      _
    // Predicated region
    $region14: #{flexible_cnn2d_forward.1} parent=1 // pred_check
      _
    $region15: #{flexible_cnn2d_forward.1} parent=1 // pred_check_branch
      %20 = sbr.rel (0) target = $region17
    $region16: #{flexible_cnn2d_forward.1} parent=1 // pred_region
      _
    $region17: #{flexible_cnn2d_forward.1} parent=1 // pred_fallthru
      _
    // Predicated region
    $region18: #{flexible_cnn2d_forward.1} parent=1 // pred_check
      _
    $region19: #{flexible_cnn2d_forward.1} parent=1 // pred_check_branch
      %22 = sbr.rel (0) target = $region21
    $region20: #{flexible_cnn2d_forward.1} parent=1 // pred_region
      _
    $region21: #{flexible_cnn2d_forward.1} parent=1 // pred_fallthru
      _
    // Predicated region
    $region22: #{flexible_cnn2d_forward.1} parent=1 // pred_check
      _
    $region23: #{flexible_cnn2d_forward.1} parent=1 // pred_check_branch
      %24 = sbr.rel (0) target = $region25
    $region24: #{flexible_cnn2d_forward.1} parent=1 // pred_region
      _
    $region25: #{flexible_cnn2d_forward.1} parent=1 // pred_fallthru
      _
    // Predicated region
    $region26: #{flexible_cnn2d_forward.1} parent=1 // pred_check
      _
    $region27: #{flexible_cnn2d_forward.1} parent=1 // pred_check_branch
      %26 = sbr.rel (0) target = $region29
    $region28: #{flexible_cnn2d_forward.1} parent=1 // pred_region
      _
    $region29: #{flexible_cnn2d_forward.1} parent=1 // pred_fallthru
      _
    %v28 = vld [vmem:[%s0] sm:$0xff]
    %v29 = vld [vmem:[%s0 + $0x8] sm:$0xff]
    %v30 = vld [vmem:[%s0 + $0x10] sm:$0xff]
    %v31 = vld [vmem:[%s0 + $0x18] sm:$0xff]
    %v32 = vld [vmem:[%s0 + $0x20] sm:$0xff]
    %v33 = vld [vmem:[%s0 + $0x28] sm:$0xff]
    %v34 = vld [vmem:[%s0 + $0x30] sm:$0xff]
    %v35 = vld [vmem:[%s0 + $0x38] sm:$0xff]
    %v36 = vld [vmem:[%s0 + $0x40] sm:$0xff]
    %v37 = vld [vmem:[%s0 + $0x48] sm:$0xff]
    %v38 = vld [vmem:[%s0 + $0x50] sm:$0xff]
    %v39 = vld [vmem:[%s0 + $0x58] sm:$0xff]
    %v40 = vld [vmem:[%s0 + $0x60] sm:$0xff]
    %v41 = vld [vmem:[%s0 + $0x68] sm:$0xff]
    %v42 = vld [vmem:[%s0 + $0x70] sm:$0xff]
    %v43 = vld [vmem:[%s0 + $0x78] sm:$0xff]
    %v44 = vld [vmem:[%s0 + $0x80] sm:$0xff]
    %v45 = vld [vmem:[%s0 + $0x88] sm:$0xff]
    %v46 = vld [vmem:[%s0 + $0x90] sm:$0xff]
    %v47 = vld [vmem:[%s0 + $0x98] sm:$0xff]
    %v48 = vld [vmem:[%s0 + $0xa0] sm:$0xff]
    %v49 = vld [vmem:[%s0 + $0xa8] sm:$0xff]
    %v50 = vld [vmem:[%s0 + $0xb0] sm:$0xff]
    %v51 = vld [vmem:[%s0 + $0xb8] sm:$0xff]
    %v52 = vld [vmem:[%s0 + $0xc0] sm:$0xff]
    %v53 = vld [vmem:[%s0 + $0xc8] sm:$0xff]
    %v54 = vld [vmem:[%s0 + $0xd0] sm:$0xff]
    %v55 = vld [vmem:[%s0 + $0xd8] sm:$0xff]
    %v56 = vld [vmem:[%s0 + $0xe0] sm:$0xff]
    %v57 = vld [vmem:[%s0 + $0xe8] sm:$0xff]
    %v58 = vld [vmem:[%s0 + $0xf0] sm:$0xff]
    %v59 = vld [vmem:[%s0 + $0xf8] sm:$0xff]
    %v60 = vld [vmem:[%s0 + $0x100] sm:$0xff]
    %v61 = vld [vmem:[%s0 + $0x108] sm:$0xff]
    %v62 = vld [vmem:[%s0 + $0x110] sm:$0xff]
    %v63 = vld [vmem:[%s0 + $0x118] sm:$0xff]
    %v64 = vld [vmem:[%s0 + $0x120] sm:$0xff]
    %v65 = vld [vmem:[%s0 + $0x128] sm:$0xff]
    %v66 = vld [vmem:[%s0 + $0x130] sm:$0xff]
    %v67 = vld [vmem:[%s0 + $0x138] sm:$0xff]
    %v68 = vld [vmem:[%s0 + $0x140] sm:$0xff]
    %v69 = vld [vmem:[%s0 + $0x148] sm:$0xff]
    %v70 = vld [vmem:[%s0 + $0x150] sm:$0xff]
    %v71 = vld [vmem:[%s0 + $0x158] sm:$0xff]
    %v72 = vld [vmem:[%s0 + $0x160] sm:$0xff]
    %v73 = vld [vmem:[%s0 + $0x168] sm:$0xff]
    %v74 = vld [vmem:[%s0 + $0x170] sm:$0xff]
    %v75 = vld [vmem:[%s0 + $0x178] sm:$0xff]
    %v76 = vld [vmem:[%s0 + $0x180] sm:$0xff]
    %v77 = vld [vmem:[%s0 + $0x188] sm:$0xff]
    %v78 = vld [vmem:[%s0 + $0x190] sm:$0xff]
    %v79 = vld [vmem:[%s0 + $0x198] sm:$0xff]
    %v80 = vld [vmem:[%s0 + $0x1a0] sm:$0xff]
    %v81 = vld [vmem:[%s0 + $0x1a8] sm:$0xff]
    %v82 = vld [vmem:[%s0 + $0x1b0] sm:$0xff]
    %v83 = vld [vmem:[%s0 + $0x1b8] sm:$0xff]
    %v84 = vld [vmem:[%s0 + $0x1c0] sm:$0xff]
    %v85 = vld [vmem:[%s0 + $0x1c8] sm:$0xff]
    %v86 = vld [vmem:[%s0 + $0x1d0] sm:$0xff]
    %v87 = vld [vmem:[%s0 + $0x1d8] sm:$0xff]
    %v88 = vld [vmem:[%s0 + $0x1e0] sm:$0xff]
    %v89 = vld [vmem:[%s0 + $0x1e8] sm:$0xff]
    %v90 = vld [vmem:[%s0 + $0x1f0] sm:$0xff]
    %v91 = vld [vmem:[%s0 + $0x1f8] sm:$0xff]
    %vm157 = vcmask 1040384
    %v158 = vrot.slane 0.0, 7
    %v159 = vsel %vm157, %v158, %v158
    %v160 = vrot.slane %v28, 7
    %v161 = vrot.slane %v29, 7
    %v162 = vsel %vm157, %v160, %v161
    %v163 = vrot.slane %v30, 7
    %v164 = vrot.slane %v31, 7
    %v165 = vsel %vm157, %v163, %v164
    %v166 = vrot.slane %v32, 7
    %v167 = vrot.slane %v33, 7
    %v168 = vsel %vm157, %v166, %v167
    %v169 = vrot.slane %v34, 7
    %v170 = vrot.slane %v35, 7
    %v171 = vsel %vm157, %v169, %v170
    %v172 = vrot.slane %v36, 7
    %v173 = vrot.slane %v37, 7
    %v174 = vsel %vm157, %v172, %v173
    %v175 = vrot.slane %v38, 7
    %v176 = vrot.slane %v39, 7
    %v177 = vsel %vm157, %v175, %v176
    %v178 = vrot.slane %v40, 7
    %v179 = vrot.slane %v41, 7
    %v180 = vsel %vm157, %v178, %v179
    %v181 = vrot.slane %v42, 7
    %v182 = vrot.slane %v43, 7
    %v183 = vsel %vm157, %v181, %v182
    %v184 = vrot.slane %v44, 7
    %v185 = vrot.slane %v45, 7
    %v186 = vsel %vm157, %v184, %v185
    %v187 = vrot.slane %v46, 7
    %v188 = vrot.slane %v47, 7
    %v189 = vsel %vm157, %v187, %v188
    %v190 = vrot.slane %v48, 7
    %v191 = vrot.slane %v49, 7
    %v192 = vsel %vm157, %v190, %v191
    %v193 = vrot.slane %v50, 7
    %v194 = vrot.slane %v51, 7
    %v195 = vsel %vm157, %v193, %v194
    %v196 = vrot.slane %v52, 7
    %v197 = vrot.slane %v53, 7
    %v198 = vsel %vm157, %v196, %v197
    %v199 = vrot.slane %v54, 7
    %v200 = vrot.slane %v55, 7
    %v201 = vsel %vm157, %v199, %v200
    %v202 = vrot.slane %v56, 7
    %v203 = vrot.slane %v57, 7
    %v204 = vsel %vm157, %v202, %v203
    %v205 = vrot.slane %v58, 7
    %v206 = vrot.slane %v59, 7
    %v207 = vsel %vm157, %v205, %v206
    %v208 = vrot.slane %v60, 7
    %v209 = vrot.slane %v61, 7
    %v210 = vsel %vm157, %v208, %v209
    %v211 = vrot.slane %v62, 7
    %v212 = vrot.slane %v63, 7
    %v213 = vsel %vm157, %v211, %v212
    %v214 = vrot.slane %v64, 7
    %v215 = vrot.slane %v65, 7
    %v216 = vsel %vm157, %v214, %v215
    %v217 = vrot.slane %v66, 7
    %v218 = vrot.slane %v67, 7
    %v219 = vsel %vm157, %v217, %v218
    %v220 = vrot.slane %v68, 7
    %v221 = vrot.slane %v69, 7
    %v222 = vsel %vm157, %v220, %v221
    %v223 = vrot.slane %v70, 7
    %v224 = vrot.slane %v71, 7
    %v225 = vsel %vm157, %v223, %v224
    %v226 = vrot.slane %v72, 7
    %v227 = vrot.slane %v73, 7
    %v228 = vsel %vm157, %v226, %v227
    %v229 = vrot.slane %v74, 7
    %v230 = vrot.slane %v75, 7
    %v231 = vsel %vm157, %v229, %v230
    %v232 = vrot.slane %v76, 7
    %v233 = vrot.slane %v77, 7
    %v234 = vsel %vm157, %v232, %v233
    %v235 = vrot.slane %v78, 7
    %v236 = vrot.slane %v79, 7
    %v237 = vsel %vm157, %v235, %v236
    %v238 = vrot.slane %v80, 7
    %v239 = vrot.slane %v81, 7
    %v240 = vsel %vm157, %v238, %v239
    %v241 = vrot.slane %v82, 7
    %v242 = vrot.slane %v83, 7
    %v243 = vsel %vm157, %v241, %v242
    %v244 = vrot.slane %v84, 7
    %v245 = vrot.slane %v85, 7
    %v246 = vsel %vm157, %v244, %v245
    %v247 = vrot.slane %v86, 7
    %v248 = vrot.slane %v87, 7
    %v249 = vsel %vm157, %v247, %v248
    %v250 = vrot.slane %v88, 7
    %v251 = vrot.slane %v89, 7
    %v252 = vsel %vm157, %v250, %v251
    %v253 = vrot.slane %v90, 7
    %v254 = vrot.slane %v91, 7
    %v255 = vsel %vm157, %v253, %v254
    %v352 = vsel %vm157, 0.0, %v158
    %v353 = vsel %vm157, 0.0, %v160
    %v354 = vsel %vm157, 0.0, %v163
    %v355 = vsel %vm157, 0.0, %v166
    %v356 = vsel %vm157, 0.0, %v169
    %v357 = vsel %vm157, 0.0, %v172
    %v358 = vsel %vm157, 0.0, %v175
    %v359 = vsel %vm157, 0.0, %v178
    %v360 = vsel %vm157, 0.0, %v181
    %v361 = vsel %vm157, 0.0, %v184
    %v362 = vsel %vm157, 0.0, %v187
    %v363 = vsel %vm157, 0.0, %v190
    %v364 = vsel %vm157, 0.0, %v193
    %v365 = vsel %vm157, 0.0, %v196
    %v366 = vsel %vm157, 0.0, %v199
    %v367 = vsel %vm157, 0.0, %v202
    %v368 = vsel %vm157, 0.0, %v205
    %v369 = vsel %vm157, 0.0, %v208
    %v370 = vsel %vm157, 0.0, %v211
    %v371 = vsel %vm157, 0.0, %v214
    %v372 = vsel %vm157, 0.0, %v217
    %v373 = vsel %vm157, 0.0, %v220
    %v374 = vsel %vm157, 0.0, %v223
    %v375 = vsel %vm157, 0.0, %v226
    %v376 = vsel %vm157, 0.0, %v229
    %v377 = vsel %vm157, 0.0, %v232
    %v378 = vsel %vm157, 0.0, %v235
    %v379 = vsel %vm157, 0.0, %v238
    %v380 = vsel %vm157, 0.0, %v241
    %v381 = vsel %vm157, 0.0, %v244
    %v382 = vsel %vm157, 0.0, %v247
    %v383 = vsel %vm157, 0.0, %v250
    %v384 = vsel %vm157, 0.0, %v253
    %v385 = vsel %vm157, %v158, 0.0
    %v386 = vsel %vm157, %v161, 0.0
    %v387 = vsel %vm157, %v164, 0.0
    %v388 = vsel %vm157, %v167, 0.0
    %v389 = vsel %vm157, %v170, 0.0
    %v390 = vsel %vm157, %v173, 0.0
    %v391 = vsel %vm157, %v176, 0.0
    %v392 = vsel %vm157, %v179, 0.0
    %v393 = vsel %vm157, %v182, 0.0
    %v394 = vsel %vm157, %v185, 0.0
    %v395 = vsel %vm157, %v188, 0.0
    %v396 = vsel %vm157, %v191, 0.0
    %v397 = vsel %vm157, %v194, 0.0
    %v398 = vsel %vm157, %v197, 0.0
    %v399 = vsel %vm157, %v200, 0.0
    %v400 = vsel %vm157, %v203, 0.0
    %v401 = vsel %vm157, %v206, 0.0
    %v402 = vsel %vm157, %v209, 0.0
    %v403 = vsel %vm157, %v212, 0.0
    %v404 = vsel %vm157, %v215, 0.0
    %v405 = vsel %vm157, %v218, 0.0
    %v406 = vsel %vm157, %v221, 0.0
    %v407 = vsel %vm157, %v224, 0.0
    %v408 = vsel %vm157, %v227, 0.0
    %v409 = vsel %vm157, %v230, 0.0
    %v410 = vsel %vm157, %v233, 0.0
    %v411 = vsel %vm157, %v236, 0.0
    %v412 = vsel %vm157, %v239, 0.0
    %v413 = vsel %vm157, %v242, 0.0
    %v414 = vsel %vm157, %v245, 0.0
    %v415 = vsel %vm157, %v248, 0.0
    %v416 = vsel %vm157, %v251, 0.0
    %v417 = vsel %vm157, %v254, 0.0
    %vm480 = vcmask 1046528
    %v481 = vrot.slane %v352, 1
    %v482 = vrot.slane %v159, 1
    %v483 = vsel %vm480, %v481, %v482
    %v484 = vrot.slane %v385, 1
    %v485 = vsel %vm480, %v482, %v484
    %v486 = vrot.slane %v353, 1
    %v487 = vrot.slane %v162, 1
    %v488 = vsel %vm480, %v486, %v487
    %v489 = vrot.slane %v386, 1
    %v490 = vsel %vm480, %v487, %v489
    %v491 = vrot.slane %v354, 1
    %v492 = vrot.slane %v165, 1
    %v493 = vsel %vm480, %v491, %v492
    %v494 = vrot.slane %v387, 1
    %v495 = vsel %vm480, %v492, %v494
    %v496 = vrot.slane %v355, 1
    %v497 = vrot.slane %v168, 1
    %v498 = vsel %vm480, %v496, %v497
    %v499 = vrot.slane %v388, 1
    %v500 = vsel %vm480, %v497, %v499
    %v501 = vrot.slane %v356, 1
    %v502 = vrot.slane %v171, 1
    %v503 = vsel %vm480, %v501, %v502
    %v504 = vrot.slane %v389, 1
    %v505 = vsel %vm480, %v502, %v504
    %v506 = vrot.slane %v357, 1
    %v507 = vrot.slane %v174, 1
    %v508 = vsel %vm480, %v506, %v507
    %v509 = vrot.slane %v390, 1
    %v510 = vsel %vm480, %v507, %v509
    %v511 = vrot.slane %v358, 1
    %v512 = vrot.slane %v177, 1
    %v513 = vsel %vm480, %v511, %v512
    %v514 = vrot.slane %v391, 1
    %v515 = vsel %vm480, %v512, %v514
    %v516 = vrot.slane %v359, 1
    %v517 = vrot.slane %v180, 1
    %v518 = vsel %vm480, %v516, %v517
    %v519 = vrot.slane %v392, 1
    %v520 = vsel %vm480, %v517, %v519
    %v521 = vrot.slane %v360, 1
    %v522 = vrot.slane %v183, 1
    %v523 = vsel %vm480, %v521, %v522
    %v524 = vrot.slane %v393, 1
    %v525 = vsel %vm480, %v522, %v524
    %v526 = vrot.slane %v361, 1
    %v527 = vrot.slane %v186, 1
    %v528 = vsel %vm480, %v526, %v527
    %v529 = vrot.slane %v394, 1
    %v530 = vsel %vm480, %v527, %v529
    %v531 = vrot.slane %v362, 1
    %v532 = vrot.slane %v189, 1
    %v533 = vsel %vm480, %v531, %v532
    %v534 = vrot.slane %v395, 1
    %v535 = vsel %vm480, %v532, %v534
    %v536 = vrot.slane %v363, 1
    %v537 = vrot.slane %v192, 1
    %v538 = vsel %vm480, %v536, %v537
    %v539 = vrot.slane %v396, 1
    %v540 = vsel %vm480, %v537, %v539
    %v541 = vrot.slane %v364, 1
    %v542 = vrot.slane %v195, 1
    %v543 = vsel %vm480, %v541, %v542
    %v544 = vrot.slane %v397, 1
    %v545 = vsel %vm480, %v542, %v544
    %v546 = vrot.slane %v365, 1
    %v547 = vrot.slane %v198, 1
    %v548 = vsel %vm480, %v546, %v547
    %v549 = vrot.slane %v398, 1
    %v550 = vsel %vm480, %v547, %v549
    %v551 = vrot.slane %v366, 1
    %v552 = vrot.slane %v201, 1
    %v553 = vsel %vm480, %v551, %v552
    %v554 = vrot.slane %v399, 1
    %v555 = vsel %vm480, %v552, %v554
    %v556 = vrot.slane %v367, 1
    %v557 = vrot.slane %v204, 1
    %v558 = vsel %vm480, %v556, %v557
    %v559 = vrot.slane %v400, 1
    %v560 = vsel %vm480, %v557, %v559
    %v561 = vrot.slane %v369, 1
    %v562 = vrot.slane %v210, 1
    %v563 = vsel %vm480, %v561, %v562
    %v564 = vrot.slane %v402, 1
    %v565 = vsel %vm480, %v562, %v564
    %v566 = vrot.slane %v370, 1
    %v567 = vrot.slane %v213, 1
    %v568 = vsel %vm480, %v566, %v567
    %v569 = vrot.slane %v403, 1
    %v570 = vsel %vm480, %v567, %v569
    %v571 = vrot.slane %v371, 1
    %v572 = vrot.slane %v216, 1
    %v573 = vsel %vm480, %v571, %v572
    %v574 = vrot.slane %v404, 1
    %v575 = vsel %vm480, %v572, %v574
    %v576 = vrot.slane %v372, 1
    %v577 = vrot.slane %v219, 1
    %v578 = vsel %vm480, %v576, %v577
    %v579 = vrot.slane %v405, 1
    %v580 = vsel %vm480, %v577, %v579
    %v581 = vrot.slane %v373, 1
    %v582 = vrot.slane %v222, 1
    %v583 = vsel %vm480, %v581, %v582
    %v584 = vrot.slane %v406, 1
    %v585 = vsel %vm480, %v582, %v584
    %v586 = vrot.slane %v374, 1
    %v587 = vrot.slane %v225, 1
    %v588 = vsel %vm480, %v586, %v587
    %v589 = vrot.slane %v407, 1
    %v590 = vsel %vm480, %v587, %v589
    %v591 = vrot.slane %v375, 1
    %v592 = vrot.slane %v228, 1
    %v593 = vsel %vm480, %v591, %v592
    %v594 = vrot.slane %v408, 1
    %v595 = vsel %vm480, %v592, %v594
    %v596 = vrot.slane %v376, 1
    %v597 = vrot.slane %v231, 1
    %v598 = vsel %vm480, %v596, %v597
    %v599 = vrot.slane %v409, 1
    %v600 = vsel %vm480, %v597, %v599
    %v601 = vrot.slane %v377, 1
    %v602 = vrot.slane %v234, 1
    %v603 = vsel %vm480, %v601, %v602
    %v604 = vrot.slane %v410, 1
    %v605 = vsel %vm480, %v602, %v604
    %v606 = vrot.slane %v378, 1
    %v607 = vrot.slane %v237, 1
    %v608 = vsel %vm480, %v606, %v607
    %v609 = vrot.slane %v411, 1
    %v610 = vsel %vm480, %v607, %v609
    %v611 = vrot.slane %v379, 1
    %v612 = vrot.slane %v240, 1
    %v613 = vsel %vm480, %v611, %v612
    %v614 = vrot.slane %v412, 1
    %v615 = vsel %vm480, %v612, %v614
    %v616 = vrot.slane %v380, 1
    %v617 = vrot.slane %v243, 1
    %v618 = vsel %vm480, %v616, %v617
    %v619 = vrot.slane %v413, 1
    %v620 = vsel %vm480, %v617, %v619
    %v621 = vrot.slane %v381, 1
    %v622 = vrot.slane %v246, 1
    %v623 = vsel %vm480, %v621, %v622
    %v624 = vrot.slane %v414, 1
    %v625 = vsel %vm480, %v622, %v624
    %v626 = vrot.slane %v382, 1
    %v627 = vrot.slane %v249, 1
    %v628 = vsel %vm480, %v626, %v627
    %v629 = vrot.slane %v415, 1
    %v630 = vsel %vm480, %v627, %v629
    %v631 = vrot.slane %v383, 1
    %v632 = vrot.slane %v252, 1
    %v633 = vsel %vm480, %v631, %v632
    %v634 = vrot.slane %v416, 1
    %v635 = vsel %vm480, %v632, %v634
    %636 = vrot.lane.b32.xlu0 %v483, 4
    %v637 = vpop.permute.xlu0 %636
    %638 = vrot.lane.b32.xlu0 %v485, 4
    %v639 = vpop.permute.xlu0 %638
    %640 = vrot.lane.b32.xlu0 %v488, 4
    %v641 = vpop.permute.xlu0 %640
    %642 = vrot.lane.b32.xlu0 %v490, 4
    %v643 = vpop.permute.xlu0 %642
    %644 = vrot.lane.b32.xlu0 %v493, 4
    %v645 = vpop.permute.xlu0 %644
    %646 = vrot.lane.b32.xlu0 %v495, 4
    %v647 = vpop.permute.xlu0 %646
    %648 = vrot.lane.b32.xlu0 %v498, 4
    %v649 = vpop.permute.xlu0 %648
    %650 = vrot.lane.b32.xlu0 %v500, 4
    %v651 = vpop.permute.xlu0 %650
    %652 = vrot.lane.b32.xlu0 %v503, 4
    %v653 = vpop.permute.xlu0 %652
    %654 = vrot.lane.b32.xlu0 %v505, 4
    %v655 = vpop.permute.xlu0 %654
    %656 = vrot.lane.b32.xlu0 %v508, 4
    %v657 = vpop.permute.xlu0 %656
    %658 = vrot.lane.b32.xlu0 %v510, 4
    %v659 = vpop.permute.xlu0 %658
    %660 = vrot.lane.b32.xlu0 %v513, 4
    %v661 = vpop.permute.xlu0 %660
    %662 = vrot.lane.b32.xlu0 %v515, 4
    %v663 = vpop.permute.xlu0 %662
    %664 = vrot.lane.b32.xlu0 %v518, 4
    %v665 = vpop.permute.xlu0 %664
    %666 = vrot.lane.b32.xlu0 %v520, 4
    %v667 = vpop.permute.xlu0 %666
    %668 = vrot.lane.b32.xlu0 %v523, 4
    %v669 = vpop.permute.xlu0 %668
    %670 = vrot.lane.b32.xlu0 %v525, 4
    %v671 = vpop.permute.xlu0 %670
    %672 = vrot.lane.b32.xlu0 %v528, 4
    %v673 = vpop.permute.xlu0 %672
    %674 = vrot.lane.b32.xlu0 %v530, 4
    %v675 = vpop.permute.xlu0 %674
    %676 = vrot.lane.b32.xlu0 %v533, 4
    %v677 = vpop.permute.xlu0 %676
    %678 = vrot.lane.b32.xlu0 %v535, 4
    %v679 = vpop.permute.xlu0 %678
    %680 = vrot.lane.b32.xlu0 %v538, 4
    %v681 = vpop.permute.xlu0 %680
    %682 = vrot.lane.b32.xlu0 %v540, 4
    %v683 = vpop.permute.xlu0 %682
    %684 = vrot.lane.b32.xlu0 %v543, 4
    %v685 = vpop.permute.xlu0 %684
    %686 = vrot.lane.b32.xlu0 %v545, 4
    %v687 = vpop.permute.xlu0 %686
    %688 = vrot.lane.b32.xlu0 %v548, 4
    %v689 = vpop.permute.xlu0 %688
    %690 = vrot.lane.b32.xlu0 %v550, 4
    %v691 = vpop.permute.xlu0 %690
    %692 = vrot.lane.b32.xlu0 %v553, 4
    %v693 = vpop.permute.xlu0 %692
    %694 = vrot.lane.b32.xlu0 %v555, 4
    %v695 = vpop.permute.xlu0 %694
    %696 = vrot.lane.b32.xlu0 %v558, 4
    %v697 = vpop.permute.xlu0 %696
    %698 = vrot.lane.b32.xlu0 %v560, 4
    %v699 = vpop.permute.xlu0 %698
    %700 = vrot.lane.b32.xlu0 %v563, 4
    %v701 = vpop.permute.xlu0 %700
    %702 = vrot.lane.b32.xlu0 %v565, 4
    %v703 = vpop.permute.xlu0 %702
    %704 = vrot.lane.b32.xlu0 %v568, 4
    %v705 = vpop.permute.xlu0 %704
    %706 = vrot.lane.b32.xlu0 %v570, 4
    %v707 = vpop.permute.xlu0 %706
    %708 = vrot.lane.b32.xlu0 %v573, 4
    %v709 = vpop.permute.xlu0 %708
    %710 = vrot.lane.b32.xlu0 %v575, 4
    %v711 = vpop.permute.xlu0 %710
    %712 = vrot.lane.b32.xlu0 %v578, 4
    %v713 = vpop.permute.xlu0 %712
    %714 = vrot.lane.b32.xlu0 %v580, 4
    %v715 = vpop.permute.xlu0 %714
    %716 = vrot.lane.b32.xlu0 %v583, 4
    %v717 = vpop.permute.xlu0 %716
    %718 = vrot.lane.b32.xlu0 %v585, 4
    %v719 = vpop.permute.xlu0 %718
    %720 = vrot.lane.b32.xlu0 %v588, 4
    %v721 = vpop.permute.xlu0 %720
    %722 = vrot.lane.b32.xlu0 %v590, 4
    %v723 = vpop.permute.xlu0 %722
    %724 = vrot.lane.b32.xlu0 %v593, 4
    %v725 = vpop.permute.xlu0 %724
    %726 = vrot.lane.b32.xlu0 %v595, 4
    %v727 = vpop.permute.xlu0 %726
    %728 = vrot.lane.b32.xlu0 %v598, 4
    %v729 = vpop.permute.xlu0 %728
    %730 = vrot.lane.b32.xlu0 %v600, 4
    %v731 = vpop.permute.xlu0 %730
    %732 = vrot.lane.b32.xlu0 %v603, 4
    %v733 = vpop.permute.xlu0 %732
    %734 = vrot.lane.b32.xlu0 %v605, 4
    %v735 = vpop.permute.xlu0 %734
    %736 = vrot.lane.b32.xlu0 %v608, 4
    %v737 = vpop.permute.xlu0 %736
    %738 = vrot.lane.b32.xlu0 %v610, 4
    %v739 = vpop.permute.xlu0 %738
    %740 = vrot.lane.b32.xlu0 %v613, 4
    %v741 = vpop.permute.xlu0 %740
    %742 = vrot.lane.b32.xlu0 %v615, 4
    %v743 = vpop.permute.xlu0 %742
    %744 = vrot.lane.b32.xlu0 %v618, 4
    %v745 = vpop.permute.xlu0 %744
    %746 = vrot.lane.b32.xlu0 %v620, 4
    %v747 = vpop.permute.xlu0 %746
    %748 = vrot.lane.b32.xlu0 %v623, 4
    %v749 = vpop.permute.xlu0 %748
    %750 = vrot.lane.b32.xlu0 %v625, 4
    %v751 = vpop.permute.xlu0 %750
    %752 = vrot.lane.b32.xlu0 %v628, 4
    %v753 = vpop.permute.xlu0 %752
    %754 = vrot.lane.b32.xlu0 %v630, 4
    %v755 = vpop.permute.xlu0 %754
    %756 = vrot.lane.b32.xlu0 %v633, 4
    %v757 = vpop.permute.xlu0 %756
    %758 = vrot.lane.b32.xlu0 %v635, 4
    %v759 = vpop.permute.xlu0 %758
    %vm822 = vcmask 1045504
    %v823 = vrot.slane %v352, 2
    %v824 = vrot.slane %v159, 2
    %v825 = vsel %vm822, %v823, %v824
    %v826 = vrot.slane %v385, 2
    %v827 = vsel %vm822, %v824, %v826
    %v828 = vrot.slane %v353, 2
    %v829 = vrot.slane %v162, 2
    %v830 = vsel %vm822, %v828, %v829
    %v831 = vrot.slane %v386, 2
    %v832 = vsel %vm822, %v829, %v831
    %v833 = vrot.slane %v354, 2
    %v834 = vrot.slane %v165, 2
    %v835 = vsel %vm822, %v833, %v834
    %v836 = vrot.slane %v387, 2
    %v837 = vsel %vm822, %v834, %v836
    %v838 = vrot.slane %v355, 2
    %v839 = vrot.slane %v168, 2
    %v840 = vsel %vm822, %v838, %v839
    %v841 = vrot.slane %v388, 2
    %v842 = vsel %vm822, %v839, %v841
    %v843 = vrot.slane %v356, 2
    %v844 = vrot.slane %v171, 2
    %v845 = vsel %vm822, %v843, %v844
    %v846 = vrot.slane %v389, 2
    %v847 = vsel %vm822, %v844, %v846
    %v848 = vrot.slane %v357, 2
    %v849 = vrot.slane %v174, 2
    %v850 = vsel %vm822, %v848, %v849
    %v851 = vrot.slane %v390, 2
    %v852 = vsel %vm822, %v849, %v851
    %v853 = vrot.slane %v358, 2
    %v854 = vrot.slane %v177, 2
    %v855 = vsel %vm822, %v853, %v854
    %v856 = vrot.slane %v391, 2
    %v857 = vsel %vm822, %v854, %v856
    %v858 = vrot.slane %v359, 2
    %v859 = vrot.slane %v180, 2
    %v860 = vsel %vm822, %v858, %v859
    %v861 = vrot.slane %v392, 2
    %v862 = vsel %vm822, %v859, %v861
    %v863 = vrot.slane %v360, 2
    %v864 = vrot.slane %v183, 2
    %v865 = vsel %vm822, %v863, %v864
    %v866 = vrot.slane %v393, 2
    %v867 = vsel %vm822, %v864, %v866
    %v868 = vrot.slane %v361, 2
    %v869 = vrot.slane %v186, 2
    %v870 = vsel %vm822, %v868, %v869
    %v871 = vrot.slane %v394, 2
    %v872 = vsel %vm822, %v869, %v871
    %v873 = vrot.slane %v362, 2
    %v874 = vrot.slane %v189, 2
    %v875 = vsel %vm822, %v873, %v874
    %v876 = vrot.slane %v395, 2
    %v877 = vsel %vm822, %v874, %v876
    %v878 = vrot.slane %v363, 2
    %v879 = vrot.slane %v192, 2
    %v880 = vsel %vm822, %v878, %v879
    %v881 = vrot.slane %v396, 2
    %v882 = vsel %vm822, %v879, %v881
    %v883 = vrot.slane %v364, 2
    %v884 = vrot.slane %v195, 2
    %v885 = vsel %vm822, %v883, %v884
    %v886 = vrot.slane %v397, 2
    %v887 = vsel %vm822, %v884, %v886
    %v888 = vrot.slane %v365, 2
    %v889 = vrot.slane %v198, 2
    %v890 = vsel %vm822, %v888, %v889
    %v891 = vrot.slane %v398, 2
    %v892 = vsel %vm822, %v889, %v891
    %v893 = vrot.slane %v366, 2
    %v894 = vrot.slane %v201, 2
    %v895 = vsel %vm822, %v893, %v894
    %v896 = vrot.slane %v399, 2
    %v897 = vsel %vm822, %v894, %v896
    %v898 = vrot.slane %v367, 2
    %v899 = vrot.slane %v204, 2
    %v900 = vsel %vm822, %v898, %v899
    %v901 = vrot.slane %v400, 2
    %v902 = vsel %vm822, %v899, %v901
    %v903 = vrot.slane %v369, 2
    %v904 = vrot.slane %v210, 2
    %v905 = vsel %vm822, %v903, %v904
    %v906 = vrot.slane %v402, 2
    %v907 = vsel %vm822, %v904, %v906
    %v908 = vrot.slane %v370, 2
    %v909 = vrot.slane %v213, 2
    %v910 = vsel %vm822, %v908, %v909
    %v911 = vrot.slane %v403, 2
    %v912 = vsel %vm822, %v909, %v911
    %v913 = vrot.slane %v371, 2
    %v914 = vrot.slane %v216, 2
    %v915 = vsel %vm822, %v913, %v914
    %v916 = vrot.slane %v404, 2
    %v917 = vsel %vm822, %v914, %v916
    %v918 = vrot.slane %v372, 2
    %v919 = vrot.slane %v219, 2
    %v920 = vsel %vm822, %v918, %v919
    %v921 = vrot.slane %v405, 2
    %v922 = vsel %vm822, %v919, %v921
    %v923 = vrot.slane %v373, 2
    %v924 = vrot.slane %v222, 2
    %v925 = vsel %vm822, %v923, %v924
    %v926 = vrot.slane %v406, 2
    %v927 = vsel %vm822, %v924, %v926
    %v928 = vrot.slane %v374, 2
    %v929 = vrot.slane %v225, 2
    %v930 = vsel %vm822, %v928, %v929
    %v931 = vrot.slane %v407, 2
    %v932 = vsel %vm822, %v929, %v931
    %v933 = vrot.slane %v375, 2
    %v934 = vrot.slane %v228, 2
    %v935 = vsel %vm822, %v933, %v934
    %v936 = vrot.slane %v408, 2
    %v937 = vsel %vm822, %v934, %v936
    %v938 = vrot.slane %v376, 2
    %v939 = vrot.slane %v231, 2
    %v940 = vsel %vm822, %v938, %v939
    %v941 = vrot.slane %v409, 2
    %v942 = vsel %vm822, %v939, %v941
    %v943 = vrot.slane %v377, 2
    %v944 = vrot.slane %v234, 2
    %v945 = vsel %vm822, %v943, %v944
    %v946 = vrot.slane %v410, 2
    %v947 = vsel %vm822, %v944, %v946
    %v948 = vrot.slane %v378, 2
    %v949 = vrot.slane %v237, 2
    %v950 = vsel %vm822, %v948, %v949
    %v951 = vrot.slane %v411, 2
    %v952 = vsel %vm822, %v949, %v951
    %v953 = vrot.slane %v379, 2
    %v954 = vrot.slane %v240, 2
    %v955 = vsel %vm822, %v953, %v954
    %v956 = vrot.slane %v412, 2
    %v957 = vsel %vm822, %v954, %v956
    %v958 = vrot.slane %v380, 2
    %v959 = vrot.slane %v243, 2
    %v960 = vsel %vm822, %v958, %v959
    %v961 = vrot.slane %v413, 2
    %v962 = vsel %vm822, %v959, %v961
    %v963 = vrot.slane %v381, 2
    %v964 = vrot.slane %v246, 2
    %v965 = vsel %vm822, %v963, %v964
    %v966 = vrot.slane %v414, 2
    %v967 = vsel %vm822, %v964, %v966
    %v968 = vrot.slane %v382, 2
    %v969 = vrot.slane %v249, 2
    %v970 = vsel %vm822, %v968, %v969
    %v971 = vrot.slane %v415, 2
    %v972 = vsel %vm822, %v969, %v971
    %v973 = vrot.slane %v383, 2
    %v974 = vrot.slane %v252, 2
    %v975 = vsel %vm822, %v973, %v974
    %v976 = vrot.slane %v416, 2
    %v977 = vsel %vm822, %v974, %v976
    %978 = vrot.lane.b32.xlu0 %v825, 8
    %v979 = vpop.permute.xlu0 %978
    %980 = vrot.lane.b32.xlu0 %v827, 8
    %v981 = vpop.permute.xlu0 %980
    %982 = vrot.lane.b32.xlu0 %v830, 8
    %v983 = vpop.permute.xlu0 %982
    %984 = vrot.lane.b32.xlu0 %v832, 8
    %v985 = vpop.permute.xlu0 %984
    %986 = vrot.lane.b32.xlu0 %v835, 8
    %v987 = vpop.permute.xlu0 %986
    %988 = vrot.lane.b32.xlu0 %v837, 8
    %v989 = vpop.permute.xlu0 %988
    %990 = vrot.lane.b32.xlu0 %v840, 8
    %v991 = vpop.permute.xlu0 %990
    %992 = vrot.lane.b32.xlu0 %v842, 8
    %v993 = vpop.permute.xlu0 %992
    %994 = vrot.lane.b32.xlu0 %v845, 8
    %v995 = vpop.permute.xlu0 %994
    %996 = vrot.lane.b32.xlu0 %v847, 8
    %v997 = vpop.permute.xlu0 %996
    %998 = vrot.lane.b32.xlu0 %v850, 8
    %v999 = vpop.permute.xlu0 %998
    %1000 = vrot.lane.b32.xlu0 %v852, 8
    %v1001 = vpop.permute.xlu0 %1000
    %1002 = vrot.lane.b32.xlu0 %v855, 8
    %v1003 = vpop.permute.xlu0 %1002
    %1004 = vrot.lane.b32.xlu0 %v857, 8
    %v1005 = vpop.permute.xlu0 %1004
    %1006 = vrot.lane.b32.xlu0 %v860, 8
    %v1007 = vpop.permute.xlu0 %1006
    %1008 = vrot.lane.b32.xlu0 %v862, 8
    %v1009 = vpop.permute.xlu0 %1008
    %1010 = vrot.lane.b32.xlu0 %v865, 8
    %v1011 = vpop.permute.xlu0 %1010
    %1012 = vrot.lane.b32.xlu0 %v867, 8
    %v1013 = vpop.permute.xlu0 %1012
    %1014 = vrot.lane.b32.xlu0 %v870, 8
    %v1015 = vpop.permute.xlu0 %1014
    %1016 = vrot.lane.b32.xlu0 %v872, 8
    %v1017 = vpop.permute.xlu0 %1016
    %1018 = vrot.lane.b32.xlu0 %v875, 8
    %v1019 = vpop.permute.xlu0 %1018
    %1020 = vrot.lane.b32.xlu0 %v877, 8
    %v1021 = vpop.permute.xlu0 %1020
    %1022 = vrot.lane.b32.xlu0 %v880, 8
    %v1023 = vpop.permute.xlu0 %1022
    %1024 = vrot.lane.b32.xlu0 %v882, 8
    %v1025 = vpop.permute.xlu0 %1024
    %1026 = vrot.lane.b32.xlu0 %v885, 8
    %v1027 = vpop.permute.xlu0 %1026
    %1028 = vrot.lane.b32.xlu0 %v887, 8
    %v1029 = vpop.permute.xlu0 %1028
    %1030 = vrot.lane.b32.xlu0 %v890, 8
    %v1031 = vpop.permute.xlu0 %1030
    %1032 = vrot.lane.b32.xlu0 %v892, 8
    %v1033 = vpop.permute.xlu0 %1032
    %1034 = vrot.lane.b32.xlu0 %v895, 8
    %v1035 = vpop.permute.xlu0 %1034
    %1036 = vrot.lane.b32.xlu0 %v897, 8
    %v1037 = vpop.permute.xlu0 %1036
    %1038 = vrot.lane.b32.xlu0 %v900, 8
    %v1039 = vpop.permute.xlu0 %1038
    %1040 = vrot.lane.b32.xlu0 %v902, 8
    %v1041 = vpop.permute.xlu0 %1040
    %1042 = vrot.lane.b32.xlu0 %v905, 8
    %v1043 = vpop.permute.xlu0 %1042
    %1044 = vrot.lane.b32.xlu0 %v907, 8
    %v1045 = vpop.permute.xlu0 %1044
    %1046 = vrot.lane.b32.xlu0 %v910, 8
    %v1047 = vpop.permute.xlu0 %1046
    %1048 = vrot.lane.b32.xlu0 %v912, 8
    %v1049 = vpop.permute.xlu0 %1048
    %1050 = vrot.lane.b32.xlu0 %v915, 8
    %v1051 = vpop.permute.xlu0 %1050
    %1052 = vrot.lane.b32.xlu0 %v917, 8
    %v1053 = vpop.permute.xlu0 %1052
    %1054 = vrot.lane.b32.xlu0 %v920, 8
    %v1055 = vpop.permute.xlu0 %1054
    %1056 = vrot.lane.b32.xlu0 %v922, 8
    %v1057 = vpop.permute.xlu0 %1056
    %1058 = vrot.lane.b32.xlu0 %v925, 8
    %v1059 = vpop.permute.xlu0 %1058
    %1060 = vrot.lane.b32.xlu0 %v927, 8
    %v1061 = vpop.permute.xlu0 %1060
    %1062 = vrot.lane.b32.xlu0 %v930, 8
    %v1063 = vpop.permute.xlu0 %1062
    %1064 = vrot.lane.b32.xlu0 %v932, 8
    %v1065 = vpop.permute.xlu0 %1064
    %1066 = vrot.lane.b32.xlu0 %v935, 8
    %v1067 = vpop.permute.xlu0 %1066
    %1068 = vrot.lane.b32.xlu0 %v937, 8
    %v1069 = vpop.permute.xlu0 %1068
    %1070 = vrot.lane.b32.xlu0 %v940, 8
    %v1071 = vpop.permute.xlu0 %1070
    %1072 = vrot.lane.b32.xlu0 %v942, 8
    %v1073 = vpop.permute.xlu0 %1072
    %1074 = vrot.lane.b32.xlu0 %v945, 8
    %v1075 = vpop.permute.xlu0 %1074
    %1076 = vrot.lane.b32.xlu0 %v947, 8
    %v1077 = vpop.permute.xlu0 %1076
    %1078 = vrot.lane.b32.xlu0 %v950, 8
    %v1079 = vpop.permute.xlu0 %1078
    %1080 = vrot.lane.b32.xlu0 %v952, 8
    %v1081 = vpop.permute.xlu0 %1080
    %1082 = vrot.lane.b32.xlu0 %v955, 8
    %v1083 = vpop.permute.xlu0 %1082
    %1084 = vrot.lane.b32.xlu0 %v957, 8
    %v1085 = vpop.permute.xlu0 %1084
    %1086 = vrot.lane.b32.xlu0 %v960, 8
    %v1087 = vpop.permute.xlu0 %1086
    %1088 = vrot.lane.b32.xlu0 %v962, 8
    %v1089 = vpop.permute.xlu0 %1088
    %1090 = vrot.lane.b32.xlu0 %v965, 8
    %v1091 = vpop.permute.xlu0 %1090
    %1092 = vrot.lane.b32.xlu0 %v967, 8
    %v1093 = vpop.permute.xlu0 %1092
    %1094 = vrot.lane.b32.xlu0 %v970, 8
    %v1095 = vpop.permute.xlu0 %1094
    %1096 = vrot.lane.b32.xlu0 %v972, 8
    %v1097 = vpop.permute.xlu0 %1096
    %1098 = vrot.lane.b32.xlu0 %v975, 8
    %v1099 = vpop.permute.xlu0 %1098
    %1100 = vrot.lane.b32.xlu0 %v977, 8
    %v1101 = vpop.permute.xlu0 %1100
    %1166 = vrot.lane.b32.xlu0 %v353, 12
    %v1167 = vpop.permute.xlu0 %1166
    %1168 = vrot.lane.b32.xlu0 %v162, 12
    %v1169 = vpop.permute.xlu0 %1168
    %1170 = vrot.lane.b32.xlu0 %v354, 12
    %v1171 = vpop.permute.xlu0 %1170
    %1172 = vrot.lane.b32.xlu0 %v165, 12
    %v1173 = vpop.permute.xlu0 %1172
    %1174 = vrot.lane.b32.xlu0 %v355, 12
    %v1175 = vpop.permute.xlu0 %1174
    %1176 = vrot.lane.b32.xlu0 %v168, 12
    %v1177 = vpop.permute.xlu0 %1176
    %1178 = vrot.lane.b32.xlu0 %v356, 12
    %v1179 = vpop.permute.xlu0 %1178
    %1180 = vrot.lane.b32.xlu0 %v171, 12
    %v1181 = vpop.permute.xlu0 %1180
    %1182 = vrot.lane.b32.xlu0 %v357, 12
    %v1183 = vpop.permute.xlu0 %1182
    %1184 = vrot.lane.b32.xlu0 %v174, 12
    %v1185 = vpop.permute.xlu0 %1184
    %1186 = vrot.lane.b32.xlu0 %v358, 12
    %v1187 = vpop.permute.xlu0 %1186
    %1188 = vrot.lane.b32.xlu0 %v177, 12
    %v1189 = vpop.permute.xlu0 %1188
    %1190 = vrot.lane.b32.xlu0 %v359, 12
    %v1191 = vpop.permute.xlu0 %1190
    %1192 = vrot.lane.b32.xlu0 %v180, 12
    %v1193 = vpop.permute.xlu0 %1192
    %1194 = vrot.lane.b32.xlu0 %v360, 12
    %v1195 = vpop.permute.xlu0 %1194
    %1196 = vrot.lane.b32.xlu0 %v183, 12
    %v1197 = vpop.permute.xlu0 %1196
    %1198 = vrot.lane.b32.xlu0 %v361, 12
    %v1199 = vpop.permute.xlu0 %1198
    %1200 = vrot.lane.b32.xlu0 %v186, 12
    %v1201 = vpop.permute.xlu0 %1200
    %1202 = vrot.lane.b32.xlu0 %v362, 12
    %v1203 = vpop.permute.xlu0 %1202
    %1204 = vrot.lane.b32.xlu0 %v189, 12
    %v1205 = vpop.permute.xlu0 %1204
    %1206 = vrot.lane.b32.xlu0 %v363, 12
    %v1207 = vpop.permute.xlu0 %1206
    %1208 = vrot.lane.b32.xlu0 %v192, 12
    %v1209 = vpop.permute.xlu0 %1208
    %1210 = vrot.lane.b32.xlu0 %v364, 12
    %v1211 = vpop.permute.xlu0 %1210
    %1212 = vrot.lane.b32.xlu0 %v195, 12
    %v1213 = vpop.permute.xlu0 %1212
    %1214 = vrot.lane.b32.xlu0 %v365, 12
    %v1215 = vpop.permute.xlu0 %1214
    %1216 = vrot.lane.b32.xlu0 %v198, 12
    %v1217 = vpop.permute.xlu0 %1216
    %1218 = vrot.lane.b32.xlu0 %v366, 12
    %v1219 = vpop.permute.xlu0 %1218
    %1220 = vrot.lane.b32.xlu0 %v201, 12
    %v1221 = vpop.permute.xlu0 %1220
    %1222 = vrot.lane.b32.xlu0 %v367, 12
    %v1223 = vpop.permute.xlu0 %1222
    %1224 = vrot.lane.b32.xlu0 %v204, 12
    %v1225 = vpop.permute.xlu0 %1224
    %1226 = vrot.lane.b32.xlu0 %v368, 12
    %v1227 = vpop.permute.xlu0 %1226
    %1228 = vrot.lane.b32.xlu0 %v207, 12
    %v1229 = vpop.permute.xlu0 %1228
    %1230 = vrot.lane.b32.xlu0 %v369, 12
    %v1231 = vpop.permute.xlu0 %1230
    %1232 = vrot.lane.b32.xlu0 %v210, 12
    %v1233 = vpop.permute.xlu0 %1232
    %1234 = vrot.lane.b32.xlu0 %v370, 12
    %v1235 = vpop.permute.xlu0 %1234
    %1236 = vrot.lane.b32.xlu0 %v213, 12
    %v1237 = vpop.permute.xlu0 %1236
    %1238 = vrot.lane.b32.xlu0 %v371, 12
    %v1239 = vpop.permute.xlu0 %1238
    %1240 = vrot.lane.b32.xlu0 %v216, 12
    %v1241 = vpop.permute.xlu0 %1240
    %1242 = vrot.lane.b32.xlu0 %v372, 12
    %v1243 = vpop.permute.xlu0 %1242
    %1244 = vrot.lane.b32.xlu0 %v219, 12
    %v1245 = vpop.permute.xlu0 %1244
    %1246 = vrot.lane.b32.xlu0 %v373, 12
    %v1247 = vpop.permute.xlu0 %1246
    %1248 = vrot.lane.b32.xlu0 %v222, 12
    %v1249 = vpop.permute.xlu0 %1248
    %1250 = vrot.lane.b32.xlu0 %v374, 12
    %v1251 = vpop.permute.xlu0 %1250
    %1252 = vrot.lane.b32.xlu0 %v225, 12
    %v1253 = vpop.permute.xlu0 %1252
    %1254 = vrot.lane.b32.xlu0 %v375, 12
    %v1255 = vpop.permute.xlu0 %1254
    %1256 = vrot.lane.b32.xlu0 %v228, 12
    %v1257 = vpop.permute.xlu0 %1256
    %1258 = vrot.lane.b32.xlu0 %v376, 12
    %v1259 = vpop.permute.xlu0 %1258
    %1260 = vrot.lane.b32.xlu0 %v231, 12
    %v1261 = vpop.permute.xlu0 %1260
    %1262 = vrot.lane.b32.xlu0 %v377, 12
    %v1263 = vpop.permute.xlu0 %1262
    %1264 = vrot.lane.b32.xlu0 %v234, 12
    %v1265 = vpop.permute.xlu0 %1264
    %1266 = vrot.lane.b32.xlu0 %v378, 12
    %v1267 = vpop.permute.xlu0 %1266
    %1268 = vrot.lane.b32.xlu0 %v237, 12
    %v1269 = vpop.permute.xlu0 %1268
    %1270 = vrot.lane.b32.xlu0 %v379, 12
    %v1271 = vpop.permute.xlu0 %1270
    %1272 = vrot.lane.b32.xlu0 %v240, 12
    %v1273 = vpop.permute.xlu0 %1272
    %1274 = vrot.lane.b32.xlu0 %v380, 12
    %v1275 = vpop.permute.xlu0 %1274
    %1276 = vrot.lane.b32.xlu0 %v243, 12
    %v1277 = vpop.permute.xlu0 %1276
    %1278 = vrot.lane.b32.xlu0 %v381, 12
    %v1279 = vpop.permute.xlu0 %1278
    %1280 = vrot.lane.b32.xlu0 %v246, 12
    %v1281 = vpop.permute.xlu0 %1280
    %1282 = vrot.lane.b32.xlu0 %v382, 12
    %v1283 = vpop.permute.xlu0 %1282
    %1284 = vrot.lane.b32.xlu0 %v249, 12
    %v1285 = vpop.permute.xlu0 %1284
    %1286 = vrot.lane.b32.xlu0 %v383, 12
    %v1287 = vpop.permute.xlu0 %1286
    %1288 = vrot.lane.b32.xlu0 %v252, 12
    %v1289 = vpop.permute.xlu0 %1288
    %1290 = vrot.lane.b32.xlu0 %v384, 12
    %v1291 = vpop.permute.xlu0 %1290
    %1292 = vrot.lane.b32.xlu0 %v255, 12
    %v1293 = vpop.permute.xlu0 %1292
    %v1360 = vrot.slane %v368, 1
    %v1361 = vrot.slane %v207, 1
    %v1362 = vsel %vm480, %v1360, %v1361
    %v1363 = vrot.slane %v401, 1
    %v1364 = vsel %vm480, %v1361, %v1363
    %v1365 = vrot.slane %v384, 1
    %v1366 = vrot.slane %v255, 1
    %v1367 = vsel %vm480, %v1365, %v1366
    %v1368 = vrot.slane %v417, 1
    %v1369 = vsel %vm480, %v1366, %v1368
    %1370 = vrot.lane.b32.xlu0 %v488, 16
    %v1371 = vpop.permute.xlu0 %1370
    %1372 = vrot.lane.b32.xlu0 %v490, 16
    %v1373 = vpop.permute.xlu0 %1372
    %1374 = vrot.lane.b32.xlu0 %v493, 16
    %v1375 = vpop.permute.xlu0 %1374
    %1376 = vrot.lane.b32.xlu0 %v495, 16
    %v1377 = vpop.permute.xlu0 %1376
    %1378 = vrot.lane.b32.xlu0 %v498, 16
    %v1379 = vpop.permute.xlu0 %1378
    %1380 = vrot.lane.b32.xlu0 %v500, 16
    %v1381 = vpop.permute.xlu0 %1380
    %1382 = vrot.lane.b32.xlu0 %v503, 16
    %v1383 = vpop.permute.xlu0 %1382
    %1384 = vrot.lane.b32.xlu0 %v505, 16
    %v1385 = vpop.permute.xlu0 %1384
    %1386 = vrot.lane.b32.xlu0 %v508, 16
    %v1387 = vpop.permute.xlu0 %1386
    %1388 = vrot.lane.b32.xlu0 %v510, 16
    %v1389 = vpop.permute.xlu0 %1388
    %1390 = vrot.lane.b32.xlu0 %v513, 16
    %v1391 = vpop.permute.xlu0 %1390
    %1392 = vrot.lane.b32.xlu0 %v515, 16
    %v1393 = vpop.permute.xlu0 %1392
    %1394 = vrot.lane.b32.xlu0 %v518, 16
    %v1395 = vpop.permute.xlu0 %1394
    %1396 = vrot.lane.b32.xlu0 %v520, 16
    %v1397 = vpop.permute.xlu0 %1396
    %1398 = vrot.lane.b32.xlu0 %v523, 16
    %v1399 = vpop.permute.xlu0 %1398
    %1400 = vrot.lane.b32.xlu0 %v525, 16
    %v1401 = vpop.permute.xlu0 %1400
    %1402 = vrot.lane.b32.xlu0 %v528, 16
    %v1403 = vpop.permute.xlu0 %1402
    %1404 = vrot.lane.b32.xlu0 %v530, 16
    %v1405 = vpop.permute.xlu0 %1404
    %1406 = vrot.lane.b32.xlu0 %v533, 16
    %v1407 = vpop.permute.xlu0 %1406
    %1408 = vrot.lane.b32.xlu0 %v535, 16
    %v1409 = vpop.permute.xlu0 %1408
    %1410 = vrot.lane.b32.xlu0 %v538, 16
    %v1411 = vpop.permute.xlu0 %1410
    %1412 = vrot.lane.b32.xlu0 %v540, 16
    %v1413 = vpop.permute.xlu0 %1412
    %1414 = vrot.lane.b32.xlu0 %v543, 16
    %v1415 = vpop.permute.xlu0 %1414
    %1416 = vrot.lane.b32.xlu0 %v545, 16
    %v1417 = vpop.permute.xlu0 %1416
    %1418 = vrot.lane.b32.xlu0 %v548, 16
    %v1419 = vpop.permute.xlu0 %1418
    %1420 = vrot.lane.b32.xlu0 %v550, 16
    %v1421 = vpop.permute.xlu0 %1420
    %1422 = vrot.lane.b32.xlu0 %v553, 16
    %v1423 = vpop.permute.xlu0 %1422
    %1424 = vrot.lane.b32.xlu0 %v555, 16
    %v1425 = vpop.permute.xlu0 %1424
    %1426 = vrot.lane.b32.xlu0 %v558, 16
    %v1427 = vpop.permute.xlu0 %1426
    %1428 = vrot.lane.b32.xlu0 %v560, 16
    %v1429 = vpop.permute.xlu0 %1428
    %1430 = vrot.lane.b32.xlu0 %v1362, 16
    %v1431 = vpop.permute.xlu0 %1430
    %1432 = vrot.lane.b32.xlu0 %v1364, 16
    %v1433 = vpop.permute.xlu0 %1432
    %1434 = vrot.lane.b32.xlu0 %v563, 16
    %v1435 = vpop.permute.xlu0 %1434
    %1436 = vrot.lane.b32.xlu0 %v565, 16
    %v1437 = vpop.permute.xlu0 %1436
    %1438 = vrot.lane.b32.xlu0 %v568, 16
    %v1439 = vpop.permute.xlu0 %1438
    %1440 = vrot.lane.b32.xlu0 %v570, 16
    %v1441 = vpop.permute.xlu0 %1440
    %1442 = vrot.lane.b32.xlu0 %v573, 16
    %v1443 = vpop.permute.xlu0 %1442
    %1444 = vrot.lane.b32.xlu0 %v575, 16
    %v1445 = vpop.permute.xlu0 %1444
    %1446 = vrot.lane.b32.xlu0 %v578, 16
    %v1447 = vpop.permute.xlu0 %1446
    %1448 = vrot.lane.b32.xlu0 %v580, 16
    %v1449 = vpop.permute.xlu0 %1448
    %1450 = vrot.lane.b32.xlu0 %v583, 16
    %v1451 = vpop.permute.xlu0 %1450
    %1452 = vrot.lane.b32.xlu0 %v585, 16
    %v1453 = vpop.permute.xlu0 %1452
    %1454 = vrot.lane.b32.xlu0 %v588, 16
    %v1455 = vpop.permute.xlu0 %1454
    %1456 = vrot.lane.b32.xlu0 %v590, 16
    %v1457 = vpop.permute.xlu0 %1456
    %1458 = vrot.lane.b32.xlu0 %v593, 16
    %v1459 = vpop.permute.xlu0 %1458
    %1460 = vrot.lane.b32.xlu0 %v595, 16
    %v1461 = vpop.permute.xlu0 %1460
    %1462 = vrot.lane.b32.xlu0 %v598, 16
    %v1463 = vpop.permute.xlu0 %1462
    %1464 = vrot.lane.b32.xlu0 %v600, 16
    %v1465 = vpop.permute.xlu0 %1464
    %1466 = vrot.lane.b32.xlu0 %v603, 16
    %v1467 = vpop.permute.xlu0 %1466
    %1468 = vrot.lane.b32.xlu0 %v605, 16
    %v1469 = vpop.permute.xlu0 %1468
    %1470 = vrot.lane.b32.xlu0 %v608, 16
    %v1471 = vpop.permute.xlu0 %1470
    %1472 = vrot.lane.b32.xlu0 %v610, 16
    %v1473 = vpop.permute.xlu0 %1472
    %1474 = vrot.lane.b32.xlu0 %v613, 16
    %v1475 = vpop.permute.xlu0 %1474
    %1476 = vrot.lane.b32.xlu0 %v615, 16
    %v1477 = vpop.permute.xlu0 %1476
    %1478 = vrot.lane.b32.xlu0 %v618, 16
    %v1479 = vpop.permute.xlu0 %1478
    %1480 = vrot.lane.b32.xlu0 %v620, 16
    %v1481 = vpop.permute.xlu0 %1480
    %1482 = vrot.lane.b32.xlu0 %v623, 16
    %v1483 = vpop.permute.xlu0 %1482
    %1484 = vrot.lane.b32.xlu0 %v625, 16
    %v1485 = vpop.permute.xlu0 %1484
    %1486 = vrot.lane.b32.xlu0 %v628, 16
    %v1487 = vpop.permute.xlu0 %1486
    %1488 = vrot.lane.b32.xlu0 %v630, 16
    %v1489 = vpop.permute.xlu0 %1488
    %1490 = vrot.lane.b32.xlu0 %v633, 16
    %v1491 = vpop.permute.xlu0 %1490
    %1492 = vrot.lane.b32.xlu0 %v635, 16
    %v1493 = vpop.permute.xlu0 %1492
    %1494 = vrot.lane.b32.xlu0 %v1367, 16
    %v1495 = vpop.permute.xlu0 %1494
    %1496 = vrot.lane.b32.xlu0 %v1369, 16
    %v1497 = vpop.permute.xlu0 %1496
    %v1562 = vrot.slane %v368, 2
    %v1563 = vrot.slane %v207, 2
    %v1564 = vsel %vm822, %v1562, %v1563
    %v1565 = vrot.slane %v401, 2
    %v1566 = vsel %vm822, %v1563, %v1565
    %v1567 = vrot.slane %v384, 2
    %v1568 = vrot.slane %v255, 2
    %v1569 = vsel %vm822, %v1567, %v1568
    %v1570 = vrot.slane %v417, 2
    %v1571 = vsel %vm822, %v1568, %v1570
    %1572 = vrot.lane.b32.xlu0 %v830, 20
    %v1573 = vpop.permute.xlu0 %1572
    %1574 = vrot.lane.b32.xlu0 %v832, 20
    %v1575 = vpop.permute.xlu0 %1574
    %1576 = vrot.lane.b32.xlu0 %v835, 20
    %v1577 = vpop.permute.xlu0 %1576
    %1578 = vrot.lane.b32.xlu0 %v837, 20
    %v1579 = vpop.permute.xlu0 %1578
    %1580 = vrot.lane.b32.xlu0 %v840, 20
    %v1581 = vpop.permute.xlu0 %1580
    %1582 = vrot.lane.b32.xlu0 %v842, 20
    %v1583 = vpop.permute.xlu0 %1582
    %1584 = vrot.lane.b32.xlu0 %v845, 20
    %v1585 = vpop.permute.xlu0 %1584
    %1586 = vrot.lane.b32.xlu0 %v847, 20
    %v1587 = vpop.permute.xlu0 %1586
    %1588 = vrot.lane.b32.xlu0 %v850, 20
    %v1589 = vpop.permute.xlu0 %1588
    %1590 = vrot.lane.b32.xlu0 %v852, 20
    %v1591 = vpop.permute.xlu0 %1590
    %1592 = vrot.lane.b32.xlu0 %v855, 20
    %v1593 = vpop.permute.xlu0 %1592
    %1594 = vrot.lane.b32.xlu0 %v857, 20
    %v1595 = vpop.permute.xlu0 %1594
    %1596 = vrot.lane.b32.xlu0 %v860, 20
    %v1597 = vpop.permute.xlu0 %1596
    %1598 = vrot.lane.b32.xlu0 %v862, 20
    %v1599 = vpop.permute.xlu0 %1598
    %1600 = vrot.lane.b32.xlu0 %v865, 20
    %v1601 = vpop.permute.xlu0 %1600
    %1602 = vrot.lane.b32.xlu0 %v867, 20
    %v1603 = vpop.permute.xlu0 %1602
    %1604 = vrot.lane.b32.xlu0 %v870, 20
    %v1605 = vpop.permute.xlu0 %1604
    %1606 = vrot.lane.b32.xlu0 %v872, 20
    %v1607 = vpop.permute.xlu0 %1606
    %1608 = vrot.lane.b32.xlu0 %v875, 20
    %v1609 = vpop.permute.xlu0 %1608
    %1610 = vrot.lane.b32.xlu0 %v877, 20
    %v1611 = vpop.permute.xlu0 %1610
    %1612 = vrot.lane.b32.xlu0 %v880, 20
    %v1613 = vpop.permute.xlu0 %1612
    %1614 = vrot.lane.b32.xlu0 %v882, 20
    %v1615 = vpop.permute.xlu0 %1614
    %1616 = vrot.lane.b32.xlu0 %v885, 20
    %v1617 = vpop.permute.xlu0 %1616
    %1618 = vrot.lane.b32.xlu0 %v887, 20
    %v1619 = vpop.permute.xlu0 %1618
    %1620 = vrot.lane.b32.xlu0 %v890, 20
    %v1621 = vpop.permute.xlu0 %1620
    %1622 = vrot.lane.b32.xlu0 %v892, 20
    %v1623 = vpop.permute.xlu0 %1622
    %1624 = vrot.lane.b32.xlu0 %v895, 20
    %v1625 = vpop.permute.xlu0 %1624
    %1626 = vrot.lane.b32.xlu0 %v897, 20
    %v1627 = vpop.permute.xlu0 %1626
    %1628 = vrot.lane.b32.xlu0 %v900, 20
    %v1629 = vpop.permute.xlu0 %1628
    %1630 = vrot.lane.b32.xlu0 %v902, 20
    %v1631 = vpop.permute.xlu0 %1630
    %1632 = vrot.lane.b32.xlu0 %v1564, 20
    %v1633 = vpop.permute.xlu0 %1632
    %1634 = vrot.lane.b32.xlu0 %v1566, 20
    %v1635 = vpop.permute.xlu0 %1634
    %1636 = vrot.lane.b32.xlu0 %v905, 20
    %v1637 = vpop.permute.xlu0 %1636
    %1638 = vrot.lane.b32.xlu0 %v907, 20
    %v1639 = vpop.permute.xlu0 %1638
    %1640 = vrot.lane.b32.xlu0 %v910, 20
    %v1641 = vpop.permute.xlu0 %1640
    %1642 = vrot.lane.b32.xlu0 %v912, 20
    %v1643 = vpop.permute.xlu0 %1642
    %1644 = vrot.lane.b32.xlu0 %v915, 20
    %v1645 = vpop.permute.xlu0 %1644
    %1646 = vrot.lane.b32.xlu0 %v917, 20
    %v1647 = vpop.permute.xlu0 %1646
    %1648 = vrot.lane.b32.xlu0 %v920, 20
    %v1649 = vpop.permute.xlu0 %1648
    %1650 = vrot.lane.b32.xlu0 %v922, 20
    %v1651 = vpop.permute.xlu0 %1650
    %1652 = vrot.lane.b32.xlu0 %v925, 20
    %v1653 = vpop.permute.xlu0 %1652
    %1654 = vrot.lane.b32.xlu0 %v927, 20
    %v1655 = vpop.permute.xlu0 %1654
    %1656 = vrot.lane.b32.xlu0 %v930, 20
    %v1657 = vpop.permute.xlu0 %1656
    %1658 = vrot.lane.b32.xlu0 %v932, 20
    %v1659 = vpop.permute.xlu0 %1658
    %1660 = vrot.lane.b32.xlu0 %v935, 20
    %v1661 = vpop.permute.xlu0 %1660
    %1662 = vrot.lane.b32.xlu0 %v937, 20
    %v1663 = vpop.permute.xlu0 %1662
    %1664 = vrot.lane.b32.xlu0 %v940, 20
    %v1665 = vpop.permute.xlu0 %1664
    %1666 = vrot.lane.b32.xlu0 %v942, 20
    %v1667 = vpop.permute.xlu0 %1666
    %1668 = vrot.lane.b32.xlu0 %v945, 20
    %v1669 = vpop.permute.xlu0 %1668
    %1670 = vrot.lane.b32.xlu0 %v947, 20
    %v1671 = vpop.permute.xlu0 %1670
    %1672 = vrot.lane.b32.xlu0 %v950, 20
    %v1673 = vpop.permute.xlu0 %1672
    %1674 = vrot.lane.b32.xlu0 %v952, 20
    %v1675 = vpop.permute.xlu0 %1674
    %1676 = vrot.lane.b32.xlu0 %v955, 20
    %v1677 = vpop.permute.xlu0 %1676
    %1678 = vrot.lane.b32.xlu0 %v957, 20
    %v1679 = vpop.permute.xlu0 %1678
    %1680 = vrot.lane.b32.xlu0 %v960, 20
    %v1681 = vpop.permute.xlu0 %1680
    %1682 = vrot.lane.b32.xlu0 %v962, 20
    %v1683 = vpop.permute.xlu0 %1682
    %1684 = vrot.lane.b32.xlu0 %v965, 20
    %v1685 = vpop.permute.xlu0 %1684
    %1686 = vrot.lane.b32.xlu0 %v967, 20
    %v1687 = vpop.permute.xlu0 %1686
    %1688 = vrot.lane.b32.xlu0 %v970, 20
    %v1689 = vpop.permute.xlu0 %1688
    %1690 = vrot.lane.b32.xlu0 %v972, 20
    %v1691 = vpop.permute.xlu0 %1690
    %1692 = vrot.lane.b32.xlu0 %v975, 20
    %v1693 = vpop.permute.xlu0 %1692
    %1694 = vrot.lane.b32.xlu0 %v977, 20
    %v1695 = vpop.permute.xlu0 %1694
    %1696 = vrot.lane.b32.xlu0 %v1569, 20
    %v1697 = vpop.permute.xlu0 %1696
    %1698 = vrot.lane.b32.xlu0 %v1571, 20
    %v1699 = vpop.permute.xlu0 %1698
    %1764 = vrot.lane.b32.xlu0 %v354, 24
    %v1765 = vpop.permute.xlu0 %1764
    %1766 = vrot.lane.b32.xlu0 %v165, 24
    %v1767 = vpop.permute.xlu0 %1766
    %1768 = vrot.lane.b32.xlu0 %v355, 24
    %v1769 = vpop.permute.xlu0 %1768
    %1770 = vrot.lane.b32.xlu0 %v168, 24
    %v1771 = vpop.permute.xlu0 %1770
    %1772 = vrot.lane.b32.xlu0 %v356, 24
    %v1773 = vpop.permute.xlu0 %1772
    %1774 = vrot.lane.b32.xlu0 %v171, 24
    %v1775 = vpop.permute.xlu0 %1774
    %1776 = vrot.lane.b32.xlu0 %v357, 24
    %v1777 = vpop.permute.xlu0 %1776
    %1778 = vrot.lane.b32.xlu0 %v174, 24
    %v1779 = vpop.permute.xlu0 %1778
    %1780 = vrot.lane.b32.xlu0 %v358, 24
    %v1781 = vpop.permute.xlu0 %1780
    %1782 = vrot.lane.b32.xlu0 %v177, 24
    %v1783 = vpop.permute.xlu0 %1782
    %1784 = vrot.lane.b32.xlu0 %v359, 24
    %v1785 = vpop.permute.xlu0 %1784
    %1786 = vrot.lane.b32.xlu0 %v180, 24
    %v1787 = vpop.permute.xlu0 %1786
    %1788 = vrot.lane.b32.xlu0 %v360, 24
    %v1789 = vpop.permute.xlu0 %1788
    %1790 = vrot.lane.b32.xlu0 %v183, 24
    %v1791 = vpop.permute.xlu0 %1790
    %1792 = vrot.lane.b32.xlu0 %v361, 24
    %v1793 = vpop.permute.xlu0 %1792
    %1794 = vrot.lane.b32.xlu0 %v186, 24
    %v1795 = vpop.permute.xlu0 %1794
    %1796 = vrot.lane.b32.xlu0 %v362, 24
    %v1797 = vpop.permute.xlu0 %1796
    %1798 = vrot.lane.b32.xlu0 %v189, 24
    %v1799 = vpop.permute.xlu0 %1798
    %1800 = vrot.lane.b32.xlu0 %v363, 24
    %v1801 = vpop.permute.xlu0 %1800
    %1802 = vrot.lane.b32.xlu0 %v192, 24
    %v1803 = vpop.permute.xlu0 %1802
    %1804 = vrot.lane.b32.xlu0 %v364, 24
    %v1805 = vpop.permute.xlu0 %1804
    %1806 = vrot.lane.b32.xlu0 %v195, 24
    %v1807 = vpop.permute.xlu0 %1806
    %1808 = vrot.lane.b32.xlu0 %v365, 24
    %v1809 = vpop.permute.xlu0 %1808
    %1810 = vrot.lane.b32.xlu0 %v198, 24
    %v1811 = vpop.permute.xlu0 %1810
    %1812 = vrot.lane.b32.xlu0 %v366, 24
    %v1813 = vpop.permute.xlu0 %1812
    %1814 = vrot.lane.b32.xlu0 %v201, 24
    %v1815 = vpop.permute.xlu0 %1814
    %1816 = vrot.lane.b32.xlu0 %v367, 24
    %v1817 = vpop.permute.xlu0 %1816
    %1818 = vrot.lane.b32.xlu0 %v204, 24
    %v1819 = vpop.permute.xlu0 %1818
    %1820 = vrot.lane.b32.xlu0 %v368, 24
    %v1821 = vpop.permute.xlu0 %1820
    %1822 = vrot.lane.b32.xlu0 %v207, 24
    %v1823 = vpop.permute.xlu0 %1822
    %1824 = vrot.lane.b32.xlu0 %v352, 24
    %v1825 = vpop.permute.xlu0 %1824
    %1826 = vrot.lane.b32.xlu0 %v159, 24
    %v1827 = vpop.permute.xlu0 %1826
    %1828 = vrot.lane.b32.xlu0 %v370, 24
    %v1829 = vpop.permute.xlu0 %1828
    %1830 = vrot.lane.b32.xlu0 %v213, 24
    %v1831 = vpop.permute.xlu0 %1830
    %1832 = vrot.lane.b32.xlu0 %v371, 24
    %v1833 = vpop.permute.xlu0 %1832
    %1834 = vrot.lane.b32.xlu0 %v216, 24
    %v1835 = vpop.permute.xlu0 %1834
    %1836 = vrot.lane.b32.xlu0 %v372, 24
    %v1837 = vpop.permute.xlu0 %1836
    %1838 = vrot.lane.b32.xlu0 %v219, 24
    %v1839 = vpop.permute.xlu0 %1838
    %1840 = vrot.lane.b32.xlu0 %v373, 24
    %v1841 = vpop.permute.xlu0 %1840
    %1842 = vrot.lane.b32.xlu0 %v222, 24
    %v1843 = vpop.permute.xlu0 %1842
    %1844 = vrot.lane.b32.xlu0 %v374, 24
    %v1845 = vpop.permute.xlu0 %1844
    %1846 = vrot.lane.b32.xlu0 %v225, 24
    %v1847 = vpop.permute.xlu0 %1846
    %1848 = vrot.lane.b32.xlu0 %v375, 24
    %v1849 = vpop.permute.xlu0 %1848
    %1850 = vrot.lane.b32.xlu0 %v228, 24
    %v1851 = vpop.permute.xlu0 %1850
    %1852 = vrot.lane.b32.xlu0 %v376, 24
    %v1853 = vpop.permute.xlu0 %1852
    %1854 = vrot.lane.b32.xlu0 %v231, 24
    %v1855 = vpop.permute.xlu0 %1854
    %1856 = vrot.lane.b32.xlu0 %v377, 24
    %v1857 = vpop.permute.xlu0 %1856
    %1858 = vrot.lane.b32.xlu0 %v234, 24
    %v1859 = vpop.permute.xlu0 %1858
    %1860 = vrot.lane.b32.xlu0 %v378, 24
    %v1861 = vpop.permute.xlu0 %1860
    %1862 = vrot.lane.b32.xlu0 %v237, 24
    %v1863 = vpop.permute.xlu0 %1862
    %1864 = vrot.lane.b32.xlu0 %v379, 24
    %v1865 = vpop.permute.xlu0 %1864
    %1866 = vrot.lane.b32.xlu0 %v240, 24
    %v1867 = vpop.permute.xlu0 %1866
    %1868 = vrot.lane.b32.xlu0 %v380, 24
    %v1869 = vpop.permute.xlu0 %1868
    %1870 = vrot.lane.b32.xlu0 %v243, 24
    %v1871 = vpop.permute.xlu0 %1870
    %1872 = vrot.lane.b32.xlu0 %v381, 24
    %v1873 = vpop.permute.xlu0 %1872
    %1874 = vrot.lane.b32.xlu0 %v246, 24
    %v1875 = vpop.permute.xlu0 %1874
    %1876 = vrot.lane.b32.xlu0 %v382, 24
    %v1877 = vpop.permute.xlu0 %1876
    %1878 = vrot.lane.b32.xlu0 %v249, 24
    %v1879 = vpop.permute.xlu0 %1878
    %1880 = vrot.lane.b32.xlu0 %v383, 24
    %v1881 = vpop.permute.xlu0 %1880
    %1882 = vrot.lane.b32.xlu0 %v252, 24
    %v1883 = vpop.permute.xlu0 %1882
    %1884 = vrot.lane.b32.xlu0 %v384, 24
    %v1885 = vpop.permute.xlu0 %1884
    %1886 = vrot.lane.b32.xlu0 %v255, 24
    %v1887 = vpop.permute.xlu0 %1886
    %1950 = vrot.lane.b32.xlu0 %v493, 28
    %v1951 = vpop.permute.xlu0 %1950
    %1952 = vrot.lane.b32.xlu0 %v495, 28
    %v1953 = vpop.permute.xlu0 %1952
    %1954 = vrot.lane.b32.xlu0 %v498, 28
    %v1955 = vpop.permute.xlu0 %1954
    %1956 = vrot.lane.b32.xlu0 %v500, 28
    %v1957 = vpop.permute.xlu0 %1956
    %1958 = vrot.lane.b32.xlu0 %v503, 28
    %v1959 = vpop.permute.xlu0 %1958
    %1960 = vrot.lane.b32.xlu0 %v505, 28
    %v1961 = vpop.permute.xlu0 %1960
    %1962 = vrot.lane.b32.xlu0 %v508, 28
    %v1963 = vpop.permute.xlu0 %1962
    %1964 = vrot.lane.b32.xlu0 %v510, 28
    %v1965 = vpop.permute.xlu0 %1964
    %1966 = vrot.lane.b32.xlu0 %v513, 28
    %v1967 = vpop.permute.xlu0 %1966
    %1968 = vrot.lane.b32.xlu0 %v515, 28
    %v1969 = vpop.permute.xlu0 %1968
    %1970 = vrot.lane.b32.xlu0 %v518, 28
    %v1971 = vpop.permute.xlu0 %1970
    %1972 = vrot.lane.b32.xlu0 %v520, 28
    %v1973 = vpop.permute.xlu0 %1972
    %1974 = vrot.lane.b32.xlu0 %v523, 28
    %v1975 = vpop.permute.xlu0 %1974
    %1976 = vrot.lane.b32.xlu0 %v525, 28
    %v1977 = vpop.permute.xlu0 %1976
    %1978 = vrot.lane.b32.xlu0 %v528, 28
    %v1979 = vpop.permute.xlu0 %1978
    %1980 = vrot.lane.b32.xlu0 %v530, 28
    %v1981 = vpop.permute.xlu0 %1980
    %1982 = vrot.lane.b32.xlu0 %v533, 28
    %v1983 = vpop.permute.xlu0 %1982
    %1984 = vrot.lane.b32.xlu0 %v535, 28
    %v1985 = vpop.permute.xlu0 %1984
    %1986 = vrot.lane.b32.xlu0 %v538, 28
    %v1987 = vpop.permute.xlu0 %1986
    %1988 = vrot.lane.b32.xlu0 %v540, 28
    %v1989 = vpop.permute.xlu0 %1988
    %1990 = vrot.lane.b32.xlu0 %v543, 28
    %v1991 = vpop.permute.xlu0 %1990
    %1992 = vrot.lane.b32.xlu0 %v545, 28
    %v1993 = vpop.permute.xlu0 %1992
    %1994 = vrot.lane.b32.xlu0 %v548, 28
    %v1995 = vpop.permute.xlu0 %1994
    %1996 = vrot.lane.b32.xlu0 %v550, 28
    %v1997 = vpop.permute.xlu0 %1996
    %1998 = vrot.lane.b32.xlu0 %v553, 28
    %v1999 = vpop.permute.xlu0 %1998
    %2000 = vrot.lane.b32.xlu0 %v555, 28
    %v2001 = vpop.permute.xlu0 %2000
    %2002 = vrot.lane.b32.xlu0 %v558, 28
    %v2003 = vpop.permute.xlu0 %2002
    %2004 = vrot.lane.b32.xlu0 %v560, 28
    %v2005 = vpop.permute.xlu0 %2004
    %2006 = vrot.lane.b32.xlu0 %v1362, 28
    %v2007 = vpop.permute.xlu0 %2006
    %2008 = vrot.lane.b32.xlu0 %v1364, 28
    %v2009 = vpop.permute.xlu0 %2008
    %2010 = vrot.lane.b32.xlu0 %v483, 28
    %v2011 = vpop.permute.xlu0 %2010
    %2012 = vrot.lane.b32.xlu0 %v485, 28
    %v2013 = vpop.permute.xlu0 %2012
    %2014 = vrot.lane.b32.xlu0 %v568, 28
    %v2015 = vpop.permute.xlu0 %2014
    %2016 = vrot.lane.b32.xlu0 %v570, 28
    %v2017 = vpop.permute.xlu0 %2016
    %2018 = vrot.lane.b32.xlu0 %v573, 28
    %v2019 = vpop.permute.xlu0 %2018
    %2020 = vrot.lane.b32.xlu0 %v575, 28
    %v2021 = vpop.permute.xlu0 %2020
    %2022 = vrot.lane.b32.xlu0 %v578, 28
    %v2023 = vpop.permute.xlu0 %2022
    %2024 = vrot.lane.b32.xlu0 %v580, 28
    %v2025 = vpop.permute.xlu0 %2024
    %2026 = vrot.lane.b32.xlu0 %v583, 28
    %v2027 = vpop.permute.xlu0 %2026
    %2028 = vrot.lane.b32.xlu0 %v585, 28
    %v2029 = vpop.permute.xlu0 %2028
    %2030 = vrot.lane.b32.xlu0 %v588, 28
    %v2031 = vpop.permute.xlu0 %2030
    %2032 = vrot.lane.b32.xlu0 %v590, 28
    %v2033 = vpop.permute.xlu0 %2032
    %2034 = vrot.lane.b32.xlu0 %v593, 28
    %v2035 = vpop.permute.xlu0 %2034
    %2036 = vrot.lane.b32.xlu0 %v595, 28
    %v2037 = vpop.permute.xlu0 %2036
    %2038 = vrot.lane.b32.xlu0 %v598, 28
    %v2039 = vpop.permute.xlu0 %2038
    %2040 = vrot.lane.b32.xlu0 %v600, 28
    %v2041 = vpop.permute.xlu0 %2040
    %2042 = vrot.lane.b32.xlu0 %v603, 28
    %v2043 = vpop.permute.xlu0 %2042
    %2044 = vrot.lane.b32.xlu0 %v605, 28
    %v2045 = vpop.permute.xlu0 %2044
    %2046 = vrot.lane.b32.xlu0 %v608, 28
    %v2047 = vpop.permute.xlu0 %2046
    %2048 = vrot.lane.b32.xlu0 %v610, 28
    %v2049 = vpop.permute.xlu0 %2048
    %2050 = vrot.lane.b32.xlu0 %v613, 28
    %v2051 = vpop.permute.xlu0 %2050
    %2052 = vrot.lane.b32.xlu0 %v615, 28
    %v2053 = vpop.permute.xlu0 %2052
    %2054 = vrot.lane.b32.xlu0 %v618, 28
    %v2055 = vpop.permute.xlu0 %2054
    %2056 = vrot.lane.b32.xlu0 %v620, 28
    %v2057 = vpop.permute.xlu0 %2056
    %2058 = vrot.lane.b32.xlu0 %v623, 28
    %v2059 = vpop.permute.xlu0 %2058
    %2060 = vrot.lane.b32.xlu0 %v625, 28
    %v2061 = vpop.permute.xlu0 %2060
    %2062 = vrot.lane.b32.xlu0 %v628, 28
    %v2063 = vpop.permute.xlu0 %2062
    %2064 = vrot.lane.b32.xlu0 %v630, 28
    %v2065 = vpop.permute.xlu0 %2064
    %2066 = vrot.lane.b32.xlu0 %v633, 28
    %v2067 = vpop.permute.xlu0 %2066
    %2068 = vrot.lane.b32.xlu0 %v635, 28
    %v2069 = vpop.permute.xlu0 %2068
    %2070 = vrot.lane.b32.xlu0 %v1367, 28
    %v2071 = vpop.permute.xlu0 %2070
    %2072 = vrot.lane.b32.xlu0 %v1369, 28
    %v2073 = vpop.permute.xlu0 %2072
    %2136 = vrot.lane.b32.xlu0 %v835, 32
    %v2137 = vpop.permute.xlu0 %2136
    %2138 = vrot.lane.b32.xlu0 %v837, 32
    %v2139 = vpop.permute.xlu0 %2138
    %2140 = vrot.lane.b32.xlu0 %v840, 32
    %v2141 = vpop.permute.xlu0 %2140
    %2142 = vrot.lane.b32.xlu0 %v842, 32
    %v2143 = vpop.permute.xlu0 %2142
    %2144 = vrot.lane.b32.xlu0 %v845, 32
    %v2145 = vpop.permute.xlu0 %2144
    %2146 = vrot.lane.b32.xlu0 %v847, 32
    %v2147 = vpop.permute.xlu0 %2146
    %2148 = vrot.lane.b32.xlu0 %v850, 32
    %v2149 = vpop.permute.xlu0 %2148
    %2150 = vrot.lane.b32.xlu0 %v852, 32
    %v2151 = vpop.permute.xlu0 %2150
    %2152 = vrot.lane.b32.xlu0 %v855, 32
    %v2153 = vpop.permute.xlu0 %2152
    %2154 = vrot.lane.b32.xlu0 %v857, 32
    %v2155 = vpop.permute.xlu0 %2154
    %2156 = vrot.lane.b32.xlu0 %v860, 32
    %v2157 = vpop.permute.xlu0 %2156
    %2158 = vrot.lane.b32.xlu0 %v862, 32
    %v2159 = vpop.permute.xlu0 %2158
    %2160 = vrot.lane.b32.xlu0 %v865, 32
    %v2161 = vpop.permute.xlu0 %2160
    %2162 = vrot.lane.b32.xlu0 %v867, 32
    %v2163 = vpop.permute.xlu0 %2162
    %2164 = vrot.lane.b32.xlu0 %v870, 32
    %v2165 = vpop.permute.xlu0 %2164
    %2166 = vrot.lane.b32.xlu0 %v872, 32
    %v2167 = vpop.permute.xlu0 %2166
    %2168 = vrot.lane.b32.xlu0 %v875, 32
    %v2169 = vpop.permute.xlu0 %2168
    %2170 = vrot.lane.b32.xlu0 %v877, 32
    %v2171 = vpop.permute.xlu0 %2170
    %2172 = vrot.lane.b32.xlu0 %v880, 32
    %v2173 = vpop.permute.xlu0 %2172
    %2174 = vrot.lane.b32.xlu0 %v882, 32
    %v2175 = vpop.permute.xlu0 %2174
    %2176 = vrot.lane.b32.xlu0 %v885, 32
    %v2177 = vpop.permute.xlu0 %2176
    %2178 = vrot.lane.b32.xlu0 %v887, 32
    %v2179 = vpop.permute.xlu0 %2178
    %2180 = vrot.lane.b32.xlu0 %v890, 32
    %v2181 = vpop.permute.xlu0 %2180
    %2182 = vrot.lane.b32.xlu0 %v892, 32
    %v2183 = vpop.permute.xlu0 %2182
    %2184 = vrot.lane.b32.xlu0 %v895, 32
    %v2185 = vpop.permute.xlu0 %2184
    %2186 = vrot.lane.b32.xlu0 %v897, 32
    %v2187 = vpop.permute.xlu0 %2186
    %2188 = vrot.lane.b32.xlu0 %v900, 32
    %v2189 = vpop.permute.xlu0 %2188
    %2190 = vrot.lane.b32.xlu0 %v902, 32
    %v2191 = vpop.permute.xlu0 %2190
    %2192 = vrot.lane.b32.xlu0 %v1564, 32
    %v2193 = vpop.permute.xlu0 %2192
    %2194 = vrot.lane.b32.xlu0 %v1566, 32
    %v2195 = vpop.permute.xlu0 %2194
    %2196 = vrot.lane.b32.xlu0 %v825, 32
    %v2197 = vpop.permute.xlu0 %2196
    %2198 = vrot.lane.b32.xlu0 %v827, 32
    %v2199 = vpop.permute.xlu0 %2198
    %2200 = vrot.lane.b32.xlu0 %v910, 32
    %v2201 = vpop.permute.xlu0 %2200
    %2202 = vrot.lane.b32.xlu0 %v912, 32
    %v2203 = vpop.permute.xlu0 %2202
    %2204 = vrot.lane.b32.xlu0 %v915, 32
    %v2205 = vpop.permute.xlu0 %2204
    %2206 = vrot.lane.b32.xlu0 %v917, 32
    %v2207 = vpop.permute.xlu0 %2206
    %2208 = vrot.lane.b32.xlu0 %v920, 32
    %v2209 = vpop.permute.xlu0 %2208
    %2210 = vrot.lane.b32.xlu0 %v922, 32
    %v2211 = vpop.permute.xlu0 %2210
    %2212 = vrot.lane.b32.xlu0 %v925, 32
    %v2213 = vpop.permute.xlu0 %2212
    %2214 = vrot.lane.b32.xlu0 %v927, 32
    %v2215 = vpop.permute.xlu0 %2214
    %2216 = vrot.lane.b32.xlu0 %v930, 32
    %v2217 = vpop.permute.xlu0 %2216
    %2218 = vrot.lane.b32.xlu0 %v932, 32
    %v2219 = vpop.permute.xlu0 %2218
    %2220 = vrot.lane.b32.xlu0 %v935, 32
    %v2221 = vpop.permute.xlu0 %2220
    %2222 = vrot.lane.b32.xlu0 %v937, 32
    %v2223 = vpop.permute.xlu0 %2222
    %2224 = vrot.lane.b32.xlu0 %v940, 32
    %v2225 = vpop.permute.xlu0 %2224
    %2226 = vrot.lane.b32.xlu0 %v942, 32
    %v2227 = vpop.permute.xlu0 %2226
    %2228 = vrot.lane.b32.xlu0 %v945, 32
    %v2229 = vpop.permute.xlu0 %2228
    %2230 = vrot.lane.b32.xlu0 %v947, 32
    %v2231 = vpop.permute.xlu0 %2230
    %2232 = vrot.lane.b32.xlu0 %v950, 32
    %v2233 = vpop.permute.xlu0 %2232
    %2234 = vrot.lane.b32.xlu0 %v952, 32
    %v2235 = vpop.permute.xlu0 %2234
    %2236 = vrot.lane.b32.xlu0 %v955, 32
    %v2237 = vpop.permute.xlu0 %2236
    %2238 = vrot.lane.b32.xlu0 %v957, 32
    %v2239 = vpop.permute.xlu0 %2238
    %2240 = vrot.lane.b32.xlu0 %v960, 32
    %v2241 = vpop.permute.xlu0 %2240
    %2242 = vrot.lane.b32.xlu0 %v962, 32
    %v2243 = vpop.permute.xlu0 %2242
    %2244 = vrot.lane.b32.xlu0 %v965, 32
    %v2245 = vpop.permute.xlu0 %2244
    %2246 = vrot.lane.b32.xlu0 %v967, 32
    %v2247 = vpop.permute.xlu0 %2246
    %2248 = vrot.lane.b32.xlu0 %v970, 32
    %v2249 = vpop.permute.xlu0 %2248
    %2250 = vrot.lane.b32.xlu0 %v972, 32
    %v2251 = vpop.permute.xlu0 %2250
    %2252 = vrot.lane.b32.xlu0 %v975, 32
    %v2253 = vpop.permute.xlu0 %2252
    %2254 = vrot.lane.b32.xlu0 %v977, 32
    %v2255 = vpop.permute.xlu0 %2254
    %2256 = vrot.lane.b32.xlu0 %v1569, 32
    %v2257 = vpop.permute.xlu0 %2256
    %2258 = vrot.lane.b32.xlu0 %v1571, 32
    %v2259 = vpop.permute.xlu0 %2258
    %vm2322 = vcmask 31744
    %v2323 = vsel %vm2322, %v352, %v637
    %v2324 = vsel %vm2322, %v159, %v639
    %v2325 = vsel %vm2322, %v353, %v641
    %v2326 = vsel %vm2322, %v162, %v643
    %v2327 = vsel %vm2322, %v354, %v645
    %v2328 = vsel %vm2322, %v165, %v647
    %v2329 = vsel %vm2322, %v355, %v649
    %v2330 = vsel %vm2322, %v168, %v651
    %v2331 = vsel %vm2322, %v356, %v653
    %v2332 = vsel %vm2322, %v171, %v655
    %v2333 = vsel %vm2322, %v357, %v657
    %v2334 = vsel %vm2322, %v174, %v659
    %v2335 = vsel %vm2322, %v358, %v661
    %v2336 = vsel %vm2322, %v177, %v663
    %v2337 = vsel %vm2322, %v359, %v665
    %v2338 = vsel %vm2322, %v180, %v667
    %v2339 = vsel %vm2322, %v360, %v669
    %v2340 = vsel %vm2322, %v183, %v671
    %v2341 = vsel %vm2322, %v361, %v673
    %v2342 = vsel %vm2322, %v186, %v675
    %v2343 = vsel %vm2322, %v362, %v677
    %v2344 = vsel %vm2322, %v189, %v679
    %v2345 = vsel %vm2322, %v363, %v681
    %v2346 = vsel %vm2322, %v192, %v683
    %v2347 = vsel %vm2322, %v364, %v685
    %v2348 = vsel %vm2322, %v195, %v687
    %v2349 = vsel %vm2322, %v365, %v689
    %v2350 = vsel %vm2322, %v198, %v691
    %v2351 = vsel %vm2322, %v366, %v693
    %v2352 = vsel %vm2322, %v201, %v695
    %v2353 = vsel %vm2322, %v367, %v697
    %v2354 = vsel %vm2322, %v204, %v699
    %v2355 = vsel %vm2322, %v369, %v701
    %v2356 = vsel %vm2322, %v210, %v703
    %v2357 = vsel %vm2322, %v370, %v705
    %v2358 = vsel %vm2322, %v213, %v707
    %v2359 = vsel %vm2322, %v371, %v709
    %v2360 = vsel %vm2322, %v216, %v711
    %v2361 = vsel %vm2322, %v372, %v713
    %v2362 = vsel %vm2322, %v219, %v715
    %v2363 = vsel %vm2322, %v373, %v717
    %v2364 = vsel %vm2322, %v222, %v719
    %v2365 = vsel %vm2322, %v374, %v721
    %v2366 = vsel %vm2322, %v225, %v723
    %v2367 = vsel %vm2322, %v375, %v725
    %v2368 = vsel %vm2322, %v228, %v727
    %v2369 = vsel %vm2322, %v376, %v729
    %v2370 = vsel %vm2322, %v231, %v731
    %v2371 = vsel %vm2322, %v377, %v733
    %v2372 = vsel %vm2322, %v234, %v735
    %v2373 = vsel %vm2322, %v378, %v737
    %v2374 = vsel %vm2322, %v237, %v739
    %v2375 = vsel %vm2322, %v379, %v741
    %v2376 = vsel %vm2322, %v240, %v743
    %v2377 = vsel %vm2322, %v380, %v745
    %v2378 = vsel %vm2322, %v243, %v747
    %v2379 = vsel %vm2322, %v381, %v749
    %v2380 = vsel %vm2322, %v246, %v751
    %v2381 = vsel %vm2322, %v382, %v753
    %v2382 = vsel %vm2322, %v249, %v755
    %v2383 = vsel %vm2322, %v383, %v757
    %v2384 = vsel %vm2322, %v252, %v759
    %vm2385 = vcmask 64512
    %v2386 = vsel %vm2385, %v2323, %v979
    %v2387 = vsel %vm2385, %v2324, %v981
    %v2388 = vsel %vm2385, %v2325, %v983
    %v2389 = vsel %vm2385, %v2326, %v985
    %v2390 = vsel %vm2385, %v2327, %v987
    %v2391 = vsel %vm2385, %v2328, %v989
    %v2392 = vsel %vm2385, %v2329, %v991
    %v2393 = vsel %vm2385, %v2330, %v993
    %v2394 = vsel %vm2385, %v2331, %v995
    %v2395 = vsel %vm2385, %v2332, %v997
    %v2396 = vsel %vm2385, %v2333, %v999
    %v2397 = vsel %vm2385, %v2334, %v1001
    %v2398 = vsel %vm2385, %v2335, %v1003
    %v2399 = vsel %vm2385, %v2336, %v1005
    %v2400 = vsel %vm2385, %v2337, %v1007
    %v2401 = vsel %vm2385, %v2338, %v1009
    %v2402 = vsel %vm2385, %v2339, %v1011
    %v2403 = vsel %vm2385, %v2340, %v1013
    %v2404 = vsel %vm2385, %v2341, %v1015
    %v2405 = vsel %vm2385, %v2342, %v1017
    %v2406 = vsel %vm2385, %v2343, %v1019
    %v2407 = vsel %vm2385, %v2344, %v1021
    %v2408 = vsel %vm2385, %v2345, %v1023
    %v2409 = vsel %vm2385, %v2346, %v1025
    %v2410 = vsel %vm2385, %v2347, %v1027
    %v2411 = vsel %vm2385, %v2348, %v1029
    %v2412 = vsel %vm2385, %v2349, %v1031
    %v2413 = vsel %vm2385, %v2350, %v1033
    %v2414 = vsel %vm2385, %v2351, %v1035
    %v2415 = vsel %vm2385, %v2352, %v1037
    %v2416 = vsel %vm2385, %v2353, %v1039
    %v2417 = vsel %vm2385, %v2354, %v1041
    %v2418 = vsel %vm2385, %v2355, %v1043
    %v2419 = vsel %vm2385, %v2356, %v1045
    %v2420 = vsel %vm2385, %v2357, %v1047
    %v2421 = vsel %vm2385, %v2358, %v1049
    %v2422 = vsel %vm2385, %v2359, %v1051
    %v2423 = vsel %vm2385, %v2360, %v1053
    %v2424 = vsel %vm2385, %v2361, %v1055
    %v2425 = vsel %vm2385, %v2362, %v1057
    %v2426 = vsel %vm2385, %v2363, %v1059
    %v2427 = vsel %vm2385, %v2364, %v1061
    %v2428 = vsel %vm2385, %v2365, %v1063
    %v2429 = vsel %vm2385, %v2366, %v1065
    %v2430 = vsel %vm2385, %v2367, %v1067
    %v2431 = vsel %vm2385, %v2368, %v1069
    %v2432 = vsel %vm2385, %v2369, %v1071
    %v2433 = vsel %vm2385, %v2370, %v1073
    %v2434 = vsel %vm2385, %v2371, %v1075
    %v2435 = vsel %vm2385, %v2372, %v1077
    %v2436 = vsel %vm2385, %v2373, %v1079
    %v2437 = vsel %vm2385, %v2374, %v1081
    %v2438 = vsel %vm2385, %v2375, %v1083
    %v2439 = vsel %vm2385, %v2376, %v1085
    %v2440 = vsel %vm2385, %v2377, %v1087
    %v2441 = vsel %vm2385, %v2378, %v1089
    %v2442 = vsel %vm2385, %v2379, %v1091
    %v2443 = vsel %vm2385, %v2380, %v1093
    %v2444 = vsel %vm2385, %v2381, %v1095
    %v2445 = vsel %vm2385, %v2382, %v1097
    %v2446 = vsel %vm2385, %v2383, %v1099
    %v2447 = vsel %vm2385, %v2384, %v1101
    %vm2448 = vcmask 97280
    %v2449 = vsel %vm2448, %v2386, %v1167
    %v2450 = vsel %vm2448, %v2387, %v1169
    %v2451 = vsel %vm2448, %v2388, %v1171
    %v2452 = vsel %vm2448, %v2389, %v1173
    %v2453 = vsel %vm2448, %v2390, %v1175
    %v2454 = vsel %vm2448, %v2391, %v1177
    %v2455 = vsel %vm2448, %v2392, %v1179
    %v2456 = vsel %vm2448, %v2393, %v1181
    %v2457 = vsel %vm2448, %v2394, %v1183
    %v2458 = vsel %vm2448, %v2395, %v1185
    %v2459 = vsel %vm2448, %v2396, %v1187
    %v2460 = vsel %vm2448, %v2397, %v1189
    %v2461 = vsel %vm2448, %v2398, %v1191
    %v2462 = vsel %vm2448, %v2399, %v1193
    %v2463 = vsel %vm2448, %v2400, %v1195
    %v2464 = vsel %vm2448, %v2401, %v1197
    %v2465 = vsel %vm2448, %v2402, %v1199
    %v2466 = vsel %vm2448, %v2403, %v1201
    %v2467 = vsel %vm2448, %v2404, %v1203
    %v2468 = vsel %vm2448, %v2405, %v1205
    %v2469 = vsel %vm2448, %v2406, %v1207
    %v2470 = vsel %vm2448, %v2407, %v1209
    %v2471 = vsel %vm2448, %v2408, %v1211
    %v2472 = vsel %vm2448, %v2409, %v1213
    %v2473 = vsel %vm2448, %v2410, %v1215
    %v2474 = vsel %vm2448, %v2411, %v1217
    %v2475 = vsel %vm2448, %v2412, %v1219
    %v2476 = vsel %vm2448, %v2413, %v1221
    %v2477 = vsel %vm2448, %v2414, %v1223
    %v2478 = vsel %vm2448, %v2415, %v1225
    %v2479 = vsel %vm2448, %v2416, %v1227
    %v2480 = vsel %vm2448, %v2417, %v1229
    %v2481 = vsel %vm2448, %v2386, %v1231
    %v2482 = vsel %vm2448, %v2387, %v1233
    %v2483 = vsel %vm2448, %v2418, %v1235
    %v2484 = vsel %vm2448, %v2419, %v1237
    %v2485 = vsel %vm2448, %v2420, %v1239
    %v2486 = vsel %vm2448, %v2421, %v1241
    %v2487 = vsel %vm2448, %v2422, %v1243
    %v2488 = vsel %vm2448, %v2423, %v1245
    %v2489 = vsel %vm2448, %v2424, %v1247
    %v2490 = vsel %vm2448, %v2425, %v1249
    %v2491 = vsel %vm2448, %v2426, %v1251
    %v2492 = vsel %vm2448, %v2427, %v1253
    %v2493 = vsel %vm2448, %v2428, %v1255
    %v2494 = vsel %vm2448, %v2429, %v1257
    %v2495 = vsel %vm2448, %v2430, %v1259
    %v2496 = vsel %vm2448, %v2431, %v1261
    %v2497 = vsel %vm2448, %v2432, %v1263
    %v2498 = vsel %vm2448, %v2433, %v1265
    %v2499 = vsel %vm2448, %v2434, %v1267
    %v2500 = vsel %vm2448, %v2435, %v1269
    %v2501 = vsel %vm2448, %v2436, %v1271
    %v2502 = vsel %vm2448, %v2437, %v1273
    %v2503 = vsel %vm2448, %v2438, %v1275
    %v2504 = vsel %vm2448, %v2439, %v1277
    %v2505 = vsel %vm2448, %v2440, %v1279
    %v2506 = vsel %vm2448, %v2441, %v1281
    %v2507 = vsel %vm2448, %v2442, %v1283
    %v2508 = vsel %vm2448, %v2443, %v1285
    %v2509 = vsel %vm2448, %v2444, %v1287
    %v2510 = vsel %vm2448, %v2445, %v1289
    %v2511 = vsel %vm2448, %v2446, %v1291
    %v2512 = vsel %vm2448, %v2447, %v1293
    %vm2513 = vcmask 130048
    %v2514 = vsel %vm2513, %v2449, %v1371
    %v2515 = vsel %vm2513, %v2450, %v1373
    %v2516 = vsel %vm2513, %v2451, %v1375
    %v2517 = vsel %vm2513, %v2452, %v1377
    %v2518 = vsel %vm2513, %v2453, %v1379
    %v2519 = vsel %vm2513, %v2454, %v1381
    %v2520 = vsel %vm2513, %v2455, %v1383
    %v2521 = vsel %vm2513, %v2456, %v1385
    %v2522 = vsel %vm2513, %v2457, %v1387
    %v2523 = vsel %vm2513, %v2458, %v1389
    %v2524 = vsel %vm2513, %v2459, %v1391
    %v2525 = vsel %vm2513, %v2460, %v1393
    %v2526 = vsel %vm2513, %v2461, %v1395
    %v2527 = vsel %vm2513, %v2462, %v1397
    %v2528 = vsel %vm2513, %v2463, %v1399
    %v2529 = vsel %vm2513, %v2464, %v1401
    %v2530 = vsel %vm2513, %v2465, %v1403
    %v2531 = vsel %vm2513, %v2466, %v1405
    %v2532 = vsel %vm2513, %v2467, %v1407
    %v2533 = vsel %vm2513, %v2468, %v1409
    %v2534 = vsel %vm2513, %v2469, %v1411
    %v2535 = vsel %vm2513, %v2470, %v1413
    %v2536 = vsel %vm2513, %v2471, %v1415
    %v2537 = vsel %vm2513, %v2472, %v1417
    %v2538 = vsel %vm2513, %v2473, %v1419
    %v2539 = vsel %vm2513, %v2474, %v1421
    %v2540 = vsel %vm2513, %v2475, %v1423
    %v2541 = vsel %vm2513, %v2476, %v1425
    %v2542 = vsel %vm2513, %v2477, %v1427
    %v2543 = vsel %vm2513, %v2478, %v1429
    %v2544 = vsel %vm2513, %v2479, %v1431
    %v2545 = vsel %vm2513, %v2480, %v1433
    %v2546 = vsel %vm2513, %v2481, %v1435
    %v2547 = vsel %vm2513, %v2482, %v1437
    %v2548 = vsel %vm2513, %v2483, %v1439
    %v2549 = vsel %vm2513, %v2484, %v1441
    %v2550 = vsel %vm2513, %v2485, %v1443
    %v2551 = vsel %vm2513, %v2486, %v1445
    %v2552 = vsel %vm2513, %v2487, %v1447
    %v2553 = vsel %vm2513, %v2488, %v1449
    %v2554 = vsel %vm2513, %v2489, %v1451
    %v2555 = vsel %vm2513, %v2490, %v1453
    %v2556 = vsel %vm2513, %v2491, %v1455
    %v2557 = vsel %vm2513, %v2492, %v1457
    %v2558 = vsel %vm2513, %v2493, %v1459
    %v2559 = vsel %vm2513, %v2494, %v1461
    %v2560 = vsel %vm2513, %v2495, %v1463
    %v2561 = vsel %vm2513, %v2496, %v1465
    %v2562 = vsel %vm2513, %v2497, %v1467
    %v2563 = vsel %vm2513, %v2498, %v1469
    %v2564 = vsel %vm2513, %v2499, %v1471
    %v2565 = vsel %vm2513, %v2500, %v1473
    %v2566 = vsel %vm2513, %v2501, %v1475
    %v2567 = vsel %vm2513, %v2502, %v1477
    %v2568 = vsel %vm2513, %v2503, %v1479
    %v2569 = vsel %vm2513, %v2504, %v1481
    %v2570 = vsel %vm2513, %v2505, %v1483
    %v2571 = vsel %vm2513, %v2506, %v1485
    %v2572 = vsel %vm2513, %v2507, %v1487
    %v2573 = vsel %vm2513, %v2508, %v1489
    %v2574 = vsel %vm2513, %v2509, %v1491
    %v2575 = vsel %vm2513, %v2510, %v1493
    %v2576 = vsel %vm2513, %v2511, %v1495
    %v2577 = vsel %vm2513, %v2512, %v1497
    %vm2578 = vcmask 162816
    %v2579 = vsel %vm2578, %v2514, %v1573
    %v2580 = vsel %vm2578, %v2515, %v1575
    %v2581 = vsel %vm2578, %v2516, %v1577
    %v2582 = vsel %vm2578, %v2517, %v1579
    %v2583 = vsel %vm2578, %v2518, %v1581
    %v2584 = vsel %vm2578, %v2519, %v1583
    %v2585 = vsel %vm2578, %v2520, %v1585
    %v2586 = vsel %vm2578, %v2521, %v1587
    %v2587 = vsel %vm2578, %v2522, %v1589
    %v2588 = vsel %vm2578, %v2523, %v1591
    %v2589 = vsel %vm2578, %v2524, %v1593
    %v2590 = vsel %vm2578, %v2525, %v1595
    %v2591 = vsel %vm2578, %v2526, %v1597
    %v2592 = vsel %vm2578, %v2527, %v1599
    %v2593 = vsel %vm2578, %v2528, %v1601
    %v2594 = vsel %vm2578, %v2529, %v1603
    %v2595 = vsel %vm2578, %v2530, %v1605
    %v2596 = vsel %vm2578, %v2531, %v1607
    %v2597 = vsel %vm2578, %v2532, %v1609
    %v2598 = vsel %vm2578, %v2533, %v1611
    %v2599 = vsel %vm2578, %v2534, %v1613
    %v2600 = vsel %vm2578, %v2535, %v1615
    %v2601 = vsel %vm2578, %v2536, %v1617
    %v2602 = vsel %vm2578, %v2537, %v1619
    %v2603 = vsel %vm2578, %v2538, %v1621
    %v2604 = vsel %vm2578, %v2539, %v1623
    %v2605 = vsel %vm2578, %v2540, %v1625
    %v2606 = vsel %vm2578, %v2541, %v1627
    %v2607 = vsel %vm2578, %v2542, %v1629
    %v2608 = vsel %vm2578, %v2543, %v1631
    %v2609 = vsel %vm2578, %v2544, %v1633
    %v2610 = vsel %vm2578, %v2545, %v1635
    %v2611 = vsel %vm2578, %v2546, %v1637
    %v2612 = vsel %vm2578, %v2547, %v1639
    %v2613 = vsel %vm2578, %v2548, %v1641
    %v2614 = vsel %vm2578, %v2549, %v1643
    %v2615 = vsel %vm2578, %v2550, %v1645
    %v2616 = vsel %vm2578, %v2551, %v1647
    %v2617 = vsel %vm2578, %v2552, %v1649
    %v2618 = vsel %vm2578, %v2553, %v1651
    %v2619 = vsel %vm2578, %v2554, %v1653
    %v2620 = vsel %vm2578, %v2555, %v1655
    %v2621 = vsel %vm2578, %v2556, %v1657
    %v2622 = vsel %vm2578, %v2557, %v1659
    %v2623 = vsel %vm2578, %v2558, %v1661
    %v2624 = vsel %vm2578, %v2559, %v1663
    %v2625 = vsel %vm2578, %v2560, %v1665
    %v2626 = vsel %vm2578, %v2561, %v1667
    %v2627 = vsel %vm2578, %v2562, %v1669
    %v2628 = vsel %vm2578, %v2563, %v1671
    %v2629 = vsel %vm2578, %v2564, %v1673
    %v2630 = vsel %vm2578, %v2565, %v1675
    %v2631 = vsel %vm2578, %v2566, %v1677
    %v2632 = vsel %vm2578, %v2567, %v1679
    %v2633 = vsel %vm2578, %v2568, %v1681
    %v2634 = vsel %vm2578, %v2569, %v1683
    %v2635 = vsel %vm2578, %v2570, %v1685
    %v2636 = vsel %vm2578, %v2571, %v1687
    %v2637 = vsel %vm2578, %v2572, %v1689
    %v2638 = vsel %vm2578, %v2573, %v1691
    %v2639 = vsel %vm2578, %v2574, %v1693
    %v2640 = vsel %vm2578, %v2575, %v1695
    %v2641 = vsel %vm2578, %v2576, %v1697
    %v2642 = vsel %vm2578, %v2577, %v1699
    %vm2643 = vcmask 195584
    %v2644 = vsel %vm2643, %v2579, %v1765
    %v2645 = vsel %vm2643, %v2580, %v1767
    %v2646 = vsel %vm2643, %v2581, %v1769
    %v2647 = vsel %vm2643, %v2582, %v1771
    %v2648 = vsel %vm2643, %v2583, %v1773
    %v2649 = vsel %vm2643, %v2584, %v1775
    %v2650 = vsel %vm2643, %v2585, %v1777
    %v2651 = vsel %vm2643, %v2586, %v1779
    %v2652 = vsel %vm2643, %v2587, %v1781
    %v2653 = vsel %vm2643, %v2588, %v1783
    %v2654 = vsel %vm2643, %v2589, %v1785
    %v2655 = vsel %vm2643, %v2590, %v1787
    %v2656 = vsel %vm2643, %v2591, %v1789
    %v2657 = vsel %vm2643, %v2592, %v1791
    %v2658 = vsel %vm2643, %v2593, %v1793
    %v2659 = vsel %vm2643, %v2594, %v1795
    %v2660 = vsel %vm2643, %v2595, %v1797
    %v2661 = vsel %vm2643, %v2596, %v1799
    %v2662 = vsel %vm2643, %v2597, %v1801
    %v2663 = vsel %vm2643, %v2598, %v1803
    %v2664 = vsel %vm2643, %v2599, %v1805
    %v2665 = vsel %vm2643, %v2600, %v1807
    %v2666 = vsel %vm2643, %v2601, %v1809
    %v2667 = vsel %vm2643, %v2602, %v1811
    %v2668 = vsel %vm2643, %v2603, %v1813
    %v2669 = vsel %vm2643, %v2604, %v1815
    %v2670 = vsel %vm2643, %v2605, %v1817
    %v2671 = vsel %vm2643, %v2606, %v1819
    %v2672 = vsel %vm2643, %v2607, %v1821
    %v2673 = vsel %vm2643, %v2608, %v1823
    %v2674 = vsel %vm2643, %v2609, %v1825
    %v2675 = vsel %vm2643, %v2610, %v1827
    %v2676 = vsel %vm2643, %v2611, %v1829
    %v2677 = vsel %vm2643, %v2612, %v1831
    %v2678 = vsel %vm2643, %v2613, %v1833
    %v2679 = vsel %vm2643, %v2614, %v1835
    %v2680 = vsel %vm2643, %v2615, %v1837
    %v2681 = vsel %vm2643, %v2616, %v1839
    %v2682 = vsel %vm2643, %v2617, %v1841
    %v2683 = vsel %vm2643, %v2618, %v1843
    %v2684 = vsel %vm2643, %v2619, %v1845
    %v2685 = vsel %vm2643, %v2620, %v1847
    %v2686 = vsel %vm2643, %v2621, %v1849
    %v2687 = vsel %vm2643, %v2622, %v1851
    %v2688 = vsel %vm2643, %v2623, %v1853
    %v2689 = vsel %vm2643, %v2624, %v1855
    %v2690 = vsel %vm2643, %v2625, %v1857
    %v2691 = vsel %vm2643, %v2626, %v1859
    %v2692 = vsel %vm2643, %v2627, %v1861
    %v2693 = vsel %vm2643, %v2628, %v1863
    %v2694 = vsel %vm2643, %v2629, %v1865
    %v2695 = vsel %vm2643, %v2630, %v1867
    %v2696 = vsel %vm2643, %v2631, %v1869
    %v2697 = vsel %vm2643, %v2632, %v1871
    %v2698 = vsel %vm2643, %v2633, %v1873
    %v2699 = vsel %vm2643, %v2634, %v1875
    %v2700 = vsel %vm2643, %v2635, %v1877
    %v2701 = vsel %vm2643, %v2636, %v1879
    %v2702 = vsel %vm2643, %v2637, %v1881
    %v2703 = vsel %vm2643, %v2638, %v1883
    %v2704 = vsel %vm2643, %v2639, %v1885
    %v2705 = vsel %vm2643, %v2640, %v1887
    %v2706 = vsel %vm2643, %v2641, %v1825
    %v2707 = vsel %vm2643, %v2642, %v1827
    %vm2708 = vcmask 228352
    %v2709 = vsel %vm2708, %v2644, %v1951
    %v2710 = vsel %vm2708, %v2645, %v1953
    %v2711 = vsel %vm2708, %v2646, %v1955
    %v2712 = vsel %vm2708, %v2647, %v1957
    %v2713 = vsel %vm2708, %v2648, %v1959
    %v2714 = vsel %vm2708, %v2649, %v1961
    %v2715 = vsel %vm2708, %v2650, %v1963
    %v2716 = vsel %vm2708, %v2651, %v1965
    %v2717 = vsel %vm2708, %v2652, %v1967
    %v2718 = vsel %vm2708, %v2653, %v1969
    %v2719 = vsel %vm2708, %v2654, %v1971
    %v2720 = vsel %vm2708, %v2655, %v1973
    %v2721 = vsel %vm2708, %v2656, %v1975
    %v2722 = vsel %vm2708, %v2657, %v1977
    %v2723 = vsel %vm2708, %v2658, %v1979
    %v2724 = vsel %vm2708, %v2659, %v1981
    %v2725 = vsel %vm2708, %v2660, %v1983
    %v2726 = vsel %vm2708, %v2661, %v1985
    %v2727 = vsel %vm2708, %v2662, %v1987
    %v2728 = vsel %vm2708, %v2663, %v1989
    %v2729 = vsel %vm2708, %v2664, %v1991
    %v2730 = vsel %vm2708, %v2665, %v1993
    %v2731 = vsel %vm2708, %v2666, %v1995
    %v2732 = vsel %vm2708, %v2667, %v1997
    %v2733 = vsel %vm2708, %v2668, %v1999
    %v2734 = vsel %vm2708, %v2669, %v2001
    %v2735 = vsel %vm2708, %v2670, %v2003
    %v2736 = vsel %vm2708, %v2671, %v2005
    %v2737 = vsel %vm2708, %v2672, %v2007
    %v2738 = vsel %vm2708, %v2673, %v2009
    %v2739 = vsel %vm2708, %v2674, %v2011
    %v2740 = vsel %vm2708, %v2675, %v2013
    %v2741 = vsel %vm2708, %v2676, %v2015
    %v2742 = vsel %vm2708, %v2677, %v2017
    %v2743 = vsel %vm2708, %v2678, %v2019
    %v2744 = vsel %vm2708, %v2679, %v2021
    %v2745 = vsel %vm2708, %v2680, %v2023
    %v2746 = vsel %vm2708, %v2681, %v2025
    %v2747 = vsel %vm2708, %v2682, %v2027
    %v2748 = vsel %vm2708, %v2683, %v2029
    %v2749 = vsel %vm2708, %v2684, %v2031
    %v2750 = vsel %vm2708, %v2685, %v2033
    %v2751 = vsel %vm2708, %v2686, %v2035
    %v2752 = vsel %vm2708, %v2687, %v2037
    %v2753 = vsel %vm2708, %v2688, %v2039
    %v2754 = vsel %vm2708, %v2689, %v2041
    %v2755 = vsel %vm2708, %v2690, %v2043
    %v2756 = vsel %vm2708, %v2691, %v2045
    %v2757 = vsel %vm2708, %v2692, %v2047
    %v2758 = vsel %vm2708, %v2693, %v2049
    %v2759 = vsel %vm2708, %v2694, %v2051
    %v2760 = vsel %vm2708, %v2695, %v2053
    %v2761 = vsel %vm2708, %v2696, %v2055
    %v2762 = vsel %vm2708, %v2697, %v2057
    %v2763 = vsel %vm2708, %v2698, %v2059
    %v2764 = vsel %vm2708, %v2699, %v2061
    %v2765 = vsel %vm2708, %v2700, %v2063
    %v2766 = vsel %vm2708, %v2701, %v2065
    %v2767 = vsel %vm2708, %v2702, %v2067
    %v2768 = vsel %vm2708, %v2703, %v2069
    %v2769 = vsel %vm2708, %v2704, %v2071
    %v2770 = vsel %vm2708, %v2705, %v2073
    %v2771 = vsel %vm2708, %v2706, %v2011
    %v2772 = vsel %vm2708, %v2707, %v2013
    %vm2773 = vcmask 261120
    %v2774 = vsel %vm2773, %v2709, %v2137
    %v2775 = vsel %vm2773, %v2710, %v2139
    %v2776 = vsel %vm2773, %v2711, %v2141
    %v2777 = vsel %vm2773, %v2712, %v2143
    %v2778 = vsel %vm2773, %v2713, %v2145
    %v2779 = vsel %vm2773, %v2714, %v2147
    %v2780 = vsel %vm2773, %v2715, %v2149
    %v2781 = vsel %vm2773, %v2716, %v2151
    %v2782 = vsel %vm2773, %v2717, %v2153
    %v2783 = vsel %vm2773, %v2718, %v2155
    %v2784 = vsel %vm2773, %v2719, %v2157
    %v2785 = vsel %vm2773, %v2720, %v2159
    %v2786 = vsel %vm2773, %v2721, %v2161
    %v2787 = vsel %vm2773, %v2722, %v2163
    %v2788 = vsel %vm2773, %v2723, %v2165
    %v2789 = vsel %vm2773, %v2724, %v2167
    %v2790 = vsel %vm2773, %v2725, %v2169
    %v2791 = vsel %vm2773, %v2726, %v2171
    %v2792 = vsel %vm2773, %v2727, %v2173
    %v2793 = vsel %vm2773, %v2728, %v2175
    %v2794 = vsel %vm2773, %v2729, %v2177
    %v2795 = vsel %vm2773, %v2730, %v2179
    %v2796 = vsel %vm2773, %v2731, %v2181
    %v2797 = vsel %vm2773, %v2732, %v2183
    %v2798 = vsel %vm2773, %v2733, %v2185
    %v2799 = vsel %vm2773, %v2734, %v2187
    %v2800 = vsel %vm2773, %v2735, %v2189
    %v2801 = vsel %vm2773, %v2736, %v2191
    %v2802 = vsel %vm2773, %v2737, %v2193
    %v2803 = vsel %vm2773, %v2738, %v2195
    %v2804 = vsel %vm2773, %v2739, %v2197
    %v2805 = vsel %vm2773, %v2740, %v2199
    %v2806 = vsel %vm2773, %v2741, %v2201
    %v2807 = vsel %vm2773, %v2742, %v2203
    %v2808 = vsel %vm2773, %v2743, %v2205
    %v2809 = vsel %vm2773, %v2744, %v2207
    %v2810 = vsel %vm2773, %v2745, %v2209
    %v2811 = vsel %vm2773, %v2746, %v2211
    %v2812 = vsel %vm2773, %v2747, %v2213
    %v2813 = vsel %vm2773, %v2748, %v2215
    %v2814 = vsel %vm2773, %v2749, %v2217
    %v2815 = vsel %vm2773, %v2750, %v2219
    %v2816 = vsel %vm2773, %v2751, %v2221
    %v2817 = vsel %vm2773, %v2752, %v2223
    %v2818 = vsel %vm2773, %v2753, %v2225
    %v2819 = vsel %vm2773, %v2754, %v2227
    %v2820 = vsel %vm2773, %v2755, %v2229
    %v2821 = vsel %vm2773, %v2756, %v2231
    %v2822 = vsel %vm2773, %v2757, %v2233
    %v2823 = vsel %vm2773, %v2758, %v2235
    %v2824 = vsel %vm2773, %v2759, %v2237
    %v2825 = vsel %vm2773, %v2760, %v2239
    %v2826 = vsel %vm2773, %v2761, %v2241
    %v2827 = vsel %vm2773, %v2762, %v2243
    %v2828 = vsel %vm2773, %v2763, %v2245
    %v2829 = vsel %vm2773, %v2764, %v2247
    %v2830 = vsel %vm2773, %v2765, %v2249
    %v2831 = vsel %vm2773, %v2766, %v2251
    %v2832 = vsel %vm2773, %v2767, %v2253
    %v2833 = vsel %vm2773, %v2768, %v2255
    %v2834 = vsel %vm2773, %v2769, %v2257
    %v2835 = vsel %vm2773, %v2770, %v2259
    %v2836 = vsel %vm2773, %v2771, %v2197
    %v2837 = vsel %vm2773, %v2772, %v2199
    %v2838 = vpack.c.bf16 %v2775, %v2774
    %v2839 = vpack.c.bf16 %v2777, %v2776
    %v2840 = vpack.c.bf16 %v2779, %v2778
    %v2841 = vpack.c.bf16 %v2781, %v2780
    %v2842 = vpack.c.bf16 %v2783, %v2782
    %v2843 = vpack.c.bf16 %v2785, %v2784
    %v2844 = vpack.c.bf16 %v2787, %v2786
    %v2845 = vpack.c.bf16 %v2789, %v2788
    %v2846 = vpack.c.bf16 %v2791, %v2790
    %v2847 = vpack.c.bf16 %v2793, %v2792
    %v2848 = vpack.c.bf16 %v2795, %v2794
    %v2849 = vpack.c.bf16 %v2797, %v2796
    %v2850 = vpack.c.bf16 %v2799, %v2798
    %v2851 = vpack.c.bf16 %v2801, %v2800
    %v2852 = vpack.c.bf16 %v2803, %v2802
    %v2853 = vpack.c.bf16 %v2805, %v2804
    %v2854 = vpack.c.bf16 %v2807, %v2806
    %v2855 = vpack.c.bf16 %v2809, %v2808
    %v2856 = vpack.c.bf16 %v2811, %v2810
    %v2857 = vpack.c.bf16 %v2813, %v2812
    %v2858 = vpack.c.bf16 %v2815, %v2814
    %v2859 = vpack.c.bf16 %v2817, %v2816
    %v2860 = vpack.c.bf16 %v2819, %v2818
    %v2861 = vpack.c.bf16 %v2821, %v2820
    %v2862 = vpack.c.bf16 %v2823, %v2822
    %v2863 = vpack.c.bf16 %v2825, %v2824
    %v2864 = vpack.c.bf16 %v2827, %v2826
    %v2865 = vpack.c.bf16 %v2829, %v2828
    %v2866 = vpack.c.bf16 %v2831, %v2830
    %v2867 = vpack.c.bf16 %v2833, %v2832
    %v2868 = vpack.c.bf16 %v2835, %v2834
    %v2869 = vpack.c.bf16 %v2837, %v2836
    %v2870 = vld [vmem:[%s1] sm:$0xf]
    %v2871 = vld [vmem:[%s1 + $0x4] sm:$0xf]
    %v2872 = vld [vmem:[%s1 + $0x8] sm:$0xf]
    %v2873 = vld [vmem:[%s1 + $0xc] sm:$0xf]
    %v2874 = vld [vmem:[%s1 + $0x10] sm:$0x3]
    %v2875 = vld [vmem:[%s6] sm:$0x1]
    %v2877 = vlaneseq
    %v2878 = vshrl.u32 %v2877, 7
    %v2879 = vsub.s32 0, %v2878
    %v2880 = vrot.slane %v2875, %v2879
    %v2887 = vunpack.c.l.b16 %v2870
    %v2888 = vunpack.c.l.b16 %v2871
    %v2889 = vunpack.c.l.b16 %v2872
    %v2890 = vunpack.c.l.b16 %v2873
    %v2891 = vunpack.c.l.b16 %v2874
    %v2892 = vpack.c.b16 %v2888, %v2887
    %v2893 = vpack.c.b16 %v2890, %v2889
    %v2894 = vpack.c.b16 %v2891, %v2891
    %vm2897 = vcmask 293888
    %v2899 = vsel %vm2897, %v2838, 0
    %v2902 = vsel %vm2897, %v2839, 0
    %v2905 = vsel %vm2897, %v2840, 0
    %v2908 = vsel %vm2897, %v2841, 0
    %v2911 = vsel %vm2897, %v2842, 0
    %v2914 = vsel %vm2897, %v2843, 0
    %v2917 = vsel %vm2897, %v2844, 0
    %v2920 = vsel %vm2897, %v2845, 0
    %v2923 = vsel %vm2897, %v2846, 0
    %v2926 = vsel %vm2897, %v2847, 0
    %v2929 = vsel %vm2897, %v2848, 0
    %v2932 = vsel %vm2897, %v2849, 0
    %v2935 = vsel %vm2897, %v2850, 0
    %v2938 = vsel %vm2897, %v2851, 0
    %v2941 = vsel %vm2897, %v2852, 0
    %v2944 = vsel %vm2897, %v2853, 0
    %v2947 = vsel %vm2897, %v2854, 0
    %v2950 = vsel %vm2897, %v2855, 0
    %v2953 = vsel %vm2897, %v2856, 0
    %v2956 = vsel %vm2897, %v2857, 0
    %v2959 = vsel %vm2897, %v2858, 0
    %v2962 = vsel %vm2897, %v2859, 0
    %v2965 = vsel %vm2897, %v2860, 0
    %v2968 = vsel %vm2897, %v2861, 0
    %v2971 = vsel %vm2897, %v2862, 0
    %v2974 = vsel %vm2897, %v2863, 0
    %v2977 = vsel %vm2897, %v2864, 0
    %v2980 = vsel %vm2897, %v2865, 0
    %v2983 = vsel %vm2897, %v2866, 0
    %v2986 = vsel %vm2897, %v2867, 0
    %v2989 = vsel %vm2897, %v2868, 0
    %v2992 = vsel %vm2897, %v2869, 0
    %vm2994 = vcmask 1041408
    %v2996 = vsel %vm2994, %v2894, 0
    %2998 = vmatprep.subr.bf16.mxu0 0
    %2999 = vmatpush1.bf16.msra.mxu0 0
    %3000 = vmatprep.subr.bf16.mxu0 0
    %3001 = vmatpush1.bf16.msra.mxu0 0
    %3002 = vmatprep.subr.bf16.mxu0 0
    %3003 = vmatpush1.bf16.msra.mxu0 0
    %3004 = vmatprep.subr.bf16.mxu0 0
    %3005 = vmatpush1.bf16.msra.mxu0 0
    %3006 = vmatprep.subr.bf16.mxu0 0
    %3007 = vmatpush1.bf16.msra.mxu0 0
    %3008 = vmatprep.subr.bf16.mxu0 0
    %3009 = vmatpush1.bf16.msra.mxu0 %v2996
    %3010 = vmatprep.subr.bf16.mxu0 0
    %3011 = vmatpush1.bf16.msra.mxu0 %v2893
    %3012 = vmatprep.subr.bf16.mxu0 0
    %3013 = vmatpush1.bf16.msra.mxu0 %v2892
    %3014 = vmatprep.subr.bf16.mxu0 0
    %3015 = vmatpush2.bf16.msra.mxu0 0
    %3016 = vmatprep.subr.bf16.mxu0 0
    %3017 = vmatpush2.bf16.msra.mxu0 0
    %3018 = vmatprep.subr.bf16.mxu0 0
    %3019 = vmatpush2.bf16.msra.mxu0 0
    %3020 = vmatprep.subr.bf16.mxu0 0
    %3021 = vmatpush2.bf16.msra.mxu0 0
    %3022 = vmatprep.subr.bf16.mxu0 0
    %3023 = vmatpush2.bf16.msra.mxu0 0
    %3024 = vmatprep.subr.bf16.mxu0 0
    %3025 = vmatpush2.bf16.msra.mxu0 0
    %3026 = vmatprep.subr.bf16.mxu0 0
    %3027 = vmatpush2.bf16.msra.mxu0 0
    %3028 = vmatprep.subr.bf16.mxu0 0
    %3029 = vmatpush2.bf16.msra.mxu0 0
    %3030 = vmatprep.mubr.bf16.mxu0 0
    %3031 = vmatmul.mubr.bf16.gmra.mxu0 %v2899
    %v3032 = vpop.f32.mrf.mxu0
    %v3033 = vadd.f32 %v2880, %v3032
    %v3034 = vpop.f32.mrf.mxu0
    %v3035 = vpop.f32.mrf.mxu0
    %v3036 = vadd.f32 %v2880, %v3035
    %v3037 = vpop.f32.mrf.mxu0
    %3038 = vmatprep.mubr.bf16.mxu0 0
    %3039 = vmatmul.mubr.bf16.gmra.mxu0 %v2902
    %v3040 = vpop.f32.mrf.mxu0
    %v3041 = vadd.f32 %v2880, %v3040
    %v3042 = vpop.f32.mrf.mxu0
    %v3043 = vpop.f32.mrf.mxu0
    %v3044 = vadd.f32 %v2880, %v3043
    %v3045 = vpop.f32.mrf.mxu0
    %3046 = vmatprep.mubr.bf16.mxu0 0
    %3047 = vmatmul.mubr.bf16.gmra.mxu0 %v2905
    %v3048 = vpop.f32.mrf.mxu0
    %v3049 = vadd.f32 %v2880, %v3048
    %v3050 = vpop.f32.mrf.mxu0
    %v3051 = vpop.f32.mrf.mxu0
    %v3052 = vadd.f32 %v2880, %v3051
    %v3053 = vpop.f32.mrf.mxu0
    %3054 = vmatprep.mubr.bf16.mxu0 0
    %3055 = vmatmul.mubr.bf16.gmra.mxu0 %v2908
    %v3056 = vpop.f32.mrf.mxu0
    %v3057 = vadd.f32 %v2880, %v3056
    %v3058 = vpop.f32.mrf.mxu0
    %v3059 = vpop.f32.mrf.mxu0
    %v3060 = vadd.f32 %v2880, %v3059
    %v3061 = vpop.f32.mrf.mxu0
    %3062 = vmatprep.mubr.bf16.mxu0 0
    %3063 = vmatmul.mubr.bf16.gmra.mxu0 %v2911
    %v3064 = vpop.f32.mrf.mxu0
    %v3065 = vadd.f32 %v2880, %v3064
    %v3066 = vpop.f32.mrf.mxu0
    %v3067 = vpop.f32.mrf.mxu0
    %v3068 = vadd.f32 %v2880, %v3067
    %v3069 = vpop.f32.mrf.mxu0
    %3070 = vmatprep.mubr.bf16.mxu0 0
    %3071 = vmatmul.mubr.bf16.gmra.mxu0 %v2914
    %v3072 = vpop.f32.mrf.mxu0
    %v3073 = vadd.f32 %v2880, %v3072
    %v3074 = vpop.f32.mrf.mxu0
    %v3075 = vpop.f32.mrf.mxu0
    %v3076 = vadd.f32 %v2880, %v3075
    %v3077 = vpop.f32.mrf.mxu0
    %3078 = vmatprep.mubr.bf16.mxu0 0
    %3079 = vmatmul.mubr.bf16.gmra.mxu0 %v2917
    %v3080 = vpop.f32.mrf.mxu0
    %v3081 = vadd.f32 %v2880, %v3080
    %v3082 = vpop.f32.mrf.mxu0
    %v3083 = vpop.f32.mrf.mxu0
    %v3084 = vadd.f32 %v2880, %v3083
    %v3085 = vpop.f32.mrf.mxu0
    %3086 = vmatprep.mubr.bf16.mxu0 0
    %3087 = vmatmul.mubr.bf16.gmra.mxu0 %v2920
    %v3088 = vpop.f32.mrf.mxu0
    %v3089 = vadd.f32 %v2880, %v3088
    %v3090 = vpop.f32.mrf.mxu0
    %v3091 = vpop.f32.mrf.mxu0
    %v3092 = vadd.f32 %v2880, %v3091
    %v3093 = vpop.f32.mrf.mxu0
    %3094 = vmatprep.mubr.bf16.mxu0 0
    %3095 = vmatmul.mubr.bf16.gmra.mxu0 %v2923
    %v3096 = vpop.f32.mrf.mxu0
    %v3097 = vadd.f32 %v2880, %v3096
    %v3098 = vpop.f32.mrf.mxu0
    %v3099 = vpop.f32.mrf.mxu0
    %v3100 = vadd.f32 %v2880, %v3099
    %v3101 = vpop.f32.mrf.mxu0
    %3102 = vmatprep.mubr.bf16.mxu0 0
    %3103 = vmatmul.mubr.bf16.gmra.mxu0 %v2926
    %v3104 = vpop.f32.mrf.mxu0
    %v3105 = vadd.f32 %v2880, %v3104
    %v3106 = vpop.f32.mrf.mxu0
    %v3107 = vpop.f32.mrf.mxu0
    %v3108 = vadd.f32 %v2880, %v3107
    %v3109 = vpop.f32.mrf.mxu0
    %3110 = vmatprep.mubr.bf16.mxu0 0
    %3111 = vmatmul.mubr.bf16.gmra.mxu0 %v2929
    %v3112 = vpop.f32.mrf.mxu0
    %v3113 = vadd.f32 %v2880, %v3112
    %v3114 = vpop.f32.mrf.mxu0
    %v3115 = vpop.f32.mrf.mxu0
    %v3116 = vadd.f32 %v2880, %v3115
    %v3117 = vpop.f32.mrf.mxu0
    %3118 = vmatprep.mubr.bf16.mxu0 0
    %3119 = vmatmul.mubr.bf16.gmra.mxu0 %v2932
    %v3120 = vpop.f32.mrf.mxu0
    %v3121 = vadd.f32 %v2880, %v3120
    %v3122 = vpop.f32.mrf.mxu0
    %v3123 = vpop.f32.mrf.mxu0
    %v3124 = vadd.f32 %v2880, %v3123
    %v3125 = vpop.f32.mrf.mxu0
    %3126 = vmatprep.mubr.bf16.mxu0 0
    %3127 = vmatmul.mubr.bf16.gmra.mxu0 %v2935
    %v3128 = vpop.f32.mrf.mxu0
    %v3129 = vadd.f32 %v2880, %v3128
    %v3130 = vpop.f32.mrf.mxu0
    %v3131 = vpop.f32.mrf.mxu0
    %v3132 = vadd.f32 %v2880, %v3131
    %v3133 = vpop.f32.mrf.mxu0
    %3134 = vmatprep.mubr.bf16.mxu0 0
    %3135 = vmatmul.mubr.bf16.gmra.mxu0 %v2938
    %v3136 = vpop.f32.mrf.mxu0
    %v3137 = vadd.f32 %v2880, %v3136
    %v3138 = vpop.f32.mrf.mxu0
    %v3139 = vpop.f32.mrf.mxu0
    %v3140 = vadd.f32 %v2880, %v3139
    %v3141 = vpop.f32.mrf.mxu0
    %3142 = vmatprep.mubr.bf16.mxu0 0
    %3143 = vmatmul.mubr.bf16.gmra.mxu0 %v2941
    %v3144 = vpop.f32.mrf.mxu0
    %v3145 = vadd.f32 %v2880, %v3144
    %v3146 = vpop.f32.mrf.mxu0
    %v3147 = vpop.f32.mrf.mxu0
    %v3148 = vadd.f32 %v2880, %v3147
    %v3149 = vpop.f32.mrf.mxu0
    %3150 = vmatprep.mubr.bf16.mxu0 0
    %3151 = vmatmul.mubr.bf16.gmra.mxu0 %v2944
    %v3152 = vpop.f32.mrf.mxu0
    %v3153 = vadd.f32 %v2880, %v3152
    %v3154 = vpop.f32.mrf.mxu0
    %v3155 = vpop.f32.mrf.mxu0
    %v3156 = vadd.f32 %v2880, %v3155
    %v3157 = vpop.f32.mrf.mxu0
    %3158 = vmatprep.mubr.bf16.mxu0 0
    %3159 = vmatmul.mubr.bf16.gmra.mxu0 %v2947
    %v3160 = vpop.f32.mrf.mxu0
    %v3161 = vadd.f32 %v2880, %v3160
    %v3162 = vpop.f32.mrf.mxu0
    %v3163 = vpop.f32.mrf.mxu0
    %v3164 = vadd.f32 %v2880, %v3163
    %v3165 = vpop.f32.mrf.mxu0
    %3166 = vmatprep.mubr.bf16.mxu0 0
    %3167 = vmatmul.mubr.bf16.gmra.mxu0 %v2950
    %v3168 = vpop.f32.mrf.mxu0
    %v3169 = vadd.f32 %v2880, %v3168
    %v3170 = vpop.f32.mrf.mxu0
    %v3171 = vpop.f32.mrf.mxu0
    %v3172 = vadd.f32 %v2880, %v3171
    %v3173 = vpop.f32.mrf.mxu0
    %3174 = vmatprep.mubr.bf16.mxu0 0
    %3175 = vmatmul.mubr.bf16.gmra.mxu0 %v2953
    %v3176 = vpop.f32.mrf.mxu0
    %v3177 = vadd.f32 %v2880, %v3176
    %v3178 = vpop.f32.mrf.mxu0
    %v3179 = vpop.f32.mrf.mxu0
    %v3180 = vadd.f32 %v2880, %v3179
    %v3181 = vpop.f32.mrf.mxu0
    %3182 = vmatprep.mubr.bf16.mxu0 0
    %3183 = vmatmul.mubr.bf16.gmra.mxu0 %v2956
    %v3184 = vpop.f32.mrf.mxu0
    %v3185 = vadd.f32 %v2880, %v3184
    %v3186 = vpop.f32.mrf.mxu0
    %v3187 = vpop.f32.mrf.mxu0
    %v3188 = vadd.f32 %v2880, %v3187
    %v3189 = vpop.f32.mrf.mxu0
    %3190 = vmatprep.mubr.bf16.mxu0 0
    %3191 = vmatmul.mubr.bf16.gmra.mxu0 %v2959
    %v3192 = vpop.f32.mrf.mxu0
    %v3193 = vadd.f32 %v2880, %v3192
    %v3194 = vpop.f32.mrf.mxu0
    %v3195 = vpop.f32.mrf.mxu0
    %v3196 = vadd.f32 %v2880, %v3195
    %v3197 = vpop.f32.mrf.mxu0
    %3198 = vmatprep.mubr.bf16.mxu0 0
    %3199 = vmatmul.mubr.bf16.gmra.mxu0 %v2962
    %v3200 = vpop.f32.mrf.mxu0
    %v3201 = vadd.f32 %v2880, %v3200
    %v3202 = vpop.f32.mrf.mxu0
    %v3203 = vpop.f32.mrf.mxu0
    %v3204 = vadd.f32 %v2880, %v3203
    %v3205 = vpop.f32.mrf.mxu0
    %3206 = vmatprep.mubr.bf16.mxu0 0
    %3207 = vmatmul.mubr.bf16.gmra.mxu0 %v2965
    %v3208 = vpop.f32.mrf.mxu0
    %v3209 = vadd.f32 %v2880, %v3208
    %v3210 = vpop.f32.mrf.mxu0
    %v3211 = vpop.f32.mrf.mxu0
    %v3212 = vadd.f32 %v2880, %v3211
    %v3213 = vpop.f32.mrf.mxu0
    %3214 = vmatprep.mubr.bf16.mxu0 0
    %3215 = vmatmul.mubr.bf16.gmra.mxu0 %v2968
    %v3216 = vpop.f32.mrf.mxu0
    %v3217 = vadd.f32 %v2880, %v3216
    %v3218 = vpop.f32.mrf.mxu0
    %v3219 = vpop.f32.mrf.mxu0
    %v3220 = vadd.f32 %v2880, %v3219
    %v3221 = vpop.f32.mrf.mxu0
    %3222 = vmatprep.mubr.bf16.mxu0 0
    %3223 = vmatmul.mubr.bf16.gmra.mxu0 %v2971
    %v3224 = vpop.f32.mrf.mxu0
    %v3225 = vadd.f32 %v2880, %v3224
    %v3226 = vpop.f32.mrf.mxu0
    %v3227 = vpop.f32.mrf.mxu0
    %v3228 = vadd.f32 %v2880, %v3227
    %v3229 = vpop.f32.mrf.mxu0
    %3230 = vmatprep.mubr.bf16.mxu0 0
    %3231 = vmatmul.mubr.bf16.gmra.mxu0 %v2974
    %v3232 = vpop.f32.mrf.mxu0
    %v3233 = vadd.f32 %v2880, %v3232
    %v3234 = vpop.f32.mrf.mxu0
    %v3235 = vpop.f32.mrf.mxu0
    %v3236 = vadd.f32 %v2880, %v3235
    %v3237 = vpop.f32.mrf.mxu0
    %3238 = vmatprep.mubr.bf16.mxu0 0
    %3239 = vmatmul.mubr.bf16.gmra.mxu0 %v2977
    %v3240 = vpop.f32.mrf.mxu0
    %v3241 = vadd.f32 %v2880, %v3240
    %v3242 = vpop.f32.mrf.mxu0
    %v3243 = vpop.f32.mrf.mxu0
    %v3244 = vadd.f32 %v2880, %v3243
    %v3245 = vpop.f32.mrf.mxu0
    %3246 = vmatprep.mubr.bf16.mxu0 0
    %3247 = vmatmul.mubr.bf16.gmra.mxu0 %v2980
    %v3248 = vpop.f32.mrf.mxu0
    %v3249 = vadd.f32 %v2880, %v3248
    %v3250 = vpop.f32.mrf.mxu0
    %v3251 = vpop.f32.mrf.mxu0
    %v3252 = vadd.f32 %v2880, %v3251
    %v3253 = vpop.f32.mrf.mxu0
    %3254 = vmatprep.mubr.bf16.mxu0 0
    %3255 = vmatmul.mubr.bf16.gmra.mxu0 %v2983
    %v3256 = vpop.f32.mrf.mxu0
    %v3257 = vadd.f32 %v2880, %v3256
    %v3258 = vpop.f32.mrf.mxu0
    %v3259 = vpop.f32.mrf.mxu0
    %v3260 = vadd.f32 %v2880, %v3259
    %v3261 = vpop.f32.mrf.mxu0
    %3262 = vmatprep.mubr.bf16.mxu0 0
    %3263 = vmatmul.mubr.bf16.gmra.mxu0 %v2986
    %v3264 = vpop.f32.mrf.mxu0
    %v3265 = vadd.f32 %v2880, %v3264
    %v3266 = vpop.f32.mrf.mxu0
    %v3267 = vpop.f32.mrf.mxu0
    %v3268 = vadd.f32 %v2880, %v3267
    %v3269 = vpop.f32.mrf.mxu0
    %3270 = vmatprep.mubr.bf16.mxu0 0
    %3271 = vmatmul.mubr.bf16.gmra.mxu0 %v2989
    %v3272 = vpop.f32.mrf.mxu0
    %v3273 = vadd.f32 %v2880, %v3272
    %v3274 = vpop.f32.mrf.mxu0
    %v3275 = vpop.f32.mrf.mxu0
    %v3276 = vadd.f32 %v2880, %v3275
    %v3277 = vpop.f32.mrf.mxu0
    %3278 = vmatprep.mubr.bf16.mxu0 0
    %3279 = vmatmul.mubr.bf16.gmra.mxu0 %v2992
    %v3280 = vpop.f32.mrf.mxu0
    %v3281 = vadd.f32 %v2880, %v3280
    %v3282 = vpop.f32.mrf.mxu0
    %v3283 = vpop.f32.mrf.mxu0
    %v3284 = vadd.f32 %v2880, %v3283
    %v3285 = vpop.f32.mrf.mxu0
    %3286 = vdwg.mxu0
    %v3287 = vmax.f32 %v3033, 0.0
    %v3288 = vmax.f32 %v3036, 0.0
    %v3289 = vmax.f32 %v3041, 0.0
    %v3290 = vmax.f32 %v3044, 0.0
    %v3291 = vmax.f32 %v3049, 0.0
    %v3292 = vmax.f32 %v3052, 0.0
    %v3293 = vmax.f32 %v3057, 0.0
    %v3294 = vmax.f32 %v3060, 0.0
    %v3295 = vmax.f32 %v3065, 0.0
    %v3296 = vmax.f32 %v3068, 0.0
    %v3297 = vmax.f32 %v3073, 0.0
    %v3298 = vmax.f32 %v3076, 0.0
    %v3299 = vmax.f32 %v3081, 0.0
    %v3300 = vmax.f32 %v3084, 0.0
    %v3301 = vmax.f32 %v3089, 0.0
    %v3302 = vmax.f32 %v3092, 0.0
    %v3303 = vmax.f32 %v3097, 0.0
    %v3304 = vmax.f32 %v3100, 0.0
    %v3305 = vmax.f32 %v3105, 0.0
    %v3306 = vmax.f32 %v3108, 0.0
    %v3307 = vmax.f32 %v3113, 0.0
    %v3308 = vmax.f32 %v3116, 0.0
    %v3309 = vmax.f32 %v3121, 0.0
    %v3310 = vmax.f32 %v3124, 0.0
    %v3311 = vmax.f32 %v3129, 0.0
    %v3312 = vmax.f32 %v3132, 0.0
    %v3313 = vmax.f32 %v3137, 0.0
    %v3314 = vmax.f32 %v3140, 0.0
    %v3315 = vmax.f32 %v3145, 0.0
    %v3316 = vmax.f32 %v3148, 0.0
    %v3317 = vmax.f32 %v3153, 0.0
    %v3318 = vmax.f32 %v3156, 0.0
    %v3319 = vmax.f32 %v3161, 0.0
    %v3320 = vmax.f32 %v3164, 0.0
    %v3321 = vmax.f32 %v3169, 0.0
    %v3322 = vmax.f32 %v3172, 0.0
    %v3323 = vmax.f32 %v3177, 0.0
    %v3324 = vmax.f32 %v3180, 0.0
    %v3325 = vmax.f32 %v3185, 0.0
    %v3326 = vmax.f32 %v3188, 0.0
    %v3327 = vmax.f32 %v3193, 0.0
    %v3328 = vmax.f32 %v3196, 0.0
    %v3329 = vmax.f32 %v3201, 0.0
    %v3330 = vmax.f32 %v3204, 0.0
    %v3331 = vmax.f32 %v3209, 0.0
    %v3332 = vmax.f32 %v3212, 0.0
    %v3333 = vmax.f32 %v3217, 0.0
    %v3334 = vmax.f32 %v3220, 0.0
    %v3335 = vmax.f32 %v3225, 0.0
    %v3336 = vmax.f32 %v3228, 0.0
    %v3337 = vmax.f32 %v3233, 0.0
    %v3338 = vmax.f32 %v3236, 0.0
    %v3339 = vmax.f32 %v3241, 0.0
    %v3340 = vmax.f32 %v3244, 0.0
    %v3341 = vmax.f32 %v3249, 0.0
    %v3342 = vmax.f32 %v3252, 0.0
    %v3343 = vmax.f32 %v3257, 0.0
    %v3344 = vmax.f32 %v3260, 0.0
    %v3345 = vmax.f32 %v3265, 0.0
    %v3346 = vmax.f32 %v3268, 0.0
    %v3347 = vmax.f32 %v3273, 0.0
    %v3348 = vmax.f32 %v3276, 0.0
    %v3349 = vmax.f32 %v3281, 0.0
    %v3350 = vmax.f32 %v3284, 0.0
    %v3351 = vmax.f32 %v3287, %v3289
    %v3352 = vmax.f32 %v3288, %v3290
    %v3353 = vmax.f32 %v3291, %v3293
    %v3354 = vmax.f32 %v3292, %v3294
    %v3355 = vmax.f32 %v3295, %v3297
    %v3356 = vmax.f32 %v3296, %v3298
    %v3357 = vmax.f32 %v3299, %v3301
    %v3358 = vmax.f32 %v3300, %v3302
    %v3359 = vmax.f32 %v3303, %v3305
    %v3360 = vmax.f32 %v3304, %v3306
    %v3361 = vmax.f32 %v3307, %v3309
    %v3362 = vmax.f32 %v3308, %v3310
    %v3363 = vmax.f32 %v3311, %v3313
    %v3364 = vmax.f32 %v3312, %v3314
    %v3365 = vmax.f32 %v3315, %v3317
    %v3366 = vmax.f32 %v3316, %v3318
    %v3367 = vmax.f32 %v3319, %v3321
    %v3368 = vmax.f32 %v3320, %v3322
    %v3369 = vmax.f32 %v3323, %v3325
    %v3370 = vmax.f32 %v3324, %v3326
    %v3371 = vmax.f32 %v3327, %v3329
    %v3372 = vmax.f32 %v3328, %v3330
    %v3373 = vmax.f32 %v3331, %v3333
    %v3374 = vmax.f32 %v3332, %v3334
    %v3375 = vmax.f32 %v3335, %v3337
    %v3376 = vmax.f32 %v3336, %v3338
    %v3377 = vmax.f32 %v3339, %v3341
    %v3378 = vmax.f32 %v3340, %v3342
    %v3379 = vmax.f32 %v3343, %v3345
    %v3380 = vmax.f32 %v3344, %v3346
    %v3381 = vmax.f32 %v3347, %v3349
    %v3382 = vmax.f32 %v3348, %v3350
    %v3415 = vcombine.high %v3351, %v3351
    %v3417 = vunpack.c.l.s4 1983009808
    %v3418 = vunpack.c.0.s8 %v3417
    %v3419 = vlaneseq
    %v3420 = vshrl.u32 %v3419, 7
    %v3421 = vsub.s32 %v3418, %v3420
    %v3422 = vrot.slane %v3351, %v3421
    %v3424 = vunpack.c.l.s4 1983009808
    %v3425 = vunpack.c.0.s8 %v3424
    %v3426 = vlaneseq
    %v3427 = vshrl.u32 %v3426, 7
    %v3428 = vsub.s32 %v3425, %v3427
    %v3429 = vrot.slane %v3415, %v3428
    %v3430 = vcombine.high %v3422, %v3422
    %v3431 = vcombine.high %v3429, %v3429
    %v3432 = vcombine.high %v3352, %v3352
    %v3434 = vunpack.c.l.s4 1983009808
    %v3435 = vunpack.c.0.s8 %v3434
    %v3436 = vlaneseq
    %v3437 = vshrl.u32 %v3436, 7
    %v3438 = vsub.s32 %v3435, %v3437
    %v3439 = vrot.slane %v3352, %v3438
    %v3441 = vunpack.c.l.s4 1983009808
    %v3442 = vunpack.c.0.s8 %v3441
    %v3443 = vlaneseq
    %v3444 = vshrl.u32 %v3443, 7
    %v3445 = vsub.s32 %v3442, %v3444
    %v3446 = vrot.slane %v3432, %v3445
    %v3447 = vcombine.high %v3439, %v3439
    %v3448 = vcombine.high %v3446, %v3446
    %v3449 = vcombine.high %v3353, %v3353
    %v3451 = vunpack.c.l.s4 1983009808
    %v3452 = vunpack.c.0.s8 %v3451
    %v3453 = vlaneseq
    %v3454 = vshrl.u32 %v3453, 7
    %v3455 = vsub.s32 %v3452, %v3454
    %v3456 = vrot.slane %v3353, %v3455
    %v3458 = vunpack.c.l.s4 1983009808
    %v3459 = vunpack.c.0.s8 %v3458
    %v3460 = vlaneseq
    %v3461 = vshrl.u32 %v3460, 7
    %v3462 = vsub.s32 %v3459, %v3461
    %v3463 = vrot.slane %v3449, %v3462
    %v3464 = vcombine.high %v3456, %v3456
    %v3465 = vcombine.high %v3463, %v3463
    %v3466 = vcombine.high %v3354, %v3354
    %v3468 = vunpack.c.l.s4 1983009808
    %v3469 = vunpack.c.0.s8 %v3468
    %v3470 = vlaneseq
    %v3471 = vshrl.u32 %v3470, 7
    %v3472 = vsub.s32 %v3469, %v3471
    %v3473 = vrot.slane %v3354, %v3472
    %v3475 = vunpack.c.l.s4 1983009808
    %v3476 = vunpack.c.0.s8 %v3475
    %v3477 = vlaneseq
    %v3478 = vshrl.u32 %v3477, 7
    %v3479 = vsub.s32 %v3476, %v3478
    %v3480 = vrot.slane %v3466, %v3479
    %v3481 = vcombine.high %v3473, %v3473
    %v3482 = vcombine.high %v3480, %v3480
    %v3483 = vcombine.high %v3355, %v3355
    %v3485 = vunpack.c.l.s4 1983009808
    %v3486 = vunpack.c.0.s8 %v3485
    %v3487 = vlaneseq
    %v3488 = vshrl.u32 %v3487, 7
    %v3489 = vsub.s32 %v3486, %v3488
    %v3490 = vrot.slane %v3355, %v3489
    %v3492 = vunpack.c.l.s4 1983009808
    %v3493 = vunpack.c.0.s8 %v3492
    %v3494 = vlaneseq
    %v3495 = vshrl.u32 %v3494, 7
    %v3496 = vsub.s32 %v3493, %v3495
    %v3497 = vrot.slane %v3483, %v3496
    %v3498 = vcombine.high %v3490, %v3490
    %v3499 = vcombine.high %v3497, %v3497
    %v3500 = vcombine.high %v3356, %v3356
    %v3502 = vunpack.c.l.s4 1983009808
    %v3503 = vunpack.c.0.s8 %v3502
    %v3504 = vlaneseq
    %v3505 = vshrl.u32 %v3504, 7
    %v3506 = vsub.s32 %v3503, %v3505
    %v3507 = vrot.slane %v3356, %v3506
    %v3509 = vunpack.c.l.s4 1983009808
    %v3510 = vunpack.c.0.s8 %v3509
    %v3511 = vlaneseq
    %v3512 = vshrl.u32 %v3511, 7
    %v3513 = vsub.s32 %v3510, %v3512
    %v3514 = vrot.slane %v3500, %v3513
    %v3515 = vcombine.high %v3507, %v3507
    %v3516 = vcombine.high %v3514, %v3514
    %v3517 = vcombine.high %v3357, %v3357
    %v3519 = vunpack.c.l.s4 1983009808
    %v3520 = vunpack.c.0.s8 %v3519
    %v3521 = vlaneseq
    %v3522 = vshrl.u32 %v3521, 7
    %v3523 = vsub.s32 %v3520, %v3522
    %v3524 = vrot.slane %v3357, %v3523
    %v3526 = vunpack.c.l.s4 1983009808
    %v3527 = vunpack.c.0.s8 %v3526
    %v3528 = vlaneseq
    %v3529 = vshrl.u32 %v3528, 7
    %v3530 = vsub.s32 %v3527, %v3529
    %v3531 = vrot.slane %v3517, %v3530
    %v3532 = vcombine.high %v3524, %v3524
    %v3533 = vcombine.high %v3531, %v3531
    %v3534 = vcombine.high %v3358, %v3358
    %v3536 = vunpack.c.l.s4 1983009808
    %v3537 = vunpack.c.0.s8 %v3536
    %v3538 = vlaneseq
    %v3539 = vshrl.u32 %v3538, 7
    %v3540 = vsub.s32 %v3537, %v3539
    %v3541 = vrot.slane %v3358, %v3540
    %v3543 = vunpack.c.l.s4 1983009808
    %v3544 = vunpack.c.0.s8 %v3543
    %v3545 = vlaneseq
    %v3546 = vshrl.u32 %v3545, 7
    %v3547 = vsub.s32 %v3544, %v3546
    %v3548 = vrot.slane %v3534, %v3547
    %v3549 = vcombine.high %v3541, %v3541
    %v3550 = vcombine.high %v3548, %v3548
    %v3551 = vcombine.high %v3359, %v3359
    %v3553 = vunpack.c.l.s4 1983009808
    %v3554 = vunpack.c.0.s8 %v3553
    %v3555 = vlaneseq
    %v3556 = vshrl.u32 %v3555, 7
    %v3557 = vsub.s32 %v3554, %v3556
    %v3558 = vrot.slane %v3359, %v3557
    %v3560 = vunpack.c.l.s4 1983009808
    %v3561 = vunpack.c.0.s8 %v3560
    %v3562 = vlaneseq
    %v3563 = vshrl.u32 %v3562, 7
    %v3564 = vsub.s32 %v3561, %v3563
    %v3565 = vrot.slane %v3551, %v3564
    %v3566 = vcombine.high %v3558, %v3558
    %v3567 = vcombine.high %v3565, %v3565
    %v3568 = vcombine.high %v3360, %v3360
    %v3570 = vunpack.c.l.s4 1983009808
    %v3571 = vunpack.c.0.s8 %v3570
    %v3572 = vlaneseq
    %v3573 = vshrl.u32 %v3572, 7
    %v3574 = vsub.s32 %v3571, %v3573
    %v3575 = vrot.slane %v3360, %v3574
    %v3577 = vunpack.c.l.s4 1983009808
    %v3578 = vunpack.c.0.s8 %v3577
    %v3579 = vlaneseq
    %v3580 = vshrl.u32 %v3579, 7
    %v3581 = vsub.s32 %v3578, %v3580
    %v3582 = vrot.slane %v3568, %v3581
    %v3583 = vcombine.high %v3575, %v3575
    %v3584 = vcombine.high %v3582, %v3582
    %v3585 = vcombine.high %v3361, %v3361
    %v3587 = vunpack.c.l.s4 1983009808
    %v3588 = vunpack.c.0.s8 %v3587
    %v3589 = vlaneseq
    %v3590 = vshrl.u32 %v3589, 7
    %v3591 = vsub.s32 %v3588, %v3590
    %v3592 = vrot.slane %v3361, %v3591
    %v3594 = vunpack.c.l.s4 1983009808
    %v3595 = vunpack.c.0.s8 %v3594
    %v3596 = vlaneseq
    %v3597 = vshrl.u32 %v3596, 7
    %v3598 = vsub.s32 %v3595, %v3597
    %v3599 = vrot.slane %v3585, %v3598
    %v3600 = vcombine.high %v3592, %v3592
    %v3601 = vcombine.high %v3599, %v3599
    %v3602 = vcombine.high %v3362, %v3362
    %v3604 = vunpack.c.l.s4 1983009808
    %v3605 = vunpack.c.0.s8 %v3604
    %v3606 = vlaneseq
    %v3607 = vshrl.u32 %v3606, 7
    %v3608 = vsub.s32 %v3605, %v3607
    %v3609 = vrot.slane %v3362, %v3608
    %v3611 = vunpack.c.l.s4 1983009808
    %v3612 = vunpack.c.0.s8 %v3611
    %v3613 = vlaneseq
    %v3614 = vshrl.u32 %v3613, 7
    %v3615 = vsub.s32 %v3612, %v3614
    %v3616 = vrot.slane %v3602, %v3615
    %v3617 = vcombine.high %v3609, %v3609
    %v3618 = vcombine.high %v3616, %v3616
    %v3619 = vcombine.high %v3363, %v3363
    %v3621 = vunpack.c.l.s4 1983009808
    %v3622 = vunpack.c.0.s8 %v3621
    %v3623 = vlaneseq
    %v3624 = vshrl.u32 %v3623, 7
    %v3625 = vsub.s32 %v3622, %v3624
    %v3626 = vrot.slane %v3363, %v3625
    %v3628 = vunpack.c.l.s4 1983009808
    %v3629 = vunpack.c.0.s8 %v3628
    %v3630 = vlaneseq
    %v3631 = vshrl.u32 %v3630, 7
    %v3632 = vsub.s32 %v3629, %v3631
    %v3633 = vrot.slane %v3619, %v3632
    %v3634 = vcombine.high %v3626, %v3626
    %v3635 = vcombine.high %v3633, %v3633
    %v3636 = vcombine.high %v3364, %v3364
    %v3638 = vunpack.c.l.s4 1983009808
    %v3639 = vunpack.c.0.s8 %v3638
    %v3640 = vlaneseq
    %v3641 = vshrl.u32 %v3640, 7
    %v3642 = vsub.s32 %v3639, %v3641
    %v3643 = vrot.slane %v3364, %v3642
    %v3645 = vunpack.c.l.s4 1983009808
    %v3646 = vunpack.c.0.s8 %v3645
    %v3647 = vlaneseq
    %v3648 = vshrl.u32 %v3647, 7
    %v3649 = vsub.s32 %v3646, %v3648
    %v3650 = vrot.slane %v3636, %v3649
    %v3651 = vcombine.high %v3643, %v3643
    %v3652 = vcombine.high %v3650, %v3650
    %v3653 = vcombine.high %v3365, %v3365
    %v3655 = vunpack.c.l.s4 1983009808
    %v3656 = vunpack.c.0.s8 %v3655
    %v3657 = vlaneseq
    %v3658 = vshrl.u32 %v3657, 7
    %v3659 = vsub.s32 %v3656, %v3658
    %v3660 = vrot.slane %v3365, %v3659
    %v3662 = vunpack.c.l.s4 1983009808
    %v3663 = vunpack.c.0.s8 %v3662
    %v3664 = vlaneseq
    %v3665 = vshrl.u32 %v3664, 7
    %v3666 = vsub.s32 %v3663, %v3665
    %v3667 = vrot.slane %v3653, %v3666
    %v3668 = vcombine.high %v3660, %v3660
    %v3669 = vcombine.high %v3667, %v3667
    %v3670 = vcombine.high %v3366, %v3366
    %v3672 = vunpack.c.l.s4 1983009808
    %v3673 = vunpack.c.0.s8 %v3672
    %v3674 = vlaneseq
    %v3675 = vshrl.u32 %v3674, 7
    %v3676 = vsub.s32 %v3673, %v3675
    %v3677 = vrot.slane %v3366, %v3676
    %v3679 = vunpack.c.l.s4 1983009808
    %v3680 = vunpack.c.0.s8 %v3679
    %v3681 = vlaneseq
    %v3682 = vshrl.u32 %v3681, 7
    %v3683 = vsub.s32 %v3680, %v3682
    %v3684 = vrot.slane %v3670, %v3683
    %v3685 = vcombine.high %v3677, %v3677
    %v3686 = vcombine.high %v3684, %v3684
    %v3687 = vcombine.high %v3367, %v3367
    %v3689 = vunpack.c.l.s4 1983009808
    %v3690 = vunpack.c.0.s8 %v3689
    %v3691 = vlaneseq
    %v3692 = vshrl.u32 %v3691, 7
    %v3693 = vsub.s32 %v3690, %v3692
    %v3694 = vrot.slane %v3367, %v3693
    %v3696 = vunpack.c.l.s4 1983009808
    %v3697 = vunpack.c.0.s8 %v3696
    %v3698 = vlaneseq
    %v3699 = vshrl.u32 %v3698, 7
    %v3700 = vsub.s32 %v3697, %v3699
    %v3701 = vrot.slane %v3687, %v3700
    %v3702 = vcombine.high %v3694, %v3694
    %v3703 = vcombine.high %v3701, %v3701
    %v3704 = vcombine.high %v3368, %v3368
    %v3706 = vunpack.c.l.s4 1983009808
    %v3707 = vunpack.c.0.s8 %v3706
    %v3708 = vlaneseq
    %v3709 = vshrl.u32 %v3708, 7
    %v3710 = vsub.s32 %v3707, %v3709
    %v3711 = vrot.slane %v3368, %v3710
    %v3713 = vunpack.c.l.s4 1983009808
    %v3714 = vunpack.c.0.s8 %v3713
    %v3715 = vlaneseq
    %v3716 = vshrl.u32 %v3715, 7
    %v3717 = vsub.s32 %v3714, %v3716
    %v3718 = vrot.slane %v3704, %v3717
    %v3719 = vcombine.high %v3711, %v3711
    %v3720 = vcombine.high %v3718, %v3718
    %v3721 = vcombine.high %v3369, %v3369
    %v3723 = vunpack.c.l.s4 1983009808
    %v3724 = vunpack.c.0.s8 %v3723
    %v3725 = vlaneseq
    %v3726 = vshrl.u32 %v3725, 7
    %v3727 = vsub.s32 %v3724, %v3726
    %v3728 = vrot.slane %v3369, %v3727
    %v3730 = vunpack.c.l.s4 1983009808
    %v3731 = vunpack.c.0.s8 %v3730
    %v3732 = vlaneseq
    %v3733 = vshrl.u32 %v3732, 7
    %v3734 = vsub.s32 %v3731, %v3733
    %v3735 = vrot.slane %v3721, %v3734
    %v3736 = vcombine.high %v3728, %v3728
    %v3737 = vcombine.high %v3735, %v3735
    %v3738 = vcombine.high %v3370, %v3370
    %v3740 = vunpack.c.l.s4 1983009808
    %v3741 = vunpack.c.0.s8 %v3740
    %v3742 = vlaneseq
    %v3743 = vshrl.u32 %v3742, 7
    %v3744 = vsub.s32 %v3741, %v3743
    %v3745 = vrot.slane %v3370, %v3744
    %v3747 = vunpack.c.l.s4 1983009808
    %v3748 = vunpack.c.0.s8 %v3747
    %v3749 = vlaneseq
    %v3750 = vshrl.u32 %v3749, 7
    %v3751 = vsub.s32 %v3748, %v3750
    %v3752 = vrot.slane %v3738, %v3751
    %v3753 = vcombine.high %v3745, %v3745
    %v3754 = vcombine.high %v3752, %v3752
    %v3755 = vcombine.high %v3371, %v3371
    %v3757 = vunpack.c.l.s4 1983009808
    %v3758 = vunpack.c.0.s8 %v3757
    %v3759 = vlaneseq
    %v3760 = vshrl.u32 %v3759, 7
    %v3761 = vsub.s32 %v3758, %v3760
    %v3762 = vrot.slane %v3371, %v3761
    %v3764 = vunpack.c.l.s4 1983009808
    %v3765 = vunpack.c.0.s8 %v3764
    %v3766 = vlaneseq
    %v3767 = vshrl.u32 %v3766, 7
    %v3768 = vsub.s32 %v3765, %v3767
    %v3769 = vrot.slane %v3755, %v3768
    %v3770 = vcombine.high %v3762, %v3762
    %v3771 = vcombine.high %v3769, %v3769
    %v3772 = vcombine.high %v3372, %v3372
    %v3774 = vunpack.c.l.s4 1983009808
    %v3775 = vunpack.c.0.s8 %v3774
    %v3776 = vlaneseq
    %v3777 = vshrl.u32 %v3776, 7
    %v3778 = vsub.s32 %v3775, %v3777
    %v3779 = vrot.slane %v3372, %v3778
    %v3781 = vunpack.c.l.s4 1983009808
    %v3782 = vunpack.c.0.s8 %v3781
    %v3783 = vlaneseq
    %v3784 = vshrl.u32 %v3783, 7
    %v3785 = vsub.s32 %v3782, %v3784
    %v3786 = vrot.slane %v3772, %v3785
    %v3787 = vcombine.high %v3779, %v3779
    %v3788 = vcombine.high %v3786, %v3786
    %v3789 = vcombine.high %v3373, %v3373
    %v3791 = vunpack.c.l.s4 1983009808
    %v3792 = vunpack.c.0.s8 %v3791
    %v3793 = vlaneseq
    %v3794 = vshrl.u32 %v3793, 7
    %v3795 = vsub.s32 %v3792, %v3794
    %v3796 = vrot.slane %v3373, %v3795
    %v3798 = vunpack.c.l.s4 1983009808
    %v3799 = vunpack.c.0.s8 %v3798
    %v3800 = vlaneseq
    %v3801 = vshrl.u32 %v3800, 7
    %v3802 = vsub.s32 %v3799, %v3801
    %v3803 = vrot.slane %v3789, %v3802
    %v3804 = vcombine.high %v3796, %v3796
    %v3805 = vcombine.high %v3803, %v3803
    %v3806 = vcombine.high %v3374, %v3374
    %v3808 = vunpack.c.l.s4 1983009808
    %v3809 = vunpack.c.0.s8 %v3808
    %v3810 = vlaneseq
    %v3811 = vshrl.u32 %v3810, 7
    %v3812 = vsub.s32 %v3809, %v3811
    %v3813 = vrot.slane %v3374, %v3812
    %v3815 = vunpack.c.l.s4 1983009808
    %v3816 = vunpack.c.0.s8 %v3815
    %v3817 = vlaneseq
    %v3818 = vshrl.u32 %v3817, 7
    %v3819 = vsub.s32 %v3816, %v3818
    %v3820 = vrot.slane %v3806, %v3819
    %v3821 = vcombine.high %v3813, %v3813
    %v3822 = vcombine.high %v3820, %v3820
    %v3823 = vcombine.high %v3375, %v3375
    %v3825 = vunpack.c.l.s4 1983009808
    %v3826 = vunpack.c.0.s8 %v3825
    %v3827 = vlaneseq
    %v3828 = vshrl.u32 %v3827, 7
    %v3829 = vsub.s32 %v3826, %v3828
    %v3830 = vrot.slane %v3375, %v3829
    %v3832 = vunpack.c.l.s4 1983009808
    %v3833 = vunpack.c.0.s8 %v3832
    %v3834 = vlaneseq
    %v3835 = vshrl.u32 %v3834, 7
    %v3836 = vsub.s32 %v3833, %v3835
    %v3837 = vrot.slane %v3823, %v3836
    %v3838 = vcombine.high %v3830, %v3830
    %v3839 = vcombine.high %v3837, %v3837
    %v3840 = vcombine.high %v3376, %v3376
    %v3842 = vunpack.c.l.s4 1983009808
    %v3843 = vunpack.c.0.s8 %v3842
    %v3844 = vlaneseq
    %v3845 = vshrl.u32 %v3844, 7
    %v3846 = vsub.s32 %v3843, %v3845
    %v3847 = vrot.slane %v3376, %v3846
    %v3849 = vunpack.c.l.s4 1983009808
    %v3850 = vunpack.c.0.s8 %v3849
    %v3851 = vlaneseq
    %v3852 = vshrl.u32 %v3851, 7
    %v3853 = vsub.s32 %v3850, %v3852
    %v3854 = vrot.slane %v3840, %v3853
    %v3855 = vcombine.high %v3847, %v3847
    %v3856 = vcombine.high %v3854, %v3854
    %v3857 = vcombine.high %v3377, %v3377
    %v3859 = vunpack.c.l.s4 1983009808
    %v3860 = vunpack.c.0.s8 %v3859
    %v3861 = vlaneseq
    %v3862 = vshrl.u32 %v3861, 7
    %v3863 = vsub.s32 %v3860, %v3862
    %v3864 = vrot.slane %v3377, %v3863
    %v3866 = vunpack.c.l.s4 1983009808
    %v3867 = vunpack.c.0.s8 %v3866
    %v3868 = vlaneseq
    %v3869 = vshrl.u32 %v3868, 7
    %v3870 = vsub.s32 %v3867, %v3869
    %v3871 = vrot.slane %v3857, %v3870
    %v3872 = vcombine.high %v3864, %v3864
    %v3873 = vcombine.high %v3871, %v3871
    %v3874 = vcombine.high %v3378, %v3378
    %v3876 = vunpack.c.l.s4 1983009808
    %v3877 = vunpack.c.0.s8 %v3876
    %v3878 = vlaneseq
    %v3879 = vshrl.u32 %v3878, 7
    %v3880 = vsub.s32 %v3877, %v3879
    %v3881 = vrot.slane %v3378, %v3880
    %v3883 = vunpack.c.l.s4 1983009808
    %v3884 = vunpack.c.0.s8 %v3883
    %v3885 = vlaneseq
    %v3886 = vshrl.u32 %v3885, 7
    %v3887 = vsub.s32 %v3884, %v3886
    %v3888 = vrot.slane %v3874, %v3887
    %v3889 = vcombine.high %v3881, %v3881
    %v3890 = vcombine.high %v3888, %v3888
    %v3891 = vcombine.high %v3379, %v3379
    %v3893 = vunpack.c.l.s4 1983009808
    %v3894 = vunpack.c.0.s8 %v3893
    %v3895 = vlaneseq
    %v3896 = vshrl.u32 %v3895, 7
    %v3897 = vsub.s32 %v3894, %v3896
    %v3898 = vrot.slane %v3379, %v3897
    %v3900 = vunpack.c.l.s4 1983009808
    %v3901 = vunpack.c.0.s8 %v3900
    %v3902 = vlaneseq
    %v3903 = vshrl.u32 %v3902, 7
    %v3904 = vsub.s32 %v3901, %v3903
    %v3905 = vrot.slane %v3891, %v3904
    %v3906 = vcombine.high %v3898, %v3898
    %v3907 = vcombine.high %v3905, %v3905
    %v3908 = vcombine.high %v3380, %v3380
    %v3910 = vunpack.c.l.s4 1983009808
    %v3911 = vunpack.c.0.s8 %v3910
    %v3912 = vlaneseq
    %v3913 = vshrl.u32 %v3912, 7
    %v3914 = vsub.s32 %v3911, %v3913
    %v3915 = vrot.slane %v3380, %v3914
    %v3917 = vunpack.c.l.s4 1983009808
    %v3918 = vunpack.c.0.s8 %v3917
    %v3919 = vlaneseq
    %v3920 = vshrl.u32 %v3919, 7
    %v3921 = vsub.s32 %v3918, %v3920
    %v3922 = vrot.slane %v3908, %v3921
    %v3923 = vcombine.high %v3915, %v3915
    %v3924 = vcombine.high %v3922, %v3922
    %v3925 = vcombine.high %v3381, %v3381
    %v3927 = vunpack.c.l.s4 1983009808
    %v3928 = vunpack.c.0.s8 %v3927
    %v3929 = vlaneseq
    %v3930 = vshrl.u32 %v3929, 7
    %v3931 = vsub.s32 %v3928, %v3930
    %v3932 = vrot.slane %v3381, %v3931
    %v3934 = vunpack.c.l.s4 1983009808
    %v3935 = vunpack.c.0.s8 %v3934
    %v3936 = vlaneseq
    %v3937 = vshrl.u32 %v3936, 7
    %v3938 = vsub.s32 %v3935, %v3937
    %v3939 = vrot.slane %v3925, %v3938
    %v3940 = vcombine.high %v3932, %v3932
    %v3941 = vcombine.high %v3939, %v3939
    %v3942 = vcombine.high %v3382, %v3382
    %v3944 = vunpack.c.l.s4 1983009808
    %v3945 = vunpack.c.0.s8 %v3944
    %v3946 = vlaneseq
    %v3947 = vshrl.u32 %v3946, 7
    %v3948 = vsub.s32 %v3945, %v3947
    %v3949 = vrot.slane %v3382, %v3948
    %v3951 = vunpack.c.l.s4 1983009808
    %v3952 = vunpack.c.0.s8 %v3951
    %v3953 = vlaneseq
    %v3954 = vshrl.u32 %v3953, 7
    %v3955 = vsub.s32 %v3952, %v3954
    %v3956 = vrot.slane %v3942, %v3955
    %v3957 = vcombine.high %v3949, %v3949
    %v3958 = vcombine.high %v3956, %v3956
    %v4087 = vrot.slane %v3422, 7
    %v4088 = vrot.slane %v4087, 2
    %v4089 = vrot.slane %v3430, 7
    %v4090 = vrot.slane %v4089, 2
    %v4091 = vrot.slane %v3429, 7
    %v4092 = vrot.slane %v4091, 2
    %v4093 = vrot.slane %v3431, 7
    %v4094 = vrot.slane %v4093, 2
    %v4095 = vrot.slane %v3439, 7
    %v4096 = vrot.slane %v4095, 2
    %v4097 = vrot.slane %v3447, 7
    %v4098 = vrot.slane %v4097, 2
    %v4099 = vrot.slane %v3446, 7
    %v4100 = vrot.slane %v4099, 2
    %v4101 = vrot.slane %v3448, 7
    %v4102 = vrot.slane %v4101, 2
    %v4103 = vrot.slane %v3456, 7
    %v4104 = vrot.slane %v4103, 2
    %v4105 = vrot.slane %v3464, 7
    %v4106 = vrot.slane %v4105, 2
    %v4107 = vrot.slane %v3463, 7
    %v4108 = vrot.slane %v4107, 2
    %v4109 = vrot.slane %v3465, 7
    %v4110 = vrot.slane %v4109, 2
    %v4111 = vrot.slane %v3473, 7
    %v4112 = vrot.slane %v4111, 2
    %v4113 = vrot.slane %v3481, 7
    %v4114 = vrot.slane %v4113, 2
    %v4115 = vrot.slane %v3480, 7
    %v4116 = vrot.slane %v4115, 2
    %v4117 = vrot.slane %v3482, 7
    %v4118 = vrot.slane %v4117, 2
    %v4119 = vrot.slane %v3490, 7
    %v4120 = vrot.slane %v4119, 2
    %v4121 = vrot.slane %v3498, 7
    %v4122 = vrot.slane %v4121, 2
    %v4123 = vrot.slane %v3497, 7
    %v4124 = vrot.slane %v4123, 2
    %v4125 = vrot.slane %v3499, 7
    %v4126 = vrot.slane %v4125, 2
    %v4127 = vrot.slane %v3507, 7
    %v4128 = vrot.slane %v4127, 2
    %v4129 = vrot.slane %v3515, 7
    %v4130 = vrot.slane %v4129, 2
    %v4131 = vrot.slane %v3514, 7
    %v4132 = vrot.slane %v4131, 2
    %v4133 = vrot.slane %v3516, 7
    %v4134 = vrot.slane %v4133, 2
    %v4135 = vrot.slane %v3524, 7
    %v4136 = vrot.slane %v4135, 2
    %v4137 = vrot.slane %v3532, 7
    %v4138 = vrot.slane %v4137, 2
    %v4139 = vrot.slane %v3531, 7
    %v4140 = vrot.slane %v4139, 2
    %v4141 = vrot.slane %v3533, 7
    %v4142 = vrot.slane %v4141, 2
    %v4143 = vrot.slane %v3541, 7
    %v4144 = vrot.slane %v4143, 2
    %v4145 = vrot.slane %v3549, 7
    %v4146 = vrot.slane %v4145, 2
    %v4147 = vrot.slane %v3548, 7
    %v4148 = vrot.slane %v4147, 2
    %v4149 = vrot.slane %v3550, 7
    %v4150 = vrot.slane %v4149, 2
    %v4151 = vrot.slane %v3558, 7
    %v4152 = vrot.slane %v4151, 2
    %v4153 = vrot.slane %v3566, 7
    %v4154 = vrot.slane %v4153, 2
    %v4155 = vrot.slane %v3565, 7
    %v4156 = vrot.slane %v4155, 2
    %v4157 = vrot.slane %v3567, 7
    %v4158 = vrot.slane %v4157, 2
    %v4159 = vrot.slane %v3575, 7
    %v4160 = vrot.slane %v4159, 2
    %v4161 = vrot.slane %v3583, 7
    %v4162 = vrot.slane %v4161, 2
    %v4163 = vrot.slane %v3582, 7
    %v4164 = vrot.slane %v4163, 2
    %v4165 = vrot.slane %v3584, 7
    %v4166 = vrot.slane %v4165, 2
    %v4167 = vrot.slane %v3592, 7
    %v4168 = vrot.slane %v4167, 2
    %v4169 = vrot.slane %v3600, 7
    %v4170 = vrot.slane %v4169, 2
    %v4171 = vrot.slane %v3599, 7
    %v4172 = vrot.slane %v4171, 2
    %v4173 = vrot.slane %v3601, 7
    %v4174 = vrot.slane %v4173, 2
    %v4175 = vrot.slane %v3609, 7
    %v4176 = vrot.slane %v4175, 2
    %v4177 = vrot.slane %v3617, 7
    %v4178 = vrot.slane %v4177, 2
    %v4179 = vrot.slane %v3616, 7
    %v4180 = vrot.slane %v4179, 2
    %v4181 = vrot.slane %v3618, 7
    %v4182 = vrot.slane %v4181, 2
    %v4183 = vrot.slane %v3626, 7
    %v4184 = vrot.slane %v4183, 2
    %v4185 = vrot.slane %v3634, 7
    %v4186 = vrot.slane %v4185, 2
    %v4187 = vrot.slane %v3633, 7
    %v4188 = vrot.slane %v4187, 2
    %v4189 = vrot.slane %v3635, 7
    %v4190 = vrot.slane %v4189, 2
    %v4191 = vrot.slane %v3643, 7
    %v4192 = vrot.slane %v4191, 2
    %v4193 = vrot.slane %v3651, 7
    %v4194 = vrot.slane %v4193, 2
    %v4195 = vrot.slane %v3650, 7
    %v4196 = vrot.slane %v4195, 2
    %v4197 = vrot.slane %v3652, 7
    %v4198 = vrot.slane %v4197, 2
    %v4199 = vrot.slane %v3660, 7
    %v4200 = vrot.slane %v4199, 2
    %v4201 = vrot.slane %v3668, 7
    %v4202 = vrot.slane %v4201, 2
    %v4203 = vrot.slane %v3667, 7
    %v4204 = vrot.slane %v4203, 2
    %v4205 = vrot.slane %v3669, 7
    %v4206 = vrot.slane %v4205, 2
    %v4207 = vrot.slane %v3677, 7
    %v4208 = vrot.slane %v4207, 2
    %v4209 = vrot.slane %v3685, 7
    %v4210 = vrot.slane %v4209, 2
    %v4211 = vrot.slane %v3684, 7
    %v4212 = vrot.slane %v4211, 2
    %v4213 = vrot.slane %v3686, 7
    %v4214 = vrot.slane %v4213, 2
    %v4215 = vrot.slane %v3694, 7
    %v4216 = vrot.slane %v4215, 2
    %v4217 = vrot.slane %v3702, 7
    %v4218 = vrot.slane %v4217, 2
    %v4219 = vrot.slane %v3701, 7
    %v4220 = vrot.slane %v4219, 2
    %v4221 = vrot.slane %v3703, 7
    %v4222 = vrot.slane %v4221, 2
    %v4223 = vrot.slane %v3711, 7
    %v4224 = vrot.slane %v4223, 2
    %v4225 = vrot.slane %v3719, 7
    %v4226 = vrot.slane %v4225, 2
    %v4227 = vrot.slane %v3718, 7
    %v4228 = vrot.slane %v4227, 2
    %v4229 = vrot.slane %v3720, 7
    %v4230 = vrot.slane %v4229, 2
    %v4231 = vrot.slane %v3728, 7
    %v4232 = vrot.slane %v4231, 2
    %v4233 = vrot.slane %v3736, 7
    %v4234 = vrot.slane %v4233, 2
    %v4235 = vrot.slane %v3735, 7
    %v4236 = vrot.slane %v4235, 2
    %v4237 = vrot.slane %v3737, 7
    %v4238 = vrot.slane %v4237, 2
    %v4239 = vrot.slane %v3745, 7
    %v4240 = vrot.slane %v4239, 2
    %v4241 = vrot.slane %v3753, 7
    %v4242 = vrot.slane %v4241, 2
    %v4243 = vrot.slane %v3752, 7
    %v4244 = vrot.slane %v4243, 2
    %v4245 = vrot.slane %v3754, 7
    %v4246 = vrot.slane %v4245, 2
    %v4247 = vrot.slane %v3762, 7
    %v4248 = vrot.slane %v4247, 2
    %v4249 = vrot.slane %v3770, 7
    %v4250 = vrot.slane %v4249, 2
    %v4251 = vrot.slane %v3769, 7
    %v4252 = vrot.slane %v4251, 2
    %v4253 = vrot.slane %v3771, 7
    %v4254 = vrot.slane %v4253, 2
    %v4255 = vrot.slane %v3779, 7
    %v4256 = vrot.slane %v4255, 2
    %v4257 = vrot.slane %v3787, 7
    %v4258 = vrot.slane %v4257, 2
    %v4259 = vrot.slane %v3786, 7
    %v4260 = vrot.slane %v4259, 2
    %v4261 = vrot.slane %v3788, 7
    %v4262 = vrot.slane %v4261, 2
    %v4263 = vrot.slane %v3796, 7
    %v4264 = vrot.slane %v4263, 2
    %v4265 = vrot.slane %v3804, 7
    %v4266 = vrot.slane %v4265, 2
    %v4267 = vrot.slane %v3803, 7
    %v4268 = vrot.slane %v4267, 2
    %v4269 = vrot.slane %v3805, 7
    %v4270 = vrot.slane %v4269, 2
    %v4271 = vrot.slane %v3813, 7
    %v4272 = vrot.slane %v4271, 2
    %v4273 = vrot.slane %v3821, 7
    %v4274 = vrot.slane %v4273, 2
    %v4275 = vrot.slane %v3820, 7
    %v4276 = vrot.slane %v4275, 2
    %v4277 = vrot.slane %v3822, 7
    %v4278 = vrot.slane %v4277, 2
    %v4279 = vrot.slane %v3830, 7
    %v4280 = vrot.slane %v4279, 2
    %v4281 = vrot.slane %v3838, 7
    %v4282 = vrot.slane %v4281, 2
    %v4283 = vrot.slane %v3837, 7
    %v4284 = vrot.slane %v4283, 2
    %v4285 = vrot.slane %v3839, 7
    %v4286 = vrot.slane %v4285, 2
    %v4287 = vrot.slane %v3847, 7
    %v4288 = vrot.slane %v4287, 2
    %v4289 = vrot.slane %v3855, 7
    %v4290 = vrot.slane %v4289, 2
    %v4291 = vrot.slane %v3854, 7
    %v4292 = vrot.slane %v4291, 2
    %v4293 = vrot.slane %v3856, 7
    %v4294 = vrot.slane %v4293, 2
    %v4295 = vrot.slane %v3864, 7
    %v4296 = vrot.slane %v4295, 2
    %v4297 = vrot.slane %v3872, 7
    %v4298 = vrot.slane %v4297, 2
    %v4299 = vrot.slane %v3871, 7
    %v4300 = vrot.slane %v4299, 2
    %v4301 = vrot.slane %v3873, 7
    %v4302 = vrot.slane %v4301, 2
    %v4303 = vrot.slane %v3881, 7
    %v4304 = vrot.slane %v4303, 2
    %v4305 = vrot.slane %v3889, 7
    %v4306 = vrot.slane %v4305, 2
    %v4307 = vrot.slane %v3888, 7
    %v4308 = vrot.slane %v4307, 2
    %v4309 = vrot.slane %v3890, 7
    %v4310 = vrot.slane %v4309, 2
    %v4311 = vrot.slane %v3898, 7
    %v4312 = vrot.slane %v4311, 2
    %v4313 = vrot.slane %v3906, 7
    %v4314 = vrot.slane %v4313, 2
    %v4315 = vrot.slane %v3905, 7
    %v4316 = vrot.slane %v4315, 2
    %v4317 = vrot.slane %v3907, 7
    %v4318 = vrot.slane %v4317, 2
    %v4319 = vrot.slane %v3915, 7
    %v4320 = vrot.slane %v4319, 2
    %v4321 = vrot.slane %v3923, 7
    %v4322 = vrot.slane %v4321, 2
    %v4323 = vrot.slane %v3922, 7
    %v4324 = vrot.slane %v4323, 2
    %v4325 = vrot.slane %v3924, 7
    %v4326 = vrot.slane %v4325, 2
    %v4327 = vrot.slane %v3932, 7
    %v4328 = vrot.slane %v4327, 2
    %v4329 = vrot.slane %v3940, 7
    %v4330 = vrot.slane %v4329, 2
    %v4331 = vrot.slane %v3939, 7
    %v4332 = vrot.slane %v4331, 2
    %v4333 = vrot.slane %v3941, 7
    %v4334 = vrot.slane %v4333, 2
    %v4335 = vrot.slane %v3949, 7
    %v4336 = vrot.slane %v4335, 2
    %v4337 = vrot.slane %v3957, 7
    %v4338 = vrot.slane %v4337, 2
    %v4339 = vrot.slane %v3956, 7
    %v4340 = vrot.slane %v4339, 2
    %v4341 = vrot.slane %v3958, 7
    %v4342 = vrot.slane %v4341, 2
    %v4471 = vmax.f32 %v3422, %v4088
    %v4472 = vmax.f32 %v3430, %v4090
    %v4473 = vmax.f32 %v3429, %v4092
    %v4474 = vmax.f32 %v3431, %v4094
    %v4475 = vmax.f32 %v3439, %v4096
    %v4476 = vmax.f32 %v3447, %v4098
    %v4477 = vmax.f32 %v3446, %v4100
    %v4478 = vmax.f32 %v3448, %v4102
    %v4479 = vmax.f32 %v3456, %v4104
    %v4480 = vmax.f32 %v3464, %v4106
    %v4481 = vmax.f32 %v3463, %v4108
    %v4482 = vmax.f32 %v3465, %v4110
    %v4483 = vmax.f32 %v3473, %v4112
    %v4484 = vmax.f32 %v3481, %v4114
    %v4485 = vmax.f32 %v3480, %v4116
    %v4486 = vmax.f32 %v3482, %v4118
    %v4487 = vmax.f32 %v3490, %v4120
    %v4488 = vmax.f32 %v3498, %v4122
    %v4489 = vmax.f32 %v3497, %v4124
    %v4490 = vmax.f32 %v3499, %v4126
    %v4491 = vmax.f32 %v3507, %v4128
    %v4492 = vmax.f32 %v3515, %v4130
    %v4493 = vmax.f32 %v3514, %v4132
    %v4494 = vmax.f32 %v3516, %v4134
    %v4495 = vmax.f32 %v3524, %v4136
    %v4496 = vmax.f32 %v3532, %v4138
    %v4497 = vmax.f32 %v3531, %v4140
    %v4498 = vmax.f32 %v3533, %v4142
    %v4499 = vmax.f32 %v3541, %v4144
    %v4500 = vmax.f32 %v3549, %v4146
    %v4501 = vmax.f32 %v3548, %v4148
    %v4502 = vmax.f32 %v3550, %v4150
    %v4503 = vmax.f32 %v3558, %v4152
    %v4504 = vmax.f32 %v3566, %v4154
    %v4505 = vmax.f32 %v3565, %v4156
    %v4506 = vmax.f32 %v3567, %v4158
    %v4507 = vmax.f32 %v3575, %v4160
    %v4508 = vmax.f32 %v3583, %v4162
    %v4509 = vmax.f32 %v3582, %v4164
    %v4510 = vmax.f32 %v3584, %v4166
    %v4511 = vmax.f32 %v3592, %v4168
    %v4512 = vmax.f32 %v3600, %v4170
    %v4513 = vmax.f32 %v3599, %v4172
    %v4514 = vmax.f32 %v3601, %v4174
    %v4515 = vmax.f32 %v3609, %v4176
    %v4516 = vmax.f32 %v3617, %v4178
    %v4517 = vmax.f32 %v3616, %v4180
    %v4518 = vmax.f32 %v3618, %v4182
    %v4519 = vmax.f32 %v3626, %v4184
    %v4520 = vmax.f32 %v3634, %v4186
    %v4521 = vmax.f32 %v3633, %v4188
    %v4522 = vmax.f32 %v3635, %v4190
    %v4523 = vmax.f32 %v3643, %v4192
    %v4524 = vmax.f32 %v3651, %v4194
    %v4525 = vmax.f32 %v3650, %v4196
    %v4526 = vmax.f32 %v3652, %v4198
    %v4527 = vmax.f32 %v3660, %v4200
    %v4528 = vmax.f32 %v3668, %v4202
    %v4529 = vmax.f32 %v3667, %v4204
    %v4530 = vmax.f32 %v3669, %v4206
    %v4531 = vmax.f32 %v3677, %v4208
    %v4532 = vmax.f32 %v3685, %v4210
    %v4533 = vmax.f32 %v3684, %v4212
    %v4534 = vmax.f32 %v3686, %v4214
    %v4535 = vmax.f32 %v3694, %v4216
    %v4536 = vmax.f32 %v3702, %v4218
    %v4537 = vmax.f32 %v3701, %v4220
    %v4538 = vmax.f32 %v3703, %v4222
    %v4539 = vmax.f32 %v3711, %v4224
    %v4540 = vmax.f32 %v3719, %v4226
    %v4541 = vmax.f32 %v3718, %v4228
    %v4542 = vmax.f32 %v3720, %v4230
    %v4543 = vmax.f32 %v3728, %v4232
    %v4544 = vmax.f32 %v3736, %v4234
    %v4545 = vmax.f32 %v3735, %v4236
    %v4546 = vmax.f32 %v3737, %v4238
    %v4547 = vmax.f32 %v3745, %v4240
    %v4548 = vmax.f32 %v3753, %v4242
    %v4549 = vmax.f32 %v3752, %v4244
    %v4550 = vmax.f32 %v3754, %v4246
    %v4551 = vmax.f32 %v3762, %v4248
    %v4552 = vmax.f32 %v3770, %v4250
    %v4553 = vmax.f32 %v3769, %v4252
    %v4554 = vmax.f32 %v3771, %v4254
    %v4555 = vmax.f32 %v3779, %v4256
    %v4556 = vmax.f32 %v3787, %v4258
    %v4557 = vmax.f32 %v3786, %v4260
    %v4558 = vmax.f32 %v3788, %v4262
    %v4559 = vmax.f32 %v3796, %v4264
    %v4560 = vmax.f32 %v3804, %v4266
    %v4561 = vmax.f32 %v3803, %v4268
    %v4562 = vmax.f32 %v3805, %v4270
    %v4563 = vmax.f32 %v3813, %v4272
    %v4564 = vmax.f32 %v3821, %v4274
    %v4565 = vmax.f32 %v3820, %v4276
    %v4566 = vmax.f32 %v3822, %v4278
    %v4567 = vmax.f32 %v3830, %v4280
    %v4568 = vmax.f32 %v3838, %v4282
    %v4569 = vmax.f32 %v3837, %v4284
    %v4570 = vmax.f32 %v3839, %v4286
    %v4571 = vmax.f32 %v3847, %v4288
    %v4572 = vmax.f32 %v3855, %v4290
    %v4573 = vmax.f32 %v3854, %v4292
    %v4574 = vmax.f32 %v3856, %v4294
    %v4575 = vmax.f32 %v3864, %v4296
    %v4576 = vmax.f32 %v3872, %v4298
    %v4577 = vmax.f32 %v3871, %v4300
    %v4578 = vmax.f32 %v3873, %v4302
    %v4579 = vmax.f32 %v3881, %v4304
    %v4580 = vmax.f32 %v3889, %v4306
    %v4581 = vmax.f32 %v3888, %v4308
    %v4582 = vmax.f32 %v3890, %v4310
    %v4583 = vmax.f32 %v3898, %v4312
    %v4584 = vmax.f32 %v3906, %v4314
    %v4585 = vmax.f32 %v3905, %v4316
    %v4586 = vmax.f32 %v3907, %v4318
    %v4587 = vmax.f32 %v3915, %v4320
    %v4588 = vmax.f32 %v3923, %v4322
    %v4589 = vmax.f32 %v3922, %v4324
    %v4590 = vmax.f32 %v3924, %v4326
    %v4591 = vmax.f32 %v3932, %v4328
    %v4592 = vmax.f32 %v3940, %v4330
    %v4593 = vmax.f32 %v3939, %v4332
    %v4594 = vmax.f32 %v3941, %v4334
    %v4595 = vmax.f32 %v3949, %v4336
    %v4596 = vmax.f32 %v3957, %v4338
    %v4597 = vmax.f32 %v3956, %v4340
    %v4598 = vmax.f32 %v3958, %v4342
    %v4727 = vlaneseq
    %v4728 = vshrl.u32 %v4727, 7
    %v4729 = vsub.s32 0, %v4728
    %v4730 = vrot.slane %v4471, %v4729
    %v4731 = vlaneseq
    %v4732 = vshrl.u32 %v4731, 7
    %v4733 = vsub.s32 0, %v4732
    %v4734 = vrot.slane %v4472, %v4733
    %v4735 = vlaneseq
    %v4736 = vshrl.u32 %v4735, 7
    %v4737 = vsub.s32 0, %v4736
    %v4738 = vrot.slane %v4473, %v4737
    %v4739 = vlaneseq
    %v4740 = vshrl.u32 %v4739, 7
    %v4741 = vsub.s32 0, %v4740
    %v4742 = vrot.slane %v4474, %v4741
    %v4743 = vlaneseq
    %v4744 = vshrl.u32 %v4743, 7
    %v4745 = vsub.s32 0, %v4744
    %v4746 = vrot.slane %v4475, %v4745
    %v4747 = vlaneseq
    %v4748 = vshrl.u32 %v4747, 7
    %v4749 = vsub.s32 0, %v4748
    %v4750 = vrot.slane %v4476, %v4749
    %v4751 = vlaneseq
    %v4752 = vshrl.u32 %v4751, 7
    %v4753 = vsub.s32 0, %v4752
    %v4754 = vrot.slane %v4477, %v4753
    %v4755 = vlaneseq
    %v4756 = vshrl.u32 %v4755, 7
    %v4757 = vsub.s32 0, %v4756
    %v4758 = vrot.slane %v4478, %v4757
    %v4759 = vlaneseq
    %v4760 = vshrl.u32 %v4759, 7
    %v4761 = vsub.s32 0, %v4760
    %v4762 = vrot.slane %v4479, %v4761
    %v4763 = vlaneseq
    %v4764 = vshrl.u32 %v4763, 7
    %v4765 = vsub.s32 0, %v4764
    %v4766 = vrot.slane %v4480, %v4765
    %v4767 = vlaneseq
    %v4768 = vshrl.u32 %v4767, 7
    %v4769 = vsub.s32 0, %v4768
    %v4770 = vrot.slane %v4481, %v4769
    %v4771 = vlaneseq
    %v4772 = vshrl.u32 %v4771, 7
    %v4773 = vsub.s32 0, %v4772
    %v4774 = vrot.slane %v4482, %v4773
    %v4775 = vlaneseq
    %v4776 = vshrl.u32 %v4775, 7
    %v4777 = vsub.s32 0, %v4776
    %v4778 = vrot.slane %v4483, %v4777
    %v4779 = vlaneseq
    %v4780 = vshrl.u32 %v4779, 7
    %v4781 = vsub.s32 0, %v4780
    %v4782 = vrot.slane %v4484, %v4781
    %v4783 = vlaneseq
    %v4784 = vshrl.u32 %v4783, 7
    %v4785 = vsub.s32 0, %v4784
    %v4786 = vrot.slane %v4485, %v4785
    %v4787 = vlaneseq
    %v4788 = vshrl.u32 %v4787, 7
    %v4789 = vsub.s32 0, %v4788
    %v4790 = vrot.slane %v4486, %v4789
    %v4791 = vlaneseq
    %v4792 = vshrl.u32 %v4791, 7
    %v4793 = vsub.s32 0, %v4792
    %v4794 = vrot.slane %v4487, %v4793
    %v4795 = vlaneseq
    %v4796 = vshrl.u32 %v4795, 7
    %v4797 = vsub.s32 0, %v4796
    %v4798 = vrot.slane %v4488, %v4797
    %v4799 = vlaneseq
    %v4800 = vshrl.u32 %v4799, 7
    %v4801 = vsub.s32 0, %v4800
    %v4802 = vrot.slane %v4489, %v4801
    %v4803 = vlaneseq
    %v4804 = vshrl.u32 %v4803, 7
    %v4805 = vsub.s32 0, %v4804
    %v4806 = vrot.slane %v4490, %v4805
    %v4807 = vlaneseq
    %v4808 = vshrl.u32 %v4807, 7
    %v4809 = vsub.s32 0, %v4808
    %v4810 = vrot.slane %v4491, %v4809
    %v4811 = vlaneseq
    %v4812 = vshrl.u32 %v4811, 7
    %v4813 = vsub.s32 0, %v4812
    %v4814 = vrot.slane %v4492, %v4813
    %v4815 = vlaneseq
    %v4816 = vshrl.u32 %v4815, 7
    %v4817 = vsub.s32 0, %v4816
    %v4818 = vrot.slane %v4493, %v4817
    %v4819 = vlaneseq
    %v4820 = vshrl.u32 %v4819, 7
    %v4821 = vsub.s32 0, %v4820
    %v4822 = vrot.slane %v4494, %v4821
    %v4823 = vlaneseq
    %v4824 = vshrl.u32 %v4823, 7
    %v4825 = vsub.s32 0, %v4824
    %v4826 = vrot.slane %v4495, %v4825
    %v4827 = vlaneseq
    %v4828 = vshrl.u32 %v4827, 7
    %v4829 = vsub.s32 0, %v4828
    %v4830 = vrot.slane %v4496, %v4829
    %v4831 = vlaneseq
    %v4832 = vshrl.u32 %v4831, 7
    %v4833 = vsub.s32 0, %v4832
    %v4834 = vrot.slane %v4497, %v4833
    %v4835 = vlaneseq
    %v4836 = vshrl.u32 %v4835, 7
    %v4837 = vsub.s32 0, %v4836
    %v4838 = vrot.slane %v4498, %v4837
    %v4839 = vlaneseq
    %v4840 = vshrl.u32 %v4839, 7
    %v4841 = vsub.s32 0, %v4840
    %v4842 = vrot.slane %v4499, %v4841
    %v4843 = vlaneseq
    %v4844 = vshrl.u32 %v4843, 7
    %v4845 = vsub.s32 0, %v4844
    %v4846 = vrot.slane %v4500, %v4845
    %v4847 = vlaneseq
    %v4848 = vshrl.u32 %v4847, 7
    %v4849 = vsub.s32 0, %v4848
    %v4850 = vrot.slane %v4501, %v4849
    %v4851 = vlaneseq
    %v4852 = vshrl.u32 %v4851, 7
    %v4853 = vsub.s32 0, %v4852
    %v4854 = vrot.slane %v4502, %v4853
    %v4855 = vlaneseq
    %v4856 = vshrl.u32 %v4855, 7
    %v4857 = vsub.s32 0, %v4856
    %v4858 = vrot.slane %v4503, %v4857
    %v4859 = vlaneseq
    %v4860 = vshrl.u32 %v4859, 7
    %v4861 = vsub.s32 0, %v4860
    %v4862 = vrot.slane %v4504, %v4861
    %v4863 = vlaneseq
    %v4864 = vshrl.u32 %v4863, 7
    %v4865 = vsub.s32 0, %v4864
    %v4866 = vrot.slane %v4505, %v4865
    %v4867 = vlaneseq
    %v4868 = vshrl.u32 %v4867, 7
    %v4869 = vsub.s32 0, %v4868
    %v4870 = vrot.slane %v4506, %v4869
    %v4871 = vlaneseq
    %v4872 = vshrl.u32 %v4871, 7
    %v4873 = vsub.s32 0, %v4872
    %v4874 = vrot.slane %v4507, %v4873
    %v4875 = vlaneseq
    %v4876 = vshrl.u32 %v4875, 7
    %v4877 = vsub.s32 0, %v4876
    %v4878 = vrot.slane %v4508, %v4877
    %v4879 = vlaneseq
    %v4880 = vshrl.u32 %v4879, 7
    %v4881 = vsub.s32 0, %v4880
    %v4882 = vrot.slane %v4509, %v4881
    %v4883 = vlaneseq
    %v4884 = vshrl.u32 %v4883, 7
    %v4885 = vsub.s32 0, %v4884
    %v4886 = vrot.slane %v4510, %v4885
    %v4887 = vlaneseq
    %v4888 = vshrl.u32 %v4887, 7
    %v4889 = vsub.s32 0, %v4888
    %v4890 = vrot.slane %v4511, %v4889
    %v4891 = vlaneseq
    %v4892 = vshrl.u32 %v4891, 7
    %v4893 = vsub.s32 0, %v4892
    %v4894 = vrot.slane %v4512, %v4893
    %v4895 = vlaneseq
    %v4896 = vshrl.u32 %v4895, 7
    %v4897 = vsub.s32 0, %v4896
    %v4898 = vrot.slane %v4513, %v4897
    %v4899 = vlaneseq
    %v4900 = vshrl.u32 %v4899, 7
    %v4901 = vsub.s32 0, %v4900
    %v4902 = vrot.slane %v4514, %v4901
    %v4903 = vlaneseq
    %v4904 = vshrl.u32 %v4903, 7
    %v4905 = vsub.s32 0, %v4904
    %v4906 = vrot.slane %v4515, %v4905
    %v4907 = vlaneseq
    %v4908 = vshrl.u32 %v4907, 7
    %v4909 = vsub.s32 0, %v4908
    %v4910 = vrot.slane %v4516, %v4909
    %v4911 = vlaneseq
    %v4912 = vshrl.u32 %v4911, 7
    %v4913 = vsub.s32 0, %v4912
    %v4914 = vrot.slane %v4517, %v4913
    %v4915 = vlaneseq
    %v4916 = vshrl.u32 %v4915, 7
    %v4917 = vsub.s32 0, %v4916
    %v4918 = vrot.slane %v4518, %v4917
    %v4919 = vlaneseq
    %v4920 = vshrl.u32 %v4919, 7
    %v4921 = vsub.s32 0, %v4920
    %v4922 = vrot.slane %v4519, %v4921
    %v4923 = vlaneseq
    %v4924 = vshrl.u32 %v4923, 7
    %v4925 = vsub.s32 0, %v4924
    %v4926 = vrot.slane %v4520, %v4925
    %v4927 = vlaneseq
    %v4928 = vshrl.u32 %v4927, 7
    %v4929 = vsub.s32 0, %v4928
    %v4930 = vrot.slane %v4521, %v4929
    %v4931 = vlaneseq
    %v4932 = vshrl.u32 %v4931, 7
    %v4933 = vsub.s32 0, %v4932
    %v4934 = vrot.slane %v4522, %v4933
    %v4935 = vlaneseq
    %v4936 = vshrl.u32 %v4935, 7
    %v4937 = vsub.s32 0, %v4936
    %v4938 = vrot.slane %v4523, %v4937
    %v4939 = vlaneseq
    %v4940 = vshrl.u32 %v4939, 7
    %v4941 = vsub.s32 0, %v4940
    %v4942 = vrot.slane %v4524, %v4941
    %v4943 = vlaneseq
    %v4944 = vshrl.u32 %v4943, 7
    %v4945 = vsub.s32 0, %v4944
    %v4946 = vrot.slane %v4525, %v4945
    %v4947 = vlaneseq
    %v4948 = vshrl.u32 %v4947, 7
    %v4949 = vsub.s32 0, %v4948
    %v4950 = vrot.slane %v4526, %v4949
    %v4951 = vlaneseq
    %v4952 = vshrl.u32 %v4951, 7
    %v4953 = vsub.s32 0, %v4952
    %v4954 = vrot.slane %v4527, %v4953
    %v4955 = vlaneseq
    %v4956 = vshrl.u32 %v4955, 7
    %v4957 = vsub.s32 0, %v4956
    %v4958 = vrot.slane %v4528, %v4957
    %v4959 = vlaneseq
    %v4960 = vshrl.u32 %v4959, 7
    %v4961 = vsub.s32 0, %v4960
    %v4962 = vrot.slane %v4529, %v4961
    %v4963 = vlaneseq
    %v4964 = vshrl.u32 %v4963, 7
    %v4965 = vsub.s32 0, %v4964
    %v4966 = vrot.slane %v4530, %v4965
    %v4967 = vlaneseq
    %v4968 = vshrl.u32 %v4967, 7
    %v4969 = vsub.s32 0, %v4968
    %v4970 = vrot.slane %v4531, %v4969
    %v4971 = vlaneseq
    %v4972 = vshrl.u32 %v4971, 7
    %v4973 = vsub.s32 0, %v4972
    %v4974 = vrot.slane %v4532, %v4973
    %v4975 = vlaneseq
    %v4976 = vshrl.u32 %v4975, 7
    %v4977 = vsub.s32 0, %v4976
    %v4978 = vrot.slane %v4533, %v4977
    %v4979 = vlaneseq
    %v4980 = vshrl.u32 %v4979, 7
    %v4981 = vsub.s32 0, %v4980
    %v4982 = vrot.slane %v4534, %v4981
    %v4983 = vlaneseq
    %v4984 = vshrl.u32 %v4983, 7
    %v4985 = vsub.s32 0, %v4984
    %v4986 = vrot.slane %v4535, %v4985
    %v4987 = vlaneseq
    %v4988 = vshrl.u32 %v4987, 7
    %v4989 = vsub.s32 0, %v4988
    %v4990 = vrot.slane %v4536, %v4989
    %v4991 = vlaneseq
    %v4992 = vshrl.u32 %v4991, 7
    %v4993 = vsub.s32 0, %v4992
    %v4994 = vrot.slane %v4537, %v4993
    %v4995 = vlaneseq
    %v4996 = vshrl.u32 %v4995, 7
    %v4997 = vsub.s32 0, %v4996
    %v4998 = vrot.slane %v4538, %v4997
    %v4999 = vlaneseq
    %v5000 = vshrl.u32 %v4999, 7
    %v5001 = vsub.s32 0, %v5000
    %v5002 = vrot.slane %v4539, %v5001
    %v5003 = vlaneseq
    %v5004 = vshrl.u32 %v5003, 7
    %v5005 = vsub.s32 0, %v5004
    %v5006 = vrot.slane %v4540, %v5005
    %v5007 = vlaneseq
    %v5008 = vshrl.u32 %v5007, 7
    %v5009 = vsub.s32 0, %v5008
    %v5010 = vrot.slane %v4541, %v5009
    %v5011 = vlaneseq
    %v5012 = vshrl.u32 %v5011, 7
    %v5013 = vsub.s32 0, %v5012
    %v5014 = vrot.slane %v4542, %v5013
    %v5015 = vlaneseq
    %v5016 = vshrl.u32 %v5015, 7
    %v5017 = vsub.s32 0, %v5016
    %v5018 = vrot.slane %v4543, %v5017
    %v5019 = vlaneseq
    %v5020 = vshrl.u32 %v5019, 7
    %v5021 = vsub.s32 0, %v5020
    %v5022 = vrot.slane %v4544, %v5021
    %v5023 = vlaneseq
    %v5024 = vshrl.u32 %v5023, 7
    %v5025 = vsub.s32 0, %v5024
    %v5026 = vrot.slane %v4545, %v5025
    %v5027 = vlaneseq
    %v5028 = vshrl.u32 %v5027, 7
    %v5029 = vsub.s32 0, %v5028
    %v5030 = vrot.slane %v4546, %v5029
    %v5031 = vlaneseq
    %v5032 = vshrl.u32 %v5031, 7
    %v5033 = vsub.s32 0, %v5032
    %v5034 = vrot.slane %v4547, %v5033
    %v5035 = vlaneseq
    %v5036 = vshrl.u32 %v5035, 7
    %v5037 = vsub.s32 0, %v5036
    %v5038 = vrot.slane %v4548, %v5037
    %v5039 = vlaneseq
    %v5040 = vshrl.u32 %v5039, 7
    %v5041 = vsub.s32 0, %v5040
    %v5042 = vrot.slane %v4549, %v5041
    %v5043 = vlaneseq
    %v5044 = vshrl.u32 %v5043, 7
    %v5045 = vsub.s32 0, %v5044
    %v5046 = vrot.slane %v4550, %v5045
    %v5047 = vlaneseq
    %v5048 = vshrl.u32 %v5047, 7
    %v5049 = vsub.s32 0, %v5048
    %v5050 = vrot.slane %v4551, %v5049
    %v5051 = vlaneseq
    %v5052 = vshrl.u32 %v5051, 7
    %v5053 = vsub.s32 0, %v5052
    %v5054 = vrot.slane %v4552, %v5053
    %v5055 = vlaneseq
    %v5056 = vshrl.u32 %v5055, 7
    %v5057 = vsub.s32 0, %v5056
    %v5058 = vrot.slane %v4553, %v5057
    %v5059 = vlaneseq
    %v5060 = vshrl.u32 %v5059, 7
    %v5061 = vsub.s32 0, %v5060
    %v5062 = vrot.slane %v4554, %v5061
    %v5063 = vlaneseq
    %v5064 = vshrl.u32 %v5063, 7
    %v5065 = vsub.s32 0, %v5064
    %v5066 = vrot.slane %v4555, %v5065
    %v5067 = vlaneseq
    %v5068 = vshrl.u32 %v5067, 7
    %v5069 = vsub.s32 0, %v5068
    %v5070 = vrot.slane %v4556, %v5069
    %v5071 = vlaneseq
    %v5072 = vshrl.u32 %v5071, 7
    %v5073 = vsub.s32 0, %v5072
    %v5074 = vrot.slane %v4557, %v5073
    %v5075 = vlaneseq
    %v5076 = vshrl.u32 %v5075, 7
    %v5077 = vsub.s32 0, %v5076
    %v5078 = vrot.slane %v4558, %v5077
    %v5079 = vlaneseq
    %v5080 = vshrl.u32 %v5079, 7
    %v5081 = vsub.s32 0, %v5080
    %v5082 = vrot.slane %v4559, %v5081
    %v5083 = vlaneseq
    %v5084 = vshrl.u32 %v5083, 7
    %v5085 = vsub.s32 0, %v5084
    %v5086 = vrot.slane %v4560, %v5085
    %v5087 = vlaneseq
    %v5088 = vshrl.u32 %v5087, 7
    %v5089 = vsub.s32 0, %v5088
    %v5090 = vrot.slane %v4561, %v5089
    %v5091 = vlaneseq
    %v5092 = vshrl.u32 %v5091, 7
    %v5093 = vsub.s32 0, %v5092
    %v5094 = vrot.slane %v4562, %v5093
    %v5095 = vlaneseq
    %v5096 = vshrl.u32 %v5095, 7
    %v5097 = vsub.s32 0, %v5096
    %v5098 = vrot.slane %v4563, %v5097
    %v5099 = vlaneseq
    %v5100 = vshrl.u32 %v5099, 7
    %v5101 = vsub.s32 0, %v5100
    %v5102 = vrot.slane %v4564, %v5101
    %v5103 = vlaneseq
    %v5104 = vshrl.u32 %v5103, 7
    %v5105 = vsub.s32 0, %v5104
    %v5106 = vrot.slane %v4565, %v5105
    %v5107 = vlaneseq
    %v5108 = vshrl.u32 %v5107, 7
    %v5109 = vsub.s32 0, %v5108
    %v5110 = vrot.slane %v4566, %v5109
    %v5111 = vlaneseq
    %v5112 = vshrl.u32 %v5111, 7
    %v5113 = vsub.s32 0, %v5112
    %v5114 = vrot.slane %v4567, %v5113
    %v5115 = vlaneseq
    %v5116 = vshrl.u32 %v5115, 7
    %v5117 = vsub.s32 0, %v5116
    %v5118 = vrot.slane %v4568, %v5117
    %v5119 = vlaneseq
    %v5120 = vshrl.u32 %v5119, 7
    %v5121 = vsub.s32 0, %v5120
    %v5122 = vrot.slane %v4569, %v5121
    %v5123 = vlaneseq
    %v5124 = vshrl.u32 %v5123, 7
    %v5125 = vsub.s32 0, %v5124
    %v5126 = vrot.slane %v4570, %v5125
    %v5127 = vlaneseq
    %v5128 = vshrl.u32 %v5127, 7
    %v5129 = vsub.s32 0, %v5128
    %v5130 = vrot.slane %v4571, %v5129
    %v5131 = vlaneseq
    %v5132 = vshrl.u32 %v5131, 7
    %v5133 = vsub.s32 0, %v5132
    %v5134 = vrot.slane %v4572, %v5133
    %v5135 = vlaneseq
    %v5136 = vshrl.u32 %v5135, 7
    %v5137 = vsub.s32 0, %v5136
    %v5138 = vrot.slane %v4573, %v5137
    %v5139 = vlaneseq
    %v5140 = vshrl.u32 %v5139, 7
    %v5141 = vsub.s32 0, %v5140
    %v5142 = vrot.slane %v4574, %v5141
    %v5143 = vlaneseq
    %v5144 = vshrl.u32 %v5143, 7
    %v5145 = vsub.s32 0, %v5144
    %v5146 = vrot.slane %v4575, %v5145
    %v5147 = vlaneseq
    %v5148 = vshrl.u32 %v5147, 7
    %v5149 = vsub.s32 0, %v5148
    %v5150 = vrot.slane %v4576, %v5149
    %v5151 = vlaneseq
    %v5152 = vshrl.u32 %v5151, 7
    %v5153 = vsub.s32 0, %v5152
    %v5154 = vrot.slane %v4577, %v5153
    %v5155 = vlaneseq
    %v5156 = vshrl.u32 %v5155, 7
    %v5157 = vsub.s32 0, %v5156
    %v5158 = vrot.slane %v4578, %v5157
    %v5159 = vlaneseq
    %v5160 = vshrl.u32 %v5159, 7
    %v5161 = vsub.s32 0, %v5160
    %v5162 = vrot.slane %v4579, %v5161
    %v5163 = vlaneseq
    %v5164 = vshrl.u32 %v5163, 7
    %v5165 = vsub.s32 0, %v5164
    %v5166 = vrot.slane %v4580, %v5165
    %v5167 = vlaneseq
    %v5168 = vshrl.u32 %v5167, 7
    %v5169 = vsub.s32 0, %v5168
    %v5170 = vrot.slane %v4581, %v5169
    %v5171 = vlaneseq
    %v5172 = vshrl.u32 %v5171, 7
    %v5173 = vsub.s32 0, %v5172
    %v5174 = vrot.slane %v4582, %v5173
    %v5175 = vlaneseq
    %v5176 = vshrl.u32 %v5175, 7
    %v5177 = vsub.s32 0, %v5176
    %v5178 = vrot.slane %v4583, %v5177
    %v5179 = vlaneseq
    %v5180 = vshrl.u32 %v5179, 7
    %v5181 = vsub.s32 0, %v5180
    %v5182 = vrot.slane %v4584, %v5181
    %v5183 = vlaneseq
    %v5184 = vshrl.u32 %v5183, 7
    %v5185 = vsub.s32 0, %v5184
    %v5186 = vrot.slane %v4585, %v5185
    %v5187 = vlaneseq
    %v5188 = vshrl.u32 %v5187, 7
    %v5189 = vsub.s32 0, %v5188
    %v5190 = vrot.slane %v4586, %v5189
    %v5191 = vlaneseq
    %v5192 = vshrl.u32 %v5191, 7
    %v5193 = vsub.s32 0, %v5192
    %v5194 = vrot.slane %v4587, %v5193
    %v5195 = vlaneseq
    %v5196 = vshrl.u32 %v5195, 7
    %v5197 = vsub.s32 0, %v5196
    %v5198 = vrot.slane %v4588, %v5197
    %v5199 = vlaneseq
    %v5200 = vshrl.u32 %v5199, 7
    %v5201 = vsub.s32 0, %v5200
    %v5202 = vrot.slane %v4589, %v5201
    %v5203 = vlaneseq
    %v5204 = vshrl.u32 %v5203, 7
    %v5205 = vsub.s32 0, %v5204
    %v5206 = vrot.slane %v4590, %v5205
    %v5207 = vlaneseq
    %v5208 = vshrl.u32 %v5207, 7
    %v5209 = vsub.s32 0, %v5208
    %v5210 = vrot.slane %v4591, %v5209
    %v5211 = vlaneseq
    %v5212 = vshrl.u32 %v5211, 7
    %v5213 = vsub.s32 0, %v5212
    %v5214 = vrot.slane %v4592, %v5213
    %v5215 = vlaneseq
    %v5216 = vshrl.u32 %v5215, 7
    %v5217 = vsub.s32 0, %v5216
    %v5218 = vrot.slane %v4593, %v5217
    %v5219 = vlaneseq
    %v5220 = vshrl.u32 %v5219, 7
    %v5221 = vsub.s32 0, %v5220
    %v5222 = vrot.slane %v4594, %v5221
    %v5223 = vlaneseq
    %v5224 = vshrl.u32 %v5223, 7
    %v5225 = vsub.s32 0, %v5224
    %v5226 = vrot.slane %v4595, %v5225
    %v5227 = vlaneseq
    %v5228 = vshrl.u32 %v5227, 7
    %v5229 = vsub.s32 0, %v5228
    %v5230 = vrot.slane %v4596, %v5229
    %v5231 = vlaneseq
    %v5232 = vshrl.u32 %v5231, 7
    %v5233 = vsub.s32 0, %v5232
    %v5234 = vrot.slane %v4597, %v5233
    %v5235 = vlaneseq
    %v5236 = vshrl.u32 %v5235, 7
    %v5237 = vsub.s32 0, %v5236
    %v5238 = vrot.slane %v4598, %v5237
    %vm5239 = vcmask 1041409
    %v5240 = vsel %vm5239, %v4734, %v4730
    %vm5241 = vcmask 1042434
    %v5242 = vsel %vm5241, %v4738, %v5240
    %vm5243 = vcmask 1043459
    %v5244 = vsel %vm5243, %v4742, %v5242
    %vm5245 = vcmask 1044484
    %v5246 = vsel %vm5245, %v4746, %v5244
    %vm5247 = vcmask 1045509
    %v5248 = vsel %vm5247, %v4750, %v5246
    %vm5249 = vcmask 1046534
    %v5250 = vsel %vm5249, %v4754, %v5248
    %vm5251 = vcmask 1047559
    %v5252 = vsel %vm5251, %v4758, %v5250
    %v5253 = vsel %vm5239, %v4766, %v4762
    %v5254 = vsel %vm5241, %v4770, %v5253
    %v5255 = vsel %vm5243, %v4774, %v5254
    %v5256 = vsel %vm5245, %v4778, %v5255
    %v5257 = vsel %vm5247, %v4782, %v5256
    %v5258 = vsel %vm5249, %v4786, %v5257
    %v5259 = vsel %vm5251, %v4790, %v5258
    %v5260 = vsel %vm5239, %v4798, %v4794
    %v5261 = vsel %vm5241, %v4802, %v5260
    %v5262 = vsel %vm5243, %v4806, %v5261
    %v5263 = vsel %vm5245, %v4810, %v5262
    %v5264 = vsel %vm5247, %v4814, %v5263
    %v5265 = vsel %vm5249, %v4818, %v5264
    %v5266 = vsel %vm5251, %v4822, %v5265
    %v5267 = vsel %vm5239, %v4830, %v4826
    %v5268 = vsel %vm5241, %v4834, %v5267
    %v5269 = vsel %vm5243, %v4838, %v5268
    %v5270 = vsel %vm5245, %v4842, %v5269
    %v5271 = vsel %vm5247, %v4846, %v5270
    %v5272 = vsel %vm5249, %v4850, %v5271
    %v5273 = vsel %vm5251, %v4854, %v5272
    %v5274 = vsel %vm5239, %v4862, %v4858
    %v5275 = vsel %vm5241, %v4866, %v5274
    %v5276 = vsel %vm5243, %v4870, %v5275
    %v5277 = vsel %vm5245, %v4874, %v5276
    %v5278 = vsel %vm5247, %v4878, %v5277
    %v5279 = vsel %vm5249, %v4882, %v5278
    %v5280 = vsel %vm5251, %v4886, %v5279
    %v5281 = vsel %vm5239, %v4894, %v4890
    %v5282 = vsel %vm5241, %v4898, %v5281
    %v5283 = vsel %vm5243, %v4902, %v5282
    %v5284 = vsel %vm5245, %v4906, %v5283
    %v5285 = vsel %vm5247, %v4910, %v5284
    %v5286 = vsel %vm5249, %v4914, %v5285
    %v5287 = vsel %vm5251, %v4918, %v5286
    %v5288 = vsel %vm5239, %v4926, %v4922
    %v5289 = vsel %vm5241, %v4930, %v5288
    %v5290 = vsel %vm5243, %v4934, %v5289
    %v5291 = vsel %vm5245, %v4938, %v5290
    %v5292 = vsel %vm5247, %v4942, %v5291
    %v5293 = vsel %vm5249, %v4946, %v5292
    %v5294 = vsel %vm5251, %v4950, %v5293
    %v5295 = vsel %vm5239, %v4958, %v4954
    %v5296 = vsel %vm5241, %v4962, %v5295
    %v5297 = vsel %vm5243, %v4966, %v5296
    %v5298 = vsel %vm5245, %v4970, %v5297
    %v5299 = vsel %vm5247, %v4974, %v5298
    %v5300 = vsel %vm5249, %v4978, %v5299
    %v5301 = vsel %vm5251, %v4982, %v5300
    %v5302 = vsel %vm5239, %v4990, %v4986
    %v5303 = vsel %vm5241, %v4994, %v5302
    %v5304 = vsel %vm5243, %v4998, %v5303
    %v5305 = vsel %vm5245, %v5002, %v5304
    %v5306 = vsel %vm5247, %v5006, %v5305
    %v5307 = vsel %vm5249, %v5010, %v5306
    %v5308 = vsel %vm5251, %v5014, %v5307
    %v5309 = vsel %vm5239, %v5022, %v5018
    %v5310 = vsel %vm5241, %v5026, %v5309
    %v5311 = vsel %vm5243, %v5030, %v5310
    %v5312 = vsel %vm5245, %v5034, %v5311
    %v5313 = vsel %vm5247, %v5038, %v5312
    %v5314 = vsel %vm5249, %v5042, %v5313
    %v5315 = vsel %vm5251, %v5046, %v5314
    %v5316 = vsel %vm5239, %v5054, %v5050
    %v5317 = vsel %vm5241, %v5058, %v5316
    %v5318 = vsel %vm5243, %v5062, %v5317
    %v5319 = vsel %vm5245, %v5066, %v5318
    %v5320 = vsel %vm5247, %v5070, %v5319
    %v5321 = vsel %vm5249, %v5074, %v5320
    %v5322 = vsel %vm5251, %v5078, %v5321
    %v5323 = vsel %vm5239, %v5086, %v5082
    %v5324 = vsel %vm5241, %v5090, %v5323
    %v5325 = vsel %vm5243, %v5094, %v5324
    %v5326 = vsel %vm5245, %v5098, %v5325
    %v5327 = vsel %vm5247, %v5102, %v5326
    %v5328 = vsel %vm5249, %v5106, %v5327
    %v5329 = vsel %vm5251, %v5110, %v5328
    %v5330 = vsel %vm5239, %v5118, %v5114
    %v5331 = vsel %vm5241, %v5122, %v5330
    %v5332 = vsel %vm5243, %v5126, %v5331
    %v5333 = vsel %vm5245, %v5130, %v5332
    %v5334 = vsel %vm5247, %v5134, %v5333
    %v5335 = vsel %vm5249, %v5138, %v5334
    %v5336 = vsel %vm5251, %v5142, %v5335
    %v5337 = vsel %vm5239, %v5150, %v5146
    %v5338 = vsel %vm5241, %v5154, %v5337
    %v5339 = vsel %vm5243, %v5158, %v5338
    %v5340 = vsel %vm5245, %v5162, %v5339
    %v5341 = vsel %vm5247, %v5166, %v5340
    %v5342 = vsel %vm5249, %v5170, %v5341
    %v5343 = vsel %vm5251, %v5174, %v5342
    %v5344 = vsel %vm5239, %v5182, %v5178
    %v5345 = vsel %vm5241, %v5186, %v5344
    %v5346 = vsel %vm5243, %v5190, %v5345
    %v5347 = vsel %vm5245, %v5194, %v5346
    %v5348 = vsel %vm5247, %v5198, %v5347
    %v5349 = vsel %vm5249, %v5202, %v5348
    %v5350 = vsel %vm5251, %v5206, %v5349
    %v5351 = vsel %vm5239, %v5214, %v5210
    %v5352 = vsel %vm5241, %v5218, %v5351
    %v5353 = vsel %vm5243, %v5222, %v5352
    %v5354 = vsel %vm5245, %v5226, %v5353
    %v5355 = vsel %vm5247, %v5230, %v5354
    %v5356 = vsel %vm5249, %v5234, %v5355
    %v5357 = vsel %vm5251, %v5238, %v5356
    %v5358 = vrot.slane %v5252, 7
    %v5359 = vrot.slane %v5259, 7
    %v5360 = vrot.slane %v5266, 7
    %v5361 = vrot.slane %v5273, 7
    %v5362 = vrot.slane %v5280, 7
    %v5363 = vrot.slane %v5287, 7
    %v5364 = vrot.slane %v5294, 7
    %v5365 = vrot.slane %v5301, 7
    %v5366 = vrot.slane %v5308, 7
    %v5367 = vrot.slane %v5315, 7
    %v5368 = vrot.slane %v5322, 7
    %v5369 = vrot.slane %v5329, 7
    %v5370 = vrot.slane %v5336, 7
    %v5371 = vrot.slane %v5343, 7
    %v5372 = vrot.slane %v5350, 7
    %v5373 = vrot.slane %v5357, 7
    %v5390 = vsel %vm157, 0.0, %v5358
    %v5391 = vsel %vm157, 0.0, %v5359
    %v5392 = vsel %vm157, 0.0, %v5360
    %v5393 = vsel %vm157, 0.0, %v5361
    %v5394 = vsel %vm157, 0.0, %v5362
    %v5395 = vsel %vm157, 0.0, %v5363
    %v5396 = vsel %vm157, 0.0, %v5364
    %v5397 = vsel %vm157, 0.0, %v5365
    %v5398 = vsel %vm157, 0.0, %v5366
    %v5399 = vsel %vm157, 0.0, %v5367
    %v5400 = vsel %vm157, 0.0, %v5368
    %v5401 = vsel %vm157, 0.0, %v5369
    %v5402 = vsel %vm157, 0.0, %v5370
    %v5403 = vsel %vm157, 0.0, %v5371
    %v5404 = vsel %vm157, 0.0, %v5372
    %v5405 = vsel %vm157, 0.0, %v5373
    %v5406 = vsel %vm157, %v5358, 0.0
    %v5407 = vsel %vm157, %v5359, 0.0
    %v5408 = vsel %vm157, %v5360, 0.0
    %v5409 = vsel %vm157, %v5361, 0.0
    %v5410 = vsel %vm157, %v5362, 0.0
    %v5411 = vsel %vm157, %v5363, 0.0
    %v5412 = vsel %vm157, %v5364, 0.0
    %v5413 = vsel %vm157, %v5365, 0.0
    %v5414 = vsel %vm157, %v5366, 0.0
    %v5415 = vsel %vm157, %v5367, 0.0
    %v5416 = vsel %vm157, %v5368, 0.0
    %v5417 = vsel %vm157, %v5369, 0.0
    %v5418 = vsel %vm157, %v5370, 0.0
    %v5419 = vsel %vm157, %v5371, 0.0
    %v5420 = vsel %vm157, %v5372, 0.0
    %v5421 = vsel %vm157, %v5373, 0.0
    %v5450 = vsel %vm480, %v481, %v484
    %v5451 = vrot.slane %v5390, 1
    %v5452 = vrot.slane %v5406, 1
    %v5453 = vsel %vm480, %v5451, %v5452
    %v5454 = vrot.slane %v5391, 1
    %v5455 = vrot.slane %v5407, 1
    %v5456 = vsel %vm480, %v5454, %v5455
    %v5457 = vrot.slane %v5392, 1
    %v5458 = vrot.slane %v5408, 1
    %v5459 = vsel %vm480, %v5457, %v5458
    %v5460 = vrot.slane %v5393, 1
    %v5461 = vrot.slane %v5409, 1
    %v5462 = vsel %vm480, %v5460, %v5461
    %v5463 = vrot.slane %v5394, 1
    %v5464 = vrot.slane %v5410, 1
    %v5465 = vsel %vm480, %v5463, %v5464
    %v5466 = vrot.slane %v5395, 1
    %v5467 = vrot.slane %v5411, 1
    %v5468 = vsel %vm480, %v5466, %v5467
    %v5469 = vrot.slane %v5396, 1
    %v5470 = vrot.slane %v5412, 1
    %v5471 = vsel %vm480, %v5469, %v5470
    %v5472 = vrot.slane %v5398, 1
    %v5473 = vrot.slane %v5414, 1
    %v5474 = vsel %vm480, %v5472, %v5473
    %v5475 = vrot.slane %v5399, 1
    %v5476 = vrot.slane %v5415, 1
    %v5477 = vsel %vm480, %v5475, %v5476
    %v5478 = vrot.slane %v5400, 1
    %v5479 = vrot.slane %v5416, 1
    %v5480 = vsel %vm480, %v5478, %v5479
    %v5481 = vrot.slane %v5401, 1
    %v5482 = vrot.slane %v5417, 1
    %v5483 = vsel %vm480, %v5481, %v5482
    %v5484 = vrot.slane %v5402, 1
    %v5485 = vrot.slane %v5418, 1
    %v5486 = vsel %vm480, %v5484, %v5485
    %v5487 = vrot.slane %v5403, 1
    %v5488 = vrot.slane %v5419, 1
    %v5489 = vsel %vm480, %v5487, %v5488
    %v5490 = vrot.slane %v5404, 1
    %v5491 = vrot.slane %v5420, 1
    %v5492 = vsel %vm480, %v5490, %v5491
    %5493 = vrot.lane.b32.xlu0 %v5450, 8
    %v5494 = vpop.permute.xlu0 %5493
    %5495 = vrot.lane.b32.xlu0 %v5453, 8
    %v5496 = vpop.permute.xlu0 %5495
    %5497 = vrot.lane.b32.xlu0 %v5456, 8
    %v5498 = vpop.permute.xlu0 %5497
    %5499 = vrot.lane.b32.xlu0 %v5459, 8
    %v5500 = vpop.permute.xlu0 %5499
    %5501 = vrot.lane.b32.xlu0 %v5462, 8
    %v5502 = vpop.permute.xlu0 %5501
    %5503 = vrot.lane.b32.xlu0 %v5465, 8
    %v5504 = vpop.permute.xlu0 %5503
    %5505 = vrot.lane.b32.xlu0 %v5468, 8
    %v5506 = vpop.permute.xlu0 %5505
    %5507 = vrot.lane.b32.xlu0 %v5471, 8
    %v5508 = vpop.permute.xlu0 %5507
    %5509 = vrot.lane.b32.xlu0 %v5474, 8
    %v5510 = vpop.permute.xlu0 %5509
    %5511 = vrot.lane.b32.xlu0 %v5477, 8
    %v5512 = vpop.permute.xlu0 %5511
    %5513 = vrot.lane.b32.xlu0 %v5480, 8
    %v5514 = vpop.permute.xlu0 %5513
    %5515 = vrot.lane.b32.xlu0 %v5483, 8
    %v5516 = vpop.permute.xlu0 %5515
    %5517 = vrot.lane.b32.xlu0 %v5486, 8
    %v5518 = vpop.permute.xlu0 %5517
    %5519 = vrot.lane.b32.xlu0 %v5489, 8
    %v5520 = vpop.permute.xlu0 %5519
    %5521 = vrot.lane.b32.xlu0 %v5492, 8
    %v5522 = vpop.permute.xlu0 %5521
    %v5538 = vsel %vm822, %v823, %v826
    %v5539 = vrot.slane %v5390, 2
    %v5540 = vrot.slane %v5406, 2
    %v5541 = vsel %vm822, %v5539, %v5540
    %v5542 = vrot.slane %v5391, 2
    %v5543 = vrot.slane %v5407, 2
    %v5544 = vsel %vm822, %v5542, %v5543
    %v5545 = vrot.slane %v5392, 2
    %v5546 = vrot.slane %v5408, 2
    %v5547 = vsel %vm822, %v5545, %v5546
    %v5548 = vrot.slane %v5393, 2
    %v5549 = vrot.slane %v5409, 2
    %v5550 = vsel %vm822, %v5548, %v5549
    %v5551 = vrot.slane %v5394, 2
    %v5552 = vrot.slane %v5410, 2
    %v5553 = vsel %vm822, %v5551, %v5552
    %v5554 = vrot.slane %v5395, 2
    %v5555 = vrot.slane %v5411, 2
    %v5556 = vsel %vm822, %v5554, %v5555
    %v5557 = vrot.slane %v5396, 2
    %v5558 = vrot.slane %v5412, 2
    %v5559 = vsel %vm822, %v5557, %v5558
    %v5560 = vrot.slane %v5398, 2
    %v5561 = vrot.slane %v5414, 2
    %v5562 = vsel %vm822, %v5560, %v5561
    %v5563 = vrot.slane %v5399, 2
    %v5564 = vrot.slane %v5415, 2
    %v5565 = vsel %vm822, %v5563, %v5564
    %v5566 = vrot.slane %v5400, 2
    %v5567 = vrot.slane %v5416, 2
    %v5568 = vsel %vm822, %v5566, %v5567
    %v5569 = vrot.slane %v5401, 2
    %v5570 = vrot.slane %v5417, 2
    %v5571 = vsel %vm822, %v5569, %v5570
    %v5572 = vrot.slane %v5402, 2
    %v5573 = vrot.slane %v5418, 2
    %v5574 = vsel %vm822, %v5572, %v5573
    %v5575 = vrot.slane %v5403, 2
    %v5576 = vrot.slane %v5419, 2
    %v5577 = vsel %vm822, %v5575, %v5576
    %v5578 = vrot.slane %v5404, 2
    %v5579 = vrot.slane %v5420, 2
    %v5580 = vsel %vm822, %v5578, %v5579
    %5581 = vrot.lane.b32.xlu0 %v5538, 16
    %v5582 = vpop.permute.xlu0 %5581
    %5583 = vrot.lane.b32.xlu0 %v5541, 16
    %v5584 = vpop.permute.xlu0 %5583
    %5585 = vrot.lane.b32.xlu0 %v5544, 16
    %v5586 = vpop.permute.xlu0 %5585
    %5587 = vrot.lane.b32.xlu0 %v5547, 16
    %v5588 = vpop.permute.xlu0 %5587
    %5589 = vrot.lane.b32.xlu0 %v5550, 16
    %v5590 = vpop.permute.xlu0 %5589
    %5591 = vrot.lane.b32.xlu0 %v5553, 16
    %v5592 = vpop.permute.xlu0 %5591
    %5593 = vrot.lane.b32.xlu0 %v5556, 16
    %v5594 = vpop.permute.xlu0 %5593
    %5595 = vrot.lane.b32.xlu0 %v5559, 16
    %v5596 = vpop.permute.xlu0 %5595
    %5597 = vrot.lane.b32.xlu0 %v5562, 16
    %v5598 = vpop.permute.xlu0 %5597
    %5599 = vrot.lane.b32.xlu0 %v5565, 16
    %v5600 = vpop.permute.xlu0 %5599
    %5601 = vrot.lane.b32.xlu0 %v5568, 16
    %v5602 = vpop.permute.xlu0 %5601
    %5603 = vrot.lane.b32.xlu0 %v5571, 16
    %v5604 = vpop.permute.xlu0 %5603
    %5605 = vrot.lane.b32.xlu0 %v5574, 16
    %v5606 = vpop.permute.xlu0 %5605
    %5607 = vrot.lane.b32.xlu0 %v5577, 16
    %v5608 = vpop.permute.xlu0 %5607
    %5609 = vrot.lane.b32.xlu0 %v5580, 16
    %v5610 = vpop.permute.xlu0 %5609
    %5628 = vrot.lane.b32.xlu0 %v5390, 24
    %v5629 = vpop.permute.xlu0 %5628
    %5630 = vrot.lane.b32.xlu0 %v5391, 24
    %v5631 = vpop.permute.xlu0 %5630
    %5632 = vrot.lane.b32.xlu0 %v5392, 24
    %v5633 = vpop.permute.xlu0 %5632
    %5634 = vrot.lane.b32.xlu0 %v5393, 24
    %v5635 = vpop.permute.xlu0 %5634
    %5636 = vrot.lane.b32.xlu0 %v5394, 24
    %v5637 = vpop.permute.xlu0 %5636
    %5638 = vrot.lane.b32.xlu0 %v5395, 24
    %v5639 = vpop.permute.xlu0 %5638
    %5640 = vrot.lane.b32.xlu0 %v5396, 24
    %v5641 = vpop.permute.xlu0 %5640
    %5642 = vrot.lane.b32.xlu0 %v5397, 24
    %v5643 = vpop.permute.xlu0 %5642
    %5644 = vrot.lane.b32.xlu0 %v5398, 24
    %v5645 = vpop.permute.xlu0 %5644
    %5646 = vrot.lane.b32.xlu0 %v5399, 24
    %v5647 = vpop.permute.xlu0 %5646
    %5648 = vrot.lane.b32.xlu0 %v5400, 24
    %v5649 = vpop.permute.xlu0 %5648
    %5650 = vrot.lane.b32.xlu0 %v5401, 24
    %v5651 = vpop.permute.xlu0 %5650
    %5652 = vrot.lane.b32.xlu0 %v5402, 24
    %v5653 = vpop.permute.xlu0 %5652
    %5654 = vrot.lane.b32.xlu0 %v5403, 24
    %v5655 = vpop.permute.xlu0 %5654
    %5656 = vrot.lane.b32.xlu0 %v5404, 24
    %v5657 = vpop.permute.xlu0 %5656
    %5658 = vrot.lane.b32.xlu0 %v5405, 24
    %v5659 = vpop.permute.xlu0 %5658
    %v5678 = vrot.slane %v5397, 1
    %v5679 = vrot.slane %v5413, 1
    %v5680 = vsel %vm480, %v5678, %v5679
    %v5681 = vrot.slane %v5405, 1
    %v5682 = vrot.slane %v5421, 1
    %v5683 = vsel %vm480, %v5681, %v5682
    %5684 = vrot.lane.b32.xlu0 %v5453, 32
    %v5685 = vpop.permute.xlu0 %5684
    %5686 = vrot.lane.b32.xlu0 %v5456, 32
    %v5687 = vpop.permute.xlu0 %5686
    %5688 = vrot.lane.b32.xlu0 %v5459, 32
    %v5689 = vpop.permute.xlu0 %5688
    %5690 = vrot.lane.b32.xlu0 %v5462, 32
    %v5691 = vpop.permute.xlu0 %5690
    %5692 = vrot.lane.b32.xlu0 %v5465, 32
    %v5693 = vpop.permute.xlu0 %5692
    %5694 = vrot.lane.b32.xlu0 %v5468, 32
    %v5695 = vpop.permute.xlu0 %5694
    %5696 = vrot.lane.b32.xlu0 %v5471, 32
    %v5697 = vpop.permute.xlu0 %5696
    %5698 = vrot.lane.b32.xlu0 %v5680, 32
    %v5699 = vpop.permute.xlu0 %5698
    %5700 = vrot.lane.b32.xlu0 %v5474, 32
    %v5701 = vpop.permute.xlu0 %5700
    %5702 = vrot.lane.b32.xlu0 %v5477, 32
    %v5703 = vpop.permute.xlu0 %5702
    %5704 = vrot.lane.b32.xlu0 %v5480, 32
    %v5705 = vpop.permute.xlu0 %5704
    %5706 = vrot.lane.b32.xlu0 %v5483, 32
    %v5707 = vpop.permute.xlu0 %5706
    %5708 = vrot.lane.b32.xlu0 %v5486, 32
    %v5709 = vpop.permute.xlu0 %5708
    %5710 = vrot.lane.b32.xlu0 %v5489, 32
    %v5711 = vpop.permute.xlu0 %5710
    %5712 = vrot.lane.b32.xlu0 %v5492, 32
    %v5713 = vpop.permute.xlu0 %5712
    %5714 = vrot.lane.b32.xlu0 %v5683, 32
    %v5715 = vpop.permute.xlu0 %5714
    %v5732 = vrot.slane %v5397, 2
    %v5733 = vrot.slane %v5413, 2
    %v5734 = vsel %vm822, %v5732, %v5733
    %v5735 = vrot.slane %v5405, 2
    %v5736 = vrot.slane %v5421, 2
    %v5737 = vsel %vm822, %v5735, %v5736
    %5738 = vrot.lane.b32.xlu0 %v5541, 40
    %v5739 = vpop.permute.xlu0 %5738
    %5740 = vrot.lane.b32.xlu0 %v5544, 40
    %v5741 = vpop.permute.xlu0 %5740
    %5742 = vrot.lane.b32.xlu0 %v5547, 40
    %v5743 = vpop.permute.xlu0 %5742
    %5744 = vrot.lane.b32.xlu0 %v5550, 40
    %v5745 = vpop.permute.xlu0 %5744
    %5746 = vrot.lane.b32.xlu0 %v5553, 40
    %v5747 = vpop.permute.xlu0 %5746
    %5748 = vrot.lane.b32.xlu0 %v5556, 40
    %v5749 = vpop.permute.xlu0 %5748
    %5750 = vrot.lane.b32.xlu0 %v5559, 40
    %v5751 = vpop.permute.xlu0 %5750
    %5752 = vrot.lane.b32.xlu0 %v5734, 40
    %v5753 = vpop.permute.xlu0 %5752
    %5754 = vrot.lane.b32.xlu0 %v5562, 40
    %v5755 = vpop.permute.xlu0 %5754
    %5756 = vrot.lane.b32.xlu0 %v5565, 40
    %v5757 = vpop.permute.xlu0 %5756
    %5758 = vrot.lane.b32.xlu0 %v5568, 40
    %v5759 = vpop.permute.xlu0 %5758
    %5760 = vrot.lane.b32.xlu0 %v5571, 40
    %v5761 = vpop.permute.xlu0 %5760
    %5762 = vrot.lane.b32.xlu0 %v5574, 40
    %v5763 = vpop.permute.xlu0 %5762
    %5764 = vrot.lane.b32.xlu0 %v5577, 40
    %v5765 = vpop.permute.xlu0 %5764
    %5766 = vrot.lane.b32.xlu0 %v5580, 40
    %v5767 = vpop.permute.xlu0 %5766
    %5768 = vrot.lane.b32.xlu0 %v5737, 40
    %v5769 = vpop.permute.xlu0 %5768
    %5786 = vrot.lane.b32.xlu0 %v5391, 48
    %v5787 = vpop.permute.xlu0 %5786
    %5788 = vrot.lane.b32.xlu0 %v5392, 48
    %v5789 = vpop.permute.xlu0 %5788
    %5790 = vrot.lane.b32.xlu0 %v5393, 48
    %v5791 = vpop.permute.xlu0 %5790
    %5792 = vrot.lane.b32.xlu0 %v5394, 48
    %v5793 = vpop.permute.xlu0 %5792
    %5794 = vrot.lane.b32.xlu0 %v5395, 48
    %v5795 = vpop.permute.xlu0 %5794
    %5796 = vrot.lane.b32.xlu0 %v5396, 48
    %v5797 = vpop.permute.xlu0 %5796
    %5798 = vrot.lane.b32.xlu0 %v5397, 48
    %v5799 = vpop.permute.xlu0 %5798
    %5800 = vrot.lane.b32.xlu0 %v352, 48
    %v5801 = vpop.permute.xlu0 %5800
    %5802 = vrot.lane.b32.xlu0 %v5399, 48
    %v5803 = vpop.permute.xlu0 %5802
    %5804 = vrot.lane.b32.xlu0 %v5400, 48
    %v5805 = vpop.permute.xlu0 %5804
    %5806 = vrot.lane.b32.xlu0 %v5401, 48
    %v5807 = vpop.permute.xlu0 %5806
    %5808 = vrot.lane.b32.xlu0 %v5402, 48
    %v5809 = vpop.permute.xlu0 %5808
    %5810 = vrot.lane.b32.xlu0 %v5403, 48
    %v5811 = vpop.permute.xlu0 %5810
    %5812 = vrot.lane.b32.xlu0 %v5404, 48
    %v5813 = vpop.permute.xlu0 %5812
    %5814 = vrot.lane.b32.xlu0 %v5405, 48
    %v5815 = vpop.permute.xlu0 %5814
    %5831 = vrot.lane.b32.xlu0 %v5456, 56
    %v5832 = vpop.permute.xlu0 %5831
    %5833 = vrot.lane.b32.xlu0 %v5459, 56
    %v5834 = vpop.permute.xlu0 %5833
    %5835 = vrot.lane.b32.xlu0 %v5462, 56
    %v5836 = vpop.permute.xlu0 %5835
    %5837 = vrot.lane.b32.xlu0 %v5465, 56
    %v5838 = vpop.permute.xlu0 %5837
    %5839 = vrot.lane.b32.xlu0 %v5468, 56
    %v5840 = vpop.permute.xlu0 %5839
    %5841 = vrot.lane.b32.xlu0 %v5471, 56
    %v5842 = vpop.permute.xlu0 %5841
    %5843 = vrot.lane.b32.xlu0 %v5680, 56
    %v5844 = vpop.permute.xlu0 %5843
    %5845 = vrot.lane.b32.xlu0 %v5450, 56
    %v5846 = vpop.permute.xlu0 %5845
    %5847 = vrot.lane.b32.xlu0 %v5477, 56
    %v5848 = vpop.permute.xlu0 %5847
    %5849 = vrot.lane.b32.xlu0 %v5480, 56
    %v5850 = vpop.permute.xlu0 %5849
    %5851 = vrot.lane.b32.xlu0 %v5483, 56
    %v5852 = vpop.permute.xlu0 %5851
    %5853 = vrot.lane.b32.xlu0 %v5486, 56
    %v5854 = vpop.permute.xlu0 %5853
    %5855 = vrot.lane.b32.xlu0 %v5489, 56
    %v5856 = vpop.permute.xlu0 %5855
    %5857 = vrot.lane.b32.xlu0 %v5492, 56
    %v5858 = vpop.permute.xlu0 %5857
    %5859 = vrot.lane.b32.xlu0 %v5683, 56
    %v5860 = vpop.permute.xlu0 %5859
    %5876 = vrot.lane.b32.xlu0 %v5544, 64
    %v5877 = vpop.permute.xlu0 %5876
    %5878 = vrot.lane.b32.xlu0 %v5547, 64
    %v5879 = vpop.permute.xlu0 %5878
    %5880 = vrot.lane.b32.xlu0 %v5550, 64
    %v5881 = vpop.permute.xlu0 %5880
    %5882 = vrot.lane.b32.xlu0 %v5553, 64
    %v5883 = vpop.permute.xlu0 %5882
    %5884 = vrot.lane.b32.xlu0 %v5556, 64
    %v5885 = vpop.permute.xlu0 %5884
    %5886 = vrot.lane.b32.xlu0 %v5559, 64
    %v5887 = vpop.permute.xlu0 %5886
    %5888 = vrot.lane.b32.xlu0 %v5734, 64
    %v5889 = vpop.permute.xlu0 %5888
    %5890 = vrot.lane.b32.xlu0 %v5538, 64
    %v5891 = vpop.permute.xlu0 %5890
    %5892 = vrot.lane.b32.xlu0 %v5565, 64
    %v5893 = vpop.permute.xlu0 %5892
    %5894 = vrot.lane.b32.xlu0 %v5568, 64
    %v5895 = vpop.permute.xlu0 %5894
    %5896 = vrot.lane.b32.xlu0 %v5571, 64
    %v5897 = vpop.permute.xlu0 %5896
    %5898 = vrot.lane.b32.xlu0 %v5574, 64
    %v5899 = vpop.permute.xlu0 %5898
    %5900 = vrot.lane.b32.xlu0 %v5577, 64
    %v5901 = vpop.permute.xlu0 %5900
    %5902 = vrot.lane.b32.xlu0 %v5580, 64
    %v5903 = vpop.permute.xlu0 %5902
    %5904 = vrot.lane.b32.xlu0 %v5737, 64
    %v5905 = vpop.permute.xlu0 %5904
    %v5921 = vsel %vm2385, %v352, %v5494
    %v5922 = vsel %vm2385, %v5390, %v5496
    %v5923 = vsel %vm2385, %v5391, %v5498
    %v5924 = vsel %vm2385, %v5392, %v5500
    %v5925 = vsel %vm2385, %v5393, %v5502
    %v5926 = vsel %vm2385, %v5394, %v5504
    %v5927 = vsel %vm2385, %v5395, %v5506
    %v5928 = vsel %vm2385, %v5396, %v5508
    %v5929 = vsel %vm2385, %v5398, %v5510
    %v5930 = vsel %vm2385, %v5399, %v5512
    %v5931 = vsel %vm2385, %v5400, %v5514
    %v5932 = vsel %vm2385, %v5401, %v5516
    %v5933 = vsel %vm2385, %v5402, %v5518
    %v5934 = vsel %vm2385, %v5403, %v5520
    %v5935 = vsel %vm2385, %v5404, %v5522
    %v5936 = vsel %vm2513, %v5921, %v5582
    %v5937 = vsel %vm2513, %v5922, %v5584
    %v5938 = vsel %vm2513, %v5923, %v5586
    %v5939 = vsel %vm2513, %v5924, %v5588
    %v5940 = vsel %vm2513, %v5925, %v5590
    %v5941 = vsel %vm2513, %v5926, %v5592
    %v5942 = vsel %vm2513, %v5927, %v5594
    %v5943 = vsel %vm2513, %v5928, %v5596
    %v5944 = vsel %vm2513, %v5929, %v5598
    %v5945 = vsel %vm2513, %v5930, %v5600
    %v5946 = vsel %vm2513, %v5931, %v5602
    %v5947 = vsel %vm2513, %v5932, %v5604
    %v5948 = vsel %vm2513, %v5933, %v5606
    %v5949 = vsel %vm2513, %v5934, %v5608
    %v5950 = vsel %vm2513, %v5935, %v5610
    %v5951 = vsel %vm2643, %v5936, %v5629
    %v5952 = vsel %vm2643, %v5937, %v5631
    %v5953 = vsel %vm2643, %v5938, %v5633
    %v5954 = vsel %vm2643, %v5939, %v5635
    %v5955 = vsel %vm2643, %v5940, %v5637
    %v5956 = vsel %vm2643, %v5941, %v5639
    %v5957 = vsel %vm2643, %v5942, %v5641
    %v5958 = vsel %vm2643, %v5943, %v5643
    %v5959 = vsel %vm2643, %v5936, %v5645
    %v5960 = vsel %vm2643, %v5944, %v5647
    %v5961 = vsel %vm2643, %v5945, %v5649
    %v5962 = vsel %vm2643, %v5946, %v5651
    %v5963 = vsel %vm2643, %v5947, %v5653
    %v5964 = vsel %vm2643, %v5948, %v5655
    %v5965 = vsel %vm2643, %v5949, %v5657
    %v5966 = vsel %vm2643, %v5950, %v5659
    %v5967 = vsel %vm2773, %v5951, %v5685
    %v5968 = vsel %vm2773, %v5952, %v5687
    %v5969 = vsel %vm2773, %v5953, %v5689
    %v5970 = vsel %vm2773, %v5954, %v5691
    %v5971 = vsel %vm2773, %v5955, %v5693
    %v5972 = vsel %vm2773, %v5956, %v5695
    %v5973 = vsel %vm2773, %v5957, %v5697
    %v5974 = vsel %vm2773, %v5958, %v5699
    %v5975 = vsel %vm2773, %v5959, %v5701
    %v5976 = vsel %vm2773, %v5960, %v5703
    %v5977 = vsel %vm2773, %v5961, %v5705
    %v5978 = vsel %vm2773, %v5962, %v5707
    %v5979 = vsel %vm2773, %v5963, %v5709
    %v5980 = vsel %vm2773, %v5964, %v5711
    %v5981 = vsel %vm2773, %v5965, %v5713
    %v5982 = vsel %vm2773, %v5966, %v5715
    %vm5983 = vcmask 326656
    %v5984 = vsel %vm5983, %v5967, %v5739
    %v5985 = vsel %vm5983, %v5968, %v5741
    %v5986 = vsel %vm5983, %v5969, %v5743
    %v5987 = vsel %vm5983, %v5970, %v5745
    %v5988 = vsel %vm5983, %v5971, %v5747
    %v5989 = vsel %vm5983, %v5972, %v5749
    %v5990 = vsel %vm5983, %v5973, %v5751
    %v5991 = vsel %vm5983, %v5974, %v5753
    %v5992 = vsel %vm5983, %v5975, %v5755
    %v5993 = vsel %vm5983, %v5976, %v5757
    %v5994 = vsel %vm5983, %v5977, %v5759
    %v5995 = vsel %vm5983, %v5978, %v5761
    %v5996 = vsel %vm5983, %v5979, %v5763
    %v5997 = vsel %vm5983, %v5980, %v5765
    %v5998 = vsel %vm5983, %v5981, %v5767
    %v5999 = vsel %vm5983, %v5982, %v5769
    %vm6000 = vcmask 392192
    %v6001 = vsel %vm6000, %v5984, %v5787
    %v6002 = vsel %vm6000, %v5985, %v5789
    %v6003 = vsel %vm6000, %v5986, %v5791
    %v6004 = vsel %vm6000, %v5987, %v5793
    %v6005 = vsel %vm6000, %v5988, %v5795
    %v6006 = vsel %vm6000, %v5989, %v5797
    %v6007 = vsel %vm6000, %v5990, %v5799
    %v6008 = vsel %vm6000, %v5991, %v5801
    %v6009 = vsel %vm6000, %v5992, %v5803
    %v6010 = vsel %vm6000, %v5993, %v5805
    %v6011 = vsel %vm6000, %v5994, %v5807
    %v6012 = vsel %vm6000, %v5995, %v5809
    %v6013 = vsel %vm6000, %v5996, %v5811
    %v6014 = vsel %vm6000, %v5997, %v5813
    %v6015 = vsel %vm6000, %v5998, %v5815
    %v6016 = vsel %vm6000, %v5999, %v5801
    %vm6017 = vcmask 457728
    %v6018 = vsel %vm6017, %v6001, %v5832
    %v6019 = vsel %vm6017, %v6002, %v5834
    %v6020 = vsel %vm6017, %v6003, %v5836
    %v6021 = vsel %vm6017, %v6004, %v5838
    %v6022 = vsel %vm6017, %v6005, %v5840
    %v6023 = vsel %vm6017, %v6006, %v5842
    %v6024 = vsel %vm6017, %v6007, %v5844
    %v6025 = vsel %vm6017, %v6008, %v5846
    %v6026 = vsel %vm6017, %v6009, %v5848
    %v6027 = vsel %vm6017, %v6010, %v5850
    %v6028 = vsel %vm6017, %v6011, %v5852
    %v6029 = vsel %vm6017, %v6012, %v5854
    %v6030 = vsel %vm6017, %v6013, %v5856
    %v6031 = vsel %vm6017, %v6014, %v5858
    %v6032 = vsel %vm6017, %v6015, %v5860
    %v6033 = vsel %vm6017, %v6016, %v5846
    %vm6034 = vcmask 523264
    %v6035 = vsel %vm6034, %v6018, %v5877
    %v6036 = vsel %vm6034, %v6019, %v5879
    %v6037 = vsel %vm6034, %v6020, %v5881
    %v6038 = vsel %vm6034, %v6021, %v5883
    %v6039 = vsel %vm6034, %v6022, %v5885
    %v6040 = vsel %vm6034, %v6023, %v5887
    %v6041 = vsel %vm6034, %v6024, %v5889
    %v6042 = vsel %vm6034, %v6025, %v5891
    %v6043 = vsel %vm6034, %v6026, %v5893
    %v6044 = vsel %vm6034, %v6027, %v5895
    %v6045 = vsel %vm6034, %v6028, %v5897
    %v6046 = vsel %vm6034, %v6029, %v5899
    %v6047 = vsel %vm6034, %v6030, %v5901
    %v6048 = vsel %vm6034, %v6031, %v5903
    %v6049 = vsel %vm6034, %v6032, %v5905
    %v6050 = vsel %vm6034, %v6033, %v5891
    %v6051 = vpack.c.bf16 %v6036, %v6035
    %v6052 = vpack.c.bf16 %v6038, %v6037
    %v6053 = vpack.c.bf16 %v6040, %v6039
    %v6054 = vpack.c.bf16 %v6042, %v6041
    %v6055 = vpack.c.bf16 %v6044, %v6043
    %v6056 = vpack.c.bf16 %v6046, %v6045
    %v6057 = vpack.c.bf16 %v6048, %v6047
    %v6058 = vpack.c.bf16 %v6050, %v6049
    %v6059 = vld [vmem:[%s2] sm:$0xf]
    %v6060 = vld [vmem:[%s2 + $0x4] sm:$0xf]
    %v6061 = vld [vmem:[%s2 + $0x8] sm:$0xf]
    %v6062 = vld [vmem:[%s2 + $0xc] sm:$0xf]
    %v6063 = vld [vmem:[%s2 + $0x10] sm:$0xf]
    %v6064 = vld [vmem:[%s2 + $0x14] sm:$0xf]
    %v6065 = vld [vmem:[%s2 + $0x18] sm:$0xf]
    %v6066 = vld [vmem:[%s2 + $0x1c] sm:$0xf]
    %v6067 = vld [vmem:[%s2 + $0x20] sm:$0xf]
    %v6068 = vld [vmem:[%s6] sm:$0x1]
    %v6070 = vlaneseq
    %v6071 = vshrl.u32 %v6070, 7
    %v6072 = vsub.s32 0, %v6071
    %v6073 = vrot.slane %v6068, %v6072
    %v6083 = vunpack.c.l.b16 %v6059
    %v6084 = vunpack.c.l.b16 %v6060
    %v6085 = vunpack.c.l.b16 %v6061
    %v6086 = vunpack.c.l.b16 %v6062
    %v6087 = vunpack.c.l.b16 %v6063
    %v6088 = vunpack.c.l.b16 %v6064
    %v6089 = vunpack.c.l.b16 %v6065
    %v6090 = vunpack.c.l.b16 %v6066
    %v6091 = vunpack.c.l.b16 %v6067
    %v6092 = vpack.c.b16 %v6084, %v6083
    %v6093 = vpack.c.b16 %v6086, %v6085
    %v6094 = vpack.c.b16 %v6088, %v6087
    %v6095 = vpack.c.b16 %v6090, %v6089
    %v6096 = vpack.c.b16 %v6091, %v6091
    %6101 = vrot.lane.b32.xlu0 %v6073, 120
    %v6102 = vpop.permute.xlu0 %6101
    %vm6104 = vcmask 588800
    %v6106 = vsel %vm6104, %v6051, 0
    %v6109 = vsel %vm6104, %v6052, 0
    %v6112 = vsel %vm6104, %v6053, 0
    %v6115 = vsel %vm6104, %v6054, 0
    %v6118 = vsel %vm6104, %v6055, 0
    %v6121 = vsel %vm6104, %v6056, 0
    %v6124 = vsel %vm6104, %v6057, 0
    %v6127 = vsel %vm6104, %v6058, 0
    %vm6129 = vcmask 1043456
    %v6131 = vsel %vm6129, %v6096, 0
    %6133 = vmatprep.subr.bf16.mxu0 0
    %6134 = vmatpush1.bf16.msra.mxu0 0
    %6135 = vmatprep.subr.bf16.mxu0 0
    %6136 = vmatpush1.bf16.msra.mxu0 0
    %6137 = vmatprep.subr.bf16.mxu0 0
    %6138 = vmatpush1.bf16.msra.mxu0 0
    %6139 = vmatprep.subr.bf16.mxu0 0
    %6140 = vmatpush1.bf16.msra.mxu0 %v6131
    %6141 = vmatprep.subr.bf16.mxu0 0
    %6142 = vmatpush1.bf16.msra.mxu0 %v6095
    %6143 = vmatprep.subr.bf16.mxu0 0
    %6144 = vmatpush1.bf16.msra.mxu0 %v6094
    %6145 = vmatprep.subr.bf16.mxu0 0
    %6146 = vmatpush1.bf16.msra.mxu0 %v6093
    %6147 = vmatprep.subr.bf16.mxu0 0
    %6148 = vmatpush1.bf16.msra.mxu0 %v6092
    %6149 = vmatprep.subr.bf16.mxu0 0
    %6150 = vmatpush2.bf16.msra.mxu0 0
    %6151 = vmatprep.subr.bf16.mxu0 0
    %6152 = vmatpush2.bf16.msra.mxu0 0
    %6153 = vmatprep.subr.bf16.mxu0 0
    %6154 = vmatpush2.bf16.msra.mxu0 0
    %6155 = vmatprep.subr.bf16.mxu0 0
    %6156 = vmatpush2.bf16.msra.mxu0 0
    %6157 = vmatprep.subr.bf16.mxu0 0
    %6158 = vmatpush2.bf16.msra.mxu0 0
    %6159 = vmatprep.subr.bf16.mxu0 0
    %6160 = vmatpush2.bf16.msra.mxu0 0
    %6161 = vmatprep.subr.bf16.mxu0 0
    %6162 = vmatpush2.bf16.msra.mxu0 0
    %6163 = vmatprep.subr.bf16.mxu0 0
    %6164 = vmatpush2.bf16.msra.mxu0 0
    %6165 = vmatprep.mubr.bf16.mxu0 0
    %6166 = vmatmul.mubr.bf16.gmra.mxu0 %v6106
    %v6167 = vpop.f32.mrf.mxu0
    %v6168 = vadd.f32 %v6102, %v6167
    %v6169 = vpop.f32.mrf.mxu0
    %v6170 = vpop.f32.mrf.mxu0
    %v6171 = vadd.f32 %v6102, %v6170
    %v6172 = vpop.f32.mrf.mxu0
    %6173 = vmatprep.mubr.bf16.mxu0 0
    %6174 = vmatmul.mubr.bf16.gmra.mxu0 %v6109
    %v6175 = vpop.f32.mrf.mxu0
    %v6176 = vadd.f32 %v6102, %v6175
    %v6177 = vpop.f32.mrf.mxu0
    %v6178 = vpop.f32.mrf.mxu0
    %v6179 = vadd.f32 %v6102, %v6178
    %v6180 = vpop.f32.mrf.mxu0
    %6181 = vmatprep.mubr.bf16.mxu0 0
    %6182 = vmatmul.mubr.bf16.gmra.mxu0 %v6112
    %v6183 = vpop.f32.mrf.mxu0
    %v6184 = vadd.f32 %v6102, %v6183
    %v6185 = vpop.f32.mrf.mxu0
    %v6186 = vpop.f32.mrf.mxu0
    %v6187 = vadd.f32 %v6102, %v6186
    %v6188 = vpop.f32.mrf.mxu0
    %6189 = vmatprep.mubr.bf16.mxu0 0
    %6190 = vmatmul.mubr.bf16.gmra.mxu0 %v6115
    %v6191 = vpop.f32.mrf.mxu0
    %v6192 = vadd.f32 %v6102, %v6191
    %v6193 = vpop.f32.mrf.mxu0
    %v6194 = vpop.f32.mrf.mxu0
    %v6195 = vadd.f32 %v6102, %v6194
    %v6196 = vpop.f32.mrf.mxu0
    %6197 = vmatprep.mubr.bf16.mxu0 0
    %6198 = vmatmul.mubr.bf16.gmra.mxu0 %v6118
    %v6199 = vpop.f32.mrf.mxu0
    %v6200 = vadd.f32 %v6102, %v6199
    %v6201 = vpop.f32.mrf.mxu0
    %v6202 = vpop.f32.mrf.mxu0
    %v6203 = vadd.f32 %v6102, %v6202
    %v6204 = vpop.f32.mrf.mxu0
    %6205 = vmatprep.mubr.bf16.mxu0 0
    %6206 = vmatmul.mubr.bf16.gmra.mxu0 %v6121
    %v6207 = vpop.f32.mrf.mxu0
    %v6208 = vadd.f32 %v6102, %v6207
    %v6209 = vpop.f32.mrf.mxu0
    %v6210 = vpop.f32.mrf.mxu0
    %v6211 = vadd.f32 %v6102, %v6210
    %v6212 = vpop.f32.mrf.mxu0
    %6213 = vmatprep.mubr.bf16.mxu0 0
    %6214 = vmatmul.mubr.bf16.gmra.mxu0 %v6124
    %v6215 = vpop.f32.mrf.mxu0
    %v6216 = vadd.f32 %v6102, %v6215
    %v6217 = vpop.f32.mrf.mxu0
    %v6218 = vpop.f32.mrf.mxu0
    %v6219 = vadd.f32 %v6102, %v6218
    %v6220 = vpop.f32.mrf.mxu0
    %6221 = vmatprep.mubr.bf16.mxu0 0
    %6222 = vmatmul.mubr.bf16.gmra.mxu0 %v6127
    %v6223 = vpop.f32.mrf.mxu0
    %v6224 = vadd.f32 %v6102, %v6223
    %v6225 = vpop.f32.mrf.mxu0
    %v6226 = vpop.f32.mrf.mxu0
    %v6227 = vadd.f32 %v6102, %v6226
    %v6228 = vpop.f32.mrf.mxu0
    %6229 = vdwg.mxu0
    %v6230 = vmax.f32 %v6168, 0.0
    %v6231 = vmax.f32 %v6171, 0.0
    %v6232 = vmax.f32 %v6176, 0.0
    %v6233 = vmax.f32 %v6179, 0.0
    %v6234 = vmax.f32 %v6184, 0.0
    %v6235 = vmax.f32 %v6187, 0.0
    %v6236 = vmax.f32 %v6192, 0.0
    %v6237 = vmax.f32 %v6195, 0.0
    %v6238 = vmax.f32 %v6200, 0.0
    %v6239 = vmax.f32 %v6203, 0.0
    %v6240 = vmax.f32 %v6208, 0.0
    %v6241 = vmax.f32 %v6211, 0.0
    %v6242 = vmax.f32 %v6216, 0.0
    %v6243 = vmax.f32 %v6219, 0.0
    %v6244 = vmax.f32 %v6224, 0.0
    %v6245 = vmax.f32 %v6227, 0.0
    %v6246 = vmax.f32 %v6230, %v6231
    %v6247 = vmax.f32 %v6232, %v6233
    %v6248 = vmax.f32 %v6234, %v6235
    %v6249 = vmax.f32 %v6236, %v6237
    %v6250 = vmax.f32 %v6238, %v6239
    %v6251 = vmax.f32 %v6240, %v6241
    %v6252 = vmax.f32 %v6242, %v6243
    %v6253 = vmax.f32 %v6244, %v6245
    %v6262 = vcombine.high %v6246, %v6246
    %v6264 = vunpack.c.l.s4 1983009808
    %v6265 = vunpack.c.0.s8 %v6264
    %v6266 = vlaneseq
    %v6267 = vshrl.u32 %v6266, 7
    %v6268 = vsub.s32 %v6265, %v6267
    %v6269 = vrot.slane %v6246, %v6268
    %v6271 = vunpack.c.l.s4 1983009808
    %v6272 = vunpack.c.0.s8 %v6271
    %v6273 = vlaneseq
    %v6274 = vshrl.u32 %v6273, 7
    %v6275 = vsub.s32 %v6272, %v6274
    %v6276 = vrot.slane %v6262, %v6275
    %v6277 = vcombine.high %v6269, %v6269
    %v6278 = vcombine.high %v6276, %v6276
    %v6279 = vcombine.high %v6247, %v6247
    %v6281 = vunpack.c.l.s4 1983009808
    %v6282 = vunpack.c.0.s8 %v6281
    %v6283 = vlaneseq
    %v6284 = vshrl.u32 %v6283, 7
    %v6285 = vsub.s32 %v6282, %v6284
    %v6286 = vrot.slane %v6247, %v6285
    %v6288 = vunpack.c.l.s4 1983009808
    %v6289 = vunpack.c.0.s8 %v6288
    %v6290 = vlaneseq
    %v6291 = vshrl.u32 %v6290, 7
    %v6292 = vsub.s32 %v6289, %v6291
    %v6293 = vrot.slane %v6279, %v6292
    %v6294 = vcombine.high %v6286, %v6286
    %v6295 = vcombine.high %v6293, %v6293
    %v6296 = vcombine.high %v6248, %v6248
    %v6298 = vunpack.c.l.s4 1983009808
    %v6299 = vunpack.c.0.s8 %v6298
    %v6300 = vlaneseq
    %v6301 = vshrl.u32 %v6300, 7
    %v6302 = vsub.s32 %v6299, %v6301
    %v6303 = vrot.slane %v6248, %v6302
    %v6305 = vunpack.c.l.s4 1983009808
    %v6306 = vunpack.c.0.s8 %v6305
    %v6307 = vlaneseq
    %v6308 = vshrl.u32 %v6307, 7
    %v6309 = vsub.s32 %v6306, %v6308
    %v6310 = vrot.slane %v6296, %v6309
    %v6311 = vcombine.high %v6303, %v6303
    %v6312 = vcombine.high %v6310, %v6310
    %v6313 = vcombine.high %v6249, %v6249
    %v6315 = vunpack.c.l.s4 1983009808
    %v6316 = vunpack.c.0.s8 %v6315
    %v6317 = vlaneseq
    %v6318 = vshrl.u32 %v6317, 7
    %v6319 = vsub.s32 %v6316, %v6318
    %v6320 = vrot.slane %v6249, %v6319
    %v6322 = vunpack.c.l.s4 1983009808
    %v6323 = vunpack.c.0.s8 %v6322
    %v6324 = vlaneseq
    %v6325 = vshrl.u32 %v6324, 7
    %v6326 = vsub.s32 %v6323, %v6325
    %v6327 = vrot.slane %v6313, %v6326
    %v6328 = vcombine.high %v6320, %v6320
    %v6329 = vcombine.high %v6327, %v6327
    %v6330 = vcombine.high %v6250, %v6250
    %v6332 = vunpack.c.l.s4 1983009808
    %v6333 = vunpack.c.0.s8 %v6332
    %v6334 = vlaneseq
    %v6335 = vshrl.u32 %v6334, 7
    %v6336 = vsub.s32 %v6333, %v6335
    %v6337 = vrot.slane %v6250, %v6336
    %v6339 = vunpack.c.l.s4 1983009808
    %v6340 = vunpack.c.0.s8 %v6339
    %v6341 = vlaneseq
    %v6342 = vshrl.u32 %v6341, 7
    %v6343 = vsub.s32 %v6340, %v6342
    %v6344 = vrot.slane %v6330, %v6343
    %v6345 = vcombine.high %v6337, %v6337
    %v6346 = vcombine.high %v6344, %v6344
    %v6347 = vcombine.high %v6251, %v6251
    %v6349 = vunpack.c.l.s4 1983009808
    %v6350 = vunpack.c.0.s8 %v6349
    %v6351 = vlaneseq
    %v6352 = vshrl.u32 %v6351, 7
    %v6353 = vsub.s32 %v6350, %v6352
    %v6354 = vrot.slane %v6251, %v6353
    %v6356 = vunpack.c.l.s4 1983009808
    %v6357 = vunpack.c.0.s8 %v6356
    %v6358 = vlaneseq
    %v6359 = vshrl.u32 %v6358, 7
    %v6360 = vsub.s32 %v6357, %v6359
    %v6361 = vrot.slane %v6347, %v6360
    %v6362 = vcombine.high %v6354, %v6354
    %v6363 = vcombine.high %v6361, %v6361
    %v6364 = vcombine.high %v6252, %v6252
    %v6366 = vunpack.c.l.s4 1983009808
    %v6367 = vunpack.c.0.s8 %v6366
    %v6368 = vlaneseq
    %v6369 = vshrl.u32 %v6368, 7
    %v6370 = vsub.s32 %v6367, %v6369
    %v6371 = vrot.slane %v6252, %v6370
    %v6373 = vunpack.c.l.s4 1983009808
    %v6374 = vunpack.c.0.s8 %v6373
    %v6375 = vlaneseq
    %v6376 = vshrl.u32 %v6375, 7
    %v6377 = vsub.s32 %v6374, %v6376
    %v6378 = vrot.slane %v6364, %v6377
    %v6379 = vcombine.high %v6371, %v6371
    %v6380 = vcombine.high %v6378, %v6378
    %v6381 = vcombine.high %v6253, %v6253
    %v6383 = vunpack.c.l.s4 1983009808
    %v6384 = vunpack.c.0.s8 %v6383
    %v6385 = vlaneseq
    %v6386 = vshrl.u32 %v6385, 7
    %v6387 = vsub.s32 %v6384, %v6386
    %v6388 = vrot.slane %v6253, %v6387
    %v6390 = vunpack.c.l.s4 1983009808
    %v6391 = vunpack.c.0.s8 %v6390
    %v6392 = vlaneseq
    %v6393 = vshrl.u32 %v6392, 7
    %v6394 = vsub.s32 %v6391, %v6393
    %v6395 = vrot.slane %v6381, %v6394
    %v6396 = vcombine.high %v6388, %v6388
    %v6397 = vcombine.high %v6395, %v6395
    %v6430 = vrot.slane %v6269, 7
    %v6431 = vrot.slane %v6430, 2
    %v6432 = vrot.slane %v6277, 7
    %v6433 = vrot.slane %v6432, 2
    %v6434 = vrot.slane %v6276, 7
    %v6435 = vrot.slane %v6434, 2
    %v6436 = vrot.slane %v6278, 7
    %v6437 = vrot.slane %v6436, 2
    %v6438 = vrot.slane %v6286, 7
    %v6439 = vrot.slane %v6438, 2
    %v6440 = vrot.slane %v6294, 7
    %v6441 = vrot.slane %v6440, 2
    %v6442 = vrot.slane %v6293, 7
    %v6443 = vrot.slane %v6442, 2
    %v6444 = vrot.slane %v6295, 7
    %v6445 = vrot.slane %v6444, 2
    %v6446 = vrot.slane %v6303, 7
    %v6447 = vrot.slane %v6446, 2
    %v6448 = vrot.slane %v6311, 7
    %v6449 = vrot.slane %v6448, 2
    %v6450 = vrot.slane %v6310, 7
    %v6451 = vrot.slane %v6450, 2
    %v6452 = vrot.slane %v6312, 7
    %v6453 = vrot.slane %v6452, 2
    %v6454 = vrot.slane %v6320, 7
    %v6455 = vrot.slane %v6454, 2
    %v6456 = vrot.slane %v6328, 7
    %v6457 = vrot.slane %v6456, 2
    %v6458 = vrot.slane %v6327, 7
    %v6459 = vrot.slane %v6458, 2
    %v6460 = vrot.slane %v6329, 7
    %v6461 = vrot.slane %v6460, 2
    %v6462 = vrot.slane %v6337, 7
    %v6463 = vrot.slane %v6462, 2
    %v6464 = vrot.slane %v6345, 7
    %v6465 = vrot.slane %v6464, 2
    %v6466 = vrot.slane %v6344, 7
    %v6467 = vrot.slane %v6466, 2
    %v6468 = vrot.slane %v6346, 7
    %v6469 = vrot.slane %v6468, 2
    %v6470 = vrot.slane %v6354, 7
    %v6471 = vrot.slane %v6470, 2
    %v6472 = vrot.slane %v6362, 7
    %v6473 = vrot.slane %v6472, 2
    %v6474 = vrot.slane %v6361, 7
    %v6475 = vrot.slane %v6474, 2
    %v6476 = vrot.slane %v6363, 7
    %v6477 = vrot.slane %v6476, 2
    %v6478 = vrot.slane %v6371, 7
    %v6479 = vrot.slane %v6478, 2
    %v6480 = vrot.slane %v6379, 7
    %v6481 = vrot.slane %v6480, 2
    %v6482 = vrot.slane %v6378, 7
    %v6483 = vrot.slane %v6482, 2
    %v6484 = vrot.slane %v6380, 7
    %v6485 = vrot.slane %v6484, 2
    %v6486 = vrot.slane %v6388, 7
    %v6487 = vrot.slane %v6486, 2
    %v6488 = vrot.slane %v6396, 7
    %v6489 = vrot.slane %v6488, 2
    %v6490 = vrot.slane %v6395, 7
    %v6491 = vrot.slane %v6490, 2
    %v6492 = vrot.slane %v6397, 7
    %v6493 = vrot.slane %v6492, 2
    %v6526 = vmax.f32 %v6269, %v6431
    %v6527 = vmax.f32 %v6277, %v6433
    %v6528 = vmax.f32 %v6276, %v6435
    %v6529 = vmax.f32 %v6278, %v6437
    %v6530 = vmax.f32 %v6286, %v6439
    %v6531 = vmax.f32 %v6294, %v6441
    %v6532 = vmax.f32 %v6293, %v6443
    %v6533 = vmax.f32 %v6295, %v6445
    %v6534 = vmax.f32 %v6303, %v6447
    %v6535 = vmax.f32 %v6311, %v6449
    %v6536 = vmax.f32 %v6310, %v6451
    %v6537 = vmax.f32 %v6312, %v6453
    %v6538 = vmax.f32 %v6320, %v6455
    %v6539 = vmax.f32 %v6328, %v6457
    %v6540 = vmax.f32 %v6327, %v6459
    %v6541 = vmax.f32 %v6329, %v6461
    %v6542 = vmax.f32 %v6337, %v6463
    %v6543 = vmax.f32 %v6345, %v6465
    %v6544 = vmax.f32 %v6344, %v6467
    %v6545 = vmax.f32 %v6346, %v6469
    %v6546 = vmax.f32 %v6354, %v6471
    %v6547 = vmax.f32 %v6362, %v6473
    %v6548 = vmax.f32 %v6361, %v6475
    %v6549 = vmax.f32 %v6363, %v6477
    %v6550 = vmax.f32 %v6371, %v6479
    %v6551 = vmax.f32 %v6379, %v6481
    %v6552 = vmax.f32 %v6378, %v6483
    %v6553 = vmax.f32 %v6380, %v6485
    %v6554 = vmax.f32 %v6388, %v6487
    %v6555 = vmax.f32 %v6396, %v6489
    %v6556 = vmax.f32 %v6395, %v6491
    %v6557 = vmax.f32 %v6397, %v6493
    %v6560 = vlaneseq
    %v6561 = vshrl.u32 %v6560, 7
    %v6562 = vsub.s32 0, %v6561
    %v6563 = vrot.slane %v6526, %v6562
    %v6564 = vlaneseq
    %v6565 = vshrl.u32 %v6564, 7
    %v6566 = vsub.s32 0, %v6565
    %v6567 = vrot.slane %v6542, %v6566
    %v6568 = vsel %vm5239, %v6567, %v6563
    %v6572 = vlaneseq
    %v6573 = vshrl.u32 %v6572, 7
    %v6574 = vsub.s32 0, %v6573
    %v6575 = vrot.slane %v6527, %v6574
    %v6576 = vlaneseq
    %v6577 = vshrl.u32 %v6576, 7
    %v6578 = vsub.s32 0, %v6577
    %v6579 = vrot.slane %v6543, %v6578
    %v6580 = vsel %vm5239, %v6579, %v6575
    %6581 = vrot.lane.b32.xlu0 %v6580, 16
    %v6582 = vpop.permute.xlu0 %6581
    %v6586 = vlaneseq
    %v6587 = vshrl.u32 %v6586, 7
    %v6588 = vsub.s32 0, %v6587
    %v6589 = vrot.slane %v6528, %v6588
    %v6590 = vlaneseq
    %v6591 = vshrl.u32 %v6590, 7
    %v6592 = vsub.s32 0, %v6591
    %v6593 = vrot.slane %v6544, %v6592
    %v6594 = vsel %vm5239, %v6593, %v6589
    %6595 = vrot.lane.b32.xlu0 %v6594, 32
    %v6596 = vpop.permute.xlu0 %6595
    %v6600 = vlaneseq
    %v6601 = vshrl.u32 %v6600, 7
    %v6602 = vsub.s32 0, %v6601
    %v6603 = vrot.slane %v6529, %v6602
    %v6604 = vlaneseq
    %v6605 = vshrl.u32 %v6604, 7
    %v6606 = vsub.s32 0, %v6605
    %v6607 = vrot.slane %v6545, %v6606
    %v6608 = vsel %vm5239, %v6607, %v6603
    %6609 = vrot.lane.b32.xlu0 %v6608, 48
    %v6610 = vpop.permute.xlu0 %6609
    %v6614 = vlaneseq
    %v6615 = vshrl.u32 %v6614, 7
    %v6616 = vsub.s32 0, %v6615
    %v6617 = vrot.slane %v6530, %v6616
    %v6618 = vlaneseq
    %v6619 = vshrl.u32 %v6618, 7
    %v6620 = vsub.s32 0, %v6619
    %v6621 = vrot.slane %v6546, %v6620
    %v6622 = vsel %vm5239, %v6621, %v6617
    %6623 = vrot.lane.b32.xlu0 %v6622, 64
    %v6624 = vpop.permute.xlu0 %6623
    %v6628 = vlaneseq
    %v6629 = vshrl.u32 %v6628, 7
    %v6630 = vsub.s32 0, %v6629
    %v6631 = vrot.slane %v6531, %v6630
    %v6632 = vlaneseq
    %v6633 = vshrl.u32 %v6632, 7
    %v6634 = vsub.s32 0, %v6633
    %v6635 = vrot.slane %v6547, %v6634
    %v6636 = vsel %vm5239, %v6635, %v6631
    %6637 = vrot.lane.b32.xlu0 %v6636, 80
    %v6638 = vpop.permute.xlu0 %6637
    %v6642 = vlaneseq
    %v6643 = vshrl.u32 %v6642, 7
    %v6644 = vsub.s32 0, %v6643
    %v6645 = vrot.slane %v6532, %v6644
    %v6646 = vlaneseq
    %v6647 = vshrl.u32 %v6646, 7
    %v6648 = vsub.s32 0, %v6647
    %v6649 = vrot.slane %v6548, %v6648
    %v6650 = vsel %vm5239, %v6649, %v6645
    %6651 = vrot.lane.b32.xlu0 %v6650, 96
    %v6652 = vpop.permute.xlu0 %6651
    %v6656 = vlaneseq
    %v6657 = vshrl.u32 %v6656, 7
    %v6658 = vsub.s32 0, %v6657
    %v6659 = vrot.slane %v6533, %v6658
    %v6660 = vlaneseq
    %v6661 = vshrl.u32 %v6660, 7
    %v6662 = vsub.s32 0, %v6661
    %v6663 = vrot.slane %v6549, %v6662
    %v6664 = vsel %vm5239, %v6663, %v6659
    %6665 = vrot.lane.b32.xlu0 %v6664, 112
    %v6666 = vpop.permute.xlu0 %6665
    %v6670 = vlaneseq
    %v6671 = vshrl.u32 %v6670, 7
    %v6672 = vsub.s32 0, %v6671
    %v6673 = vrot.slane %v6534, %v6672
    %v6674 = vlaneseq
    %v6675 = vshrl.u32 %v6674, 7
    %v6676 = vsub.s32 0, %v6675
    %v6677 = vrot.slane %v6550, %v6676
    %v6678 = vsel %vm5239, %v6677, %v6673
    %v6682 = vlaneseq
    %v6683 = vshrl.u32 %v6682, 7
    %v6684 = vsub.s32 0, %v6683
    %v6685 = vrot.slane %v6535, %v6684
    %v6686 = vlaneseq
    %v6687 = vshrl.u32 %v6686, 7
    %v6688 = vsub.s32 0, %v6687
    %v6689 = vrot.slane %v6551, %v6688
    %v6690 = vsel %vm5239, %v6689, %v6685
    %6691 = vrot.lane.b32.xlu0 %v6690, 16
    %v6692 = vpop.permute.xlu0 %6691
    %v6696 = vlaneseq
    %v6697 = vshrl.u32 %v6696, 7
    %v6698 = vsub.s32 0, %v6697
    %v6699 = vrot.slane %v6536, %v6698
    %v6700 = vlaneseq
    %v6701 = vshrl.u32 %v6700, 7
    %v6702 = vsub.s32 0, %v6701
    %v6703 = vrot.slane %v6552, %v6702
    %v6704 = vsel %vm5239, %v6703, %v6699
    %6705 = vrot.lane.b32.xlu0 %v6704, 32
    %v6706 = vpop.permute.xlu0 %6705
    %v6710 = vlaneseq
    %v6711 = vshrl.u32 %v6710, 7
    %v6712 = vsub.s32 0, %v6711
    %v6713 = vrot.slane %v6537, %v6712
    %v6714 = vlaneseq
    %v6715 = vshrl.u32 %v6714, 7
    %v6716 = vsub.s32 0, %v6715
    %v6717 = vrot.slane %v6553, %v6716
    %v6718 = vsel %vm5239, %v6717, %v6713
    %6719 = vrot.lane.b32.xlu0 %v6718, 48
    %v6720 = vpop.permute.xlu0 %6719
    %v6724 = vlaneseq
    %v6725 = vshrl.u32 %v6724, 7
    %v6726 = vsub.s32 0, %v6725
    %v6727 = vrot.slane %v6538, %v6726
    %v6728 = vlaneseq
    %v6729 = vshrl.u32 %v6728, 7
    %v6730 = vsub.s32 0, %v6729
    %v6731 = vrot.slane %v6554, %v6730
    %v6732 = vsel %vm5239, %v6731, %v6727
    %6733 = vrot.lane.b32.xlu0 %v6732, 64
    %v6734 = vpop.permute.xlu0 %6733
    %v6738 = vlaneseq
    %v6739 = vshrl.u32 %v6738, 7
    %v6740 = vsub.s32 0, %v6739
    %v6741 = vrot.slane %v6539, %v6740
    %v6742 = vlaneseq
    %v6743 = vshrl.u32 %v6742, 7
    %v6744 = vsub.s32 0, %v6743
    %v6745 = vrot.slane %v6555, %v6744
    %v6746 = vsel %vm5239, %v6745, %v6741
    %6747 = vrot.lane.b32.xlu0 %v6746, 80
    %v6748 = vpop.permute.xlu0 %6747
    %v6752 = vlaneseq
    %v6753 = vshrl.u32 %v6752, 7
    %v6754 = vsub.s32 0, %v6753
    %v6755 = vrot.slane %v6540, %v6754
    %v6756 = vlaneseq
    %v6757 = vshrl.u32 %v6756, 7
    %v6758 = vsub.s32 0, %v6757
    %v6759 = vrot.slane %v6556, %v6758
    %v6760 = vsel %vm5239, %v6759, %v6755
    %6761 = vrot.lane.b32.xlu0 %v6760, 96
    %v6762 = vpop.permute.xlu0 %6761
    %v6766 = vlaneseq
    %v6767 = vshrl.u32 %v6766, 7
    %v6768 = vsub.s32 0, %v6767
    %v6769 = vrot.slane %v6541, %v6768
    %v6770 = vlaneseq
    %v6771 = vshrl.u32 %v6770, 7
    %v6772 = vsub.s32 0, %v6771
    %v6773 = vrot.slane %v6557, %v6772
    %v6774 = vsel %vm5239, %v6773, %v6769
    %6775 = vrot.lane.b32.xlu0 %v6774, 112
    %v6776 = vpop.permute.xlu0 %6775
    %v6778 = vsel %vm2513, %v6568, %v6582
    %v6779 = vsel %vm2773, %v6778, %v6596
    %v6780 = vsel %vm6000, %v6779, %v6610
    %v6781 = vsel %vm6034, %v6780, %v6624
    %vm6782 = vcmask 654336
    %v6783 = vsel %vm6782, %v6781, %v6638
    %vm6784 = vcmask 785408
    %v6785 = vsel %vm6784, %v6783, %v6652
    %vm6786 = vcmask 916480
    %v6787 = vsel %vm6786, %v6785, %v6666
    %v6788 = vsel %vm2513, %v6678, %v6692
    %v6789 = vsel %vm2773, %v6788, %v6706
    %v6790 = vsel %vm6000, %v6789, %v6720
    %v6791 = vsel %vm6034, %v6790, %v6734
    %v6792 = vsel %vm6782, %v6791, %v6748
    %v6793 = vsel %vm6784, %v6792, %v6762
    %v6794 = vsel %vm6786, %v6793, %v6776
    %v6795 = vpack.c.bf16 %v6787, %v6787
    %v6796 = vpack.c.bf16 %v6794, %v6794
    %v6797 = vld [vmem:[%s3] sm:$0xf]
    %v6798 = vld [vmem:[%s3 + $0x4] sm:$0xf]
    %v6799 = vld [vmem:[%s3 + $0x8] sm:$0xf]
    %v6800 = vld [vmem:[%s3 + $0xc] sm:$0xf]
    %v6801 = vld [vmem:[%s3 + $0x10] sm:$0xf]
    %v6802 = vld [vmem:[%s3 + $0x14] sm:$0xf]
    %v6803 = vld [vmem:[%s3 + $0x18] sm:$0xf]
    %v6804 = vld [vmem:[%s3 + $0x1c] sm:$0xf]
    %v6805 = vld [vmem:[%s3 + $0x20] sm:$0xf]
    %v6806 = vld [vmem:[%s3 + $0x24] sm:$0xf]
    %v6807 = vld [vmem:[%s3 + $0x28] sm:$0xf]
    %v6808 = vld [vmem:[%s3 + $0x2c] sm:$0xf]
    %v6809 = vld [vmem:[%s3 + $0x30] sm:$0xf]
    %v6810 = vld [vmem:[%s3 + $0x34] sm:$0xf]
    %v6811 = vld [vmem:[%s3 + $0x38] sm:$0xf]
    %v6812 = vld [vmem:[%s3 + $0x3c] sm:$0xf]
    %v6813 = vld [vmem:[%s3 + $0x40] sm:$0xf]
    %v6814 = vld [vmem:[%s3 + $0x44] sm:$0xf]
    %v6815 = vld [vmem:[%s3 + $0x48] sm:$0xf]
    %v6816 = vld [vmem:[%s3 + $0x4c] sm:$0xf]
    %v6817 = vld [vmem:[%s3 + $0x50] sm:$0xf]
    %v6818 = vld [vmem:[%s3 + $0x54] sm:$0xf]
    %v6819 = vld [vmem:[%s3 + $0x58] sm:$0xf]
    %v6820 = vld [vmem:[%s3 + $0x5c] sm:$0xf]
    %v6821 = vld [vmem:[%s3 + $0x60] sm:$0xf]
    %v6822 = vld [vmem:[%s3 + $0x64] sm:$0xf]
    %v6823 = vld [vmem:[%s3 + $0x68] sm:$0xf]
    %v6824 = vld [vmem:[%s3 + $0x6c] sm:$0xf]
    %v6825 = vld [vmem:[%s3 + $0x70] sm:$0xf]
    %v6826 = vld [vmem:[%s3 + $0x74] sm:$0xf]
    %v6827 = vld [vmem:[%s3 + $0x78] sm:$0xf]
    %v6828 = vld [vmem:[%s3 + $0x7c] sm:$0xf]
    %v6829 = vld [vmem:[%s6] sm:$0x1]
    %v6831 = vlaneseq
    %v6832 = vshrl.u32 %v6831, 7
    %v6833 = vsub.s32 0, %v6832
    %v6834 = vrot.slane %v6829, %v6833
    %v6867 = vunpack.c.l.b16 %v6797
    %v6868 = vunpack.c.l.b16 %v6798
    %v6869 = vunpack.c.l.b16 %v6799
    %v6870 = vunpack.c.l.b16 %v6800
    %v6871 = vunpack.c.l.b16 %v6801
    %v6872 = vunpack.c.l.b16 %v6802
    %v6873 = vunpack.c.l.b16 %v6803
    %v6874 = vunpack.c.l.b16 %v6804
    %v6875 = vunpack.c.l.b16 %v6805
    %v6876 = vunpack.c.l.b16 %v6806
    %v6877 = vunpack.c.l.b16 %v6807
    %v6878 = vunpack.c.l.b16 %v6808
    %v6879 = vunpack.c.l.b16 %v6809
    %v6880 = vunpack.c.l.b16 %v6810
    %v6881 = vunpack.c.l.b16 %v6811
    %v6882 = vunpack.c.l.b16 %v6812
    %v6883 = vunpack.c.l.b16 %v6813
    %v6884 = vunpack.c.l.b16 %v6814
    %v6885 = vunpack.c.l.b16 %v6815
    %v6886 = vunpack.c.l.b16 %v6816
    %v6887 = vunpack.c.l.b16 %v6817
    %v6888 = vunpack.c.l.b16 %v6818
    %v6889 = vunpack.c.l.b16 %v6819
    %v6890 = vunpack.c.l.b16 %v6820
    %v6891 = vunpack.c.l.b16 %v6821
    %v6892 = vunpack.c.l.b16 %v6822
    %v6893 = vunpack.c.l.b16 %v6823
    %v6894 = vunpack.c.l.b16 %v6824
    %v6895 = vunpack.c.l.b16 %v6825
    %v6896 = vunpack.c.l.b16 %v6826
    %v6897 = vunpack.c.l.b16 %v6827
    %v6898 = vunpack.c.l.b16 %v6828
    %v6899 = vpack.c.b16 %v6868, %v6867
    %v6900 = vpack.c.b16 %v6870, %v6869
    %v6901 = vpack.c.b16 %v6872, %v6871
    %v6902 = vpack.c.b16 %v6874, %v6873
    %v6903 = vpack.c.b16 %v6876, %v6875
    %v6904 = vpack.c.b16 %v6878, %v6877
    %v6905 = vpack.c.b16 %v6880, %v6879
    %v6906 = vpack.c.b16 %v6882, %v6881
    %v6907 = vpack.c.b16 %v6884, %v6883
    %v6908 = vpack.c.b16 %v6886, %v6885
    %v6909 = vpack.c.b16 %v6888, %v6887
    %v6910 = vpack.c.b16 %v6890, %v6889
    %v6911 = vpack.c.b16 %v6892, %v6891
    %v6912 = vpack.c.b16 %v6894, %v6893
    %v6913 = vpack.c.b16 %v6896, %v6895
    %v6914 = vpack.c.b16 %v6898, %v6897
    %6931 = vrot.lane.b32.xlu0 %v6834, 104
    %v6932 = vpop.permute.xlu0 %6931
    %6934 = vmatprep.subr.bf16.mxu0 0
    %6935 = vmatpush1.bf16.msra.mxu0 %v6906
    %6936 = vmatprep.subr.bf16.mxu0 0
    %6937 = vmatpush1.bf16.msra.mxu0 %v6905
    %6938 = vmatprep.subr.bf16.mxu0 0
    %6939 = vmatpush1.bf16.msra.mxu0 %v6904
    %6940 = vmatprep.subr.bf16.mxu0 0
    %6941 = vmatpush1.bf16.msra.mxu0 %v6903
    %6942 = vmatprep.subr.bf16.mxu0 0
    %6943 = vmatpush1.bf16.msra.mxu0 %v6902
    %6944 = vmatprep.subr.bf16.mxu0 0
    %6945 = vmatpush1.bf16.msra.mxu0 %v6901
    %6946 = vmatprep.subr.bf16.mxu0 0
    %6947 = vmatpush1.bf16.msra.mxu0 %v6900
    %6948 = vmatprep.subr.bf16.mxu0 0
    %6949 = vmatpush1.bf16.msra.mxu0 %v6899
    %6950 = vmatprep.subr.bf16.mxu0 0
    %6951 = vmatpush2.bf16.msra.mxu0 %v6914
    %6952 = vmatprep.subr.bf16.mxu0 0
    %6953 = vmatpush2.bf16.msra.mxu0 %v6913
    %6954 = vmatprep.subr.bf16.mxu0 0
    %6955 = vmatpush2.bf16.msra.mxu0 %v6912
    %6956 = vmatprep.subr.bf16.mxu0 0
    %6957 = vmatpush2.bf16.msra.mxu0 %v6911
    %6958 = vmatprep.subr.bf16.mxu0 0
    %6959 = vmatpush2.bf16.msra.mxu0 %v6910
    %6960 = vmatprep.subr.bf16.mxu0 0
    %6961 = vmatpush2.bf16.msra.mxu0 %v6909
    %6962 = vmatprep.subr.bf16.mxu0 0
    %6963 = vmatpush2.bf16.msra.mxu0 %v6908
    %6964 = vmatprep.subr.bf16.mxu0 0
    %6965 = vmatpush2.bf16.msra.mxu0 %v6907
    %6966 = vmatprep.mubr.bf16.mxu0 %v6796
    %6967 = vmatmul.mubr.bf16.gmra.mxu0 %v6795
    %v6968 = vpop.f32.mrf.mxu0
    %v6969 = vadd.f32 %v6932, %v6968
    %v6970 = vpop.f32.mrf.mxu0
    %v6971 = vpop.f32.mrf.mxu0
    %v6972 = vpop.f32.mrf.mxu0
    %6973 = vdwg.mxu0
    %v6974 = vmax.f32 %v6969, 0.0
    %v6975 = vpack.c.bf16 %v6974, %v6974
    %v6976 = vld [vmem:[%s4] sm:$0xf]
    %v6977 = vld [vmem:[%s4 + $0x4] sm:$0xf]
    %v6978 = vld [vmem:[%s4 + $0x8] sm:$0xf]
    %v6979 = vld [vmem:[%s4 + $0xc] sm:$0xf]
    %v6984 = vunpack.c.l.b16 %v6976
    %v6985 = vunpack.c.l.b16 %v6977
    %v6986 = vunpack.c.l.b16 %v6978
    %v6987 = vunpack.c.l.b16 %v6979
    %v6988 = vpack.c.b16 %v6985, %v6984
    %v6989 = vpack.c.b16 %v6987, %v6986
    %6992 = vrot.lane.b32.xlu0 %v6834, 72
    %v6993 = vpop.permute.xlu0 %6992
    %v6996 = vsel %vm2773, %v6975, 0
    %6998 = vmatprep.subr.bf16.mxu0 0
    %6999 = vmatpush1.bf16.msra.mxu0 0
    %7000 = vmatprep.subr.bf16.mxu0 0
    %7001 = vmatpush1.bf16.msra.mxu0 0
    %7002 = vmatprep.subr.bf16.mxu0 0
    %7003 = vmatpush1.bf16.msra.mxu0 0
    %7004 = vmatprep.subr.bf16.mxu0 0
    %7005 = vmatpush1.bf16.msra.mxu0 0
    %7006 = vmatprep.subr.bf16.mxu0 0
    %7007 = vmatpush1.bf16.msra.mxu0 0
    %7008 = vmatprep.subr.bf16.mxu0 0
    %7009 = vmatpush1.bf16.msra.mxu0 0
    %7010 = vmatprep.subr.bf16.mxu0 0
    %7011 = vmatpush1.bf16.msra.mxu0 %v6989
    %7012 = vmatprep.subr.bf16.mxu0 0
    %7013 = vmatpush1.bf16.msra.mxu0 %v6988
    %7014 = vmatprep.subr.bf16.mxu0 0
    %7015 = vmatpush2.bf16.msra.mxu0 0
    %7016 = vmatprep.subr.bf16.mxu0 0
    %7017 = vmatpush2.bf16.msra.mxu0 0
    %7018 = vmatprep.subr.bf16.mxu0 0
    %7019 = vmatpush2.bf16.msra.mxu0 0
    %7020 = vmatprep.subr.bf16.mxu0 0
    %7021 = vmatpush2.bf16.msra.mxu0 0
    %7022 = vmatprep.subr.bf16.mxu0 0
    %7023 = vmatpush2.bf16.msra.mxu0 0
    %7024 = vmatprep.subr.bf16.mxu0 0
    %7025 = vmatpush2.bf16.msra.mxu0 0
    %7026 = vmatprep.subr.bf16.mxu0 0
    %7027 = vmatpush2.bf16.msra.mxu0 0
    %7028 = vmatprep.subr.bf16.mxu0 0
    %7029 = vmatpush2.bf16.msra.mxu0 0
    %7030 = vmatprep.mubr.bf16.mxu0 0
    %7031 = vmatmul.mubr.bf16.gmra.mxu0 %v6996
    %v7032 = vpop.f32.mrf.mxu0
    %v7033 = vadd.f32 %v6993, %v7032
    %v7034 = vpop.f32.mrf.mxu0
    %v7035 = vpop.f32.mrf.mxu0
    %v7036 = vpop.f32.mrf.mxu0
    %7037 = vdwg.mxu0
    %v7038 = vmax.f32 %v7033, 0.0
    %v7039 = vpack.c.bf16 %v7038, %v7038
    %v7040 = vld [vmem:[%s5] sm:$0xf]
    %v7041 = vld [vmem:[%s5 + $0x4] sm:$0xf]
    %v7044 = vunpack.c.l.b16 %v7040
    %v7045 = vunpack.c.l.b16 %v7041
    %v7046 = vpack.c.b16 %v7045, %v7044
    %7048 = vrot.lane.b32.xlu0 %v6834, 56
    %v7049 = vpop.permute.xlu0 %7048
    %v7052 = vsel %vm2513, %v7039, 0
    %7054 = vmatprep.subr.bf16.mxu0 0
    %7055 = vmatpush1.bf16.msra.mxu0 0
    %7056 = vmatprep.subr.bf16.mxu0 0
    %7057 = vmatpush1.bf16.msra.mxu0 0
    %7058 = vmatprep.subr.bf16.mxu0 0
    %7059 = vmatpush1.bf16.msra.mxu0 0
    %7060 = vmatprep.subr.bf16.mxu0 0
    %7061 = vmatpush1.bf16.msra.mxu0 0
    %7062 = vmatprep.subr.bf16.mxu0 0
    %7063 = vmatpush1.bf16.msra.mxu0 0
    %7064 = vmatprep.subr.bf16.mxu0 0
    %7065 = vmatpush1.bf16.msra.mxu0 0
    %7066 = vmatprep.subr.bf16.mxu0 0
    %7067 = vmatpush1.bf16.msra.mxu0 0
    %7068 = vmatprep.subr.bf16.mxu0 0
    %7069 = vmatpush1.bf16.msra.mxu0 %v7046
    %7070 = vmatprep.subr.bf16.mxu0 0
    %7071 = vmatpush2.bf16.msra.mxu0 0
    %7072 = vmatprep.subr.bf16.mxu0 0
    %7073 = vmatpush2.bf16.msra.mxu0 0
    %7074 = vmatprep.subr.bf16.mxu0 0
    %7075 = vmatpush2.bf16.msra.mxu0 0
    %7076 = vmatprep.subr.bf16.mxu0 0
    %7077 = vmatpush2.bf16.msra.mxu0 0
    %7078 = vmatprep.subr.bf16.mxu0 0
    %7079 = vmatpush2.bf16.msra.mxu0 0
    %7080 = vmatprep.subr.bf16.mxu0 0
    %7081 = vmatpush2.bf16.msra.mxu0 0
    %7082 = vmatprep.subr.bf16.mxu0 0
    %7083 = vmatpush2.bf16.msra.mxu0 0
    %7084 = vmatprep.subr.bf16.mxu0 0
    %7085 = vmatpush2.bf16.msra.mxu0 0
    %7086 = vmatprep.mubr.bf16.mxu0 0
    %7087 = vmatmul.mubr.bf16.gmra.mxu0 %v7052
    %v7088 = vpop.f32.mrf.mxu0
    %v7089 = vadd.f32 %v7049, %v7088
    %v7090 = vpop.f32.mrf.mxu0
    %v7091 = vpop.f32.mrf.mxu0
    %v7092 = vpop.f32.mrf.mxu0
    %7093 = vdwg.mxu0
    %vm7094 = vcmask 74752
    %7095 = vst.msk [vmem:[#allocation2] sm:$0x3] %vm7094, %v7089
    // Predicated region
    $region30: #{flexible_cnn2d_forward.1} parent=1 // pred_check
      _
    $region31: #{flexible_cnn2d_forward.1} parent=1 // pred_check_branch
      %7097 = sbr.rel (0) target = $region33
    $region32: #{flexible_cnn2d_forward.1} parent=1 // pred_region
      %s7099 = ssub.s32 32, 32
      %7100 = vsyncadd [#allocation3], %s7099
      %s7102 = sshll.u32 [#allocation2], 4
      %s7103 = int_to_ptr.vmem [resolvable:$true] %s7102
      %7105 = dma.vmem_to_hbm [thread:$0]  %s7103, 32, %s7, [#allocation3]
    $region33: #{flexible_cnn2d_forward.1} parent=1 // pred_fallthru
      _
    // Predicated region
    $region34: #{flexible_cnn2d_forward.1} parent=1 // pred_check
      _
    $region35: #{flexible_cnn2d_forward.1} parent=1 // pred_check_branch
      %7107 = sbr.rel (0) target = $region37
    $region36: #{flexible_cnn2d_forward.1} parent=1 // pred_region
      %7108 = dma.done [#allocation3], 32
    $region37: #{flexible_cnn2d_forward.1} parent=1 // pred_fallthru
      _
    %7109 = vsyncpa [#allocation3], 1

</llo_original>
